<compile_context>
chip_gen: v7x
topology: tpu7x:2x2x1
jax: 0.10.0
libtpu: 0.0.40
codegen_flags: <defaults>
</compile_context>

<pallas_src>
import functools

import jax
import jax.numpy as jnp
from jax.experimental import pallas as pl
from jax.experimental.pallas import tpu as pltpu


# ----------------------------------------------------------------------------
# Pallas kernel 1: fused  out = act(x @ w + b), tiled over rows (M).
# ----------------------------------------------------------------------------
def _matmul_bias_act_kernel(x_ref, w_ref, b_ref, o_ref, *, relu):
    acc = jnp.dot(x_ref[...], w_ref[...], preferred_element_type=jnp.float32)
    acc = acc + b_ref[...]          # (1, N) broadcasts over rows
    if relu:
        acc = jnp.maximum(acc, 0.0)
    o_ref[...] = acc.astype(o_ref.dtype)


def pallas_linear(x, w, b, *, relu, block_m=256):
    """x: (M, K), w: (K, N), b: (N,) -> (M, N). Tiled over M, K/N kept whole."""
    M, K = x.shape
    Kw, N = w.shape
    assert Kw == K
    # Full block when M is small (block may equal full array dims); otherwise
    # tile by block_m (multiple of 8) and let Pallas mask the partial edge block.
    tm = M if M <= block_m else block_m
    grid_m = pl.cdiv(M, tm)
    kernel = functools.partial(_matmul_bias_act_kernel, relu=relu)
    return pl.pallas_call(
        kernel,
        out_shape=jax.ShapeDtypeStruct((M, N), jnp.float32),
        grid=(grid_m,),
        in_specs=[
            pl.BlockSpec((tm, K), lambda i: (i, 0)),
            pl.BlockSpec((K, N), lambda i: (0, 0)),   # weights resident (const block)
            pl.BlockSpec((1, N), lambda i: (0, 0)),   # bias resident
        ],
        out_specs=pl.BlockSpec((tm, N), lambda i: (i, 0)),
        compiler_params=pltpu.CompilerParams(
            dimension_semantics=("parallel",),
        ),
    )(x, w, b.reshape(1, N))


# ----------------------------------------------------------------------------
# Pallas kernel 2: fused FC + ReLU + (policy | value) heads in one launch.
#   h   = relu(x @ w_fc + b_fc)                (B, 256)   stays in VMEM
#   out = h @ w_heads + b_heads                (B, A+1)
# ----------------------------------------------------------------------------
def _fc_heads_kernel(x_ref, wf_ref, bf_ref, wh_ref, bh_ref, o_ref):
    h = jnp.dot(x_ref[...], wf_ref[...], preferred_element_type=jnp.float32)
    h = jnp.maximum(h + bf_ref[...], 0.0)
    out = jnp.dot(h, wh_ref[...], preferred_element_type=jnp.float32) + bh_ref[...]
    o_ref[...] = out.astype(o_ref.dtype)


def pallas_fc_heads(x, w_fc, b_fc, w_heads, b_heads):
    B, K = x.shape
    _, H = w_fc.shape
    _, NH = w_heads.shape
    return pl.pallas_call(
        _fc_heads_kernel,
        out_shape=jax.ShapeDtypeStruct((B, NH), jnp.float32),
        grid=(1,),
        in_specs=[
            pl.BlockSpec((B, K), lambda i: (0, 0)),
            pl.BlockSpec((K, H), lambda i: (0, 0)),
            pl.BlockSpec((1, H), lambda i: (0, 0)),
            pl.BlockSpec((H, NH), lambda i: (0, 0)),
            pl.BlockSpec((1, NH), lambda i: (0, 0)),
        ],
        out_specs=pl.BlockSpec((B, NH), lambda i: (0, 0)),
        compiler_params=pltpu.CompilerParams(dimension_semantics=("arbitrary",)),
    )(x, w_fc, b_fc.reshape(1, H), w_heads, b_heads.reshape(1, NH))


# ----------------------------------------------------------------------------
# Glue: NHWC im2col (slice + concat only; no transposes) + conv wrapper.
# ----------------------------------------------------------------------------
def im2col_nhwc(x, kh, kw, stride):
    """x: (B, H, W, C) -> patches (B*OH*OW, kh*kw*C) in (kh, kw, C) column order."""
    B, H, W, C = x.shape
    oh = (H - kh) // stride + 1
    ow = (W - kw) // stride + 1
    cols = []
    for i in range(kh):
        for j in range(kw):
            cols.append(x[:, i:i + stride * oh:stride, j:j + stride * ow:stride, :])
    p = jnp.concatenate(cols, axis=-1)            # (B, OH, OW, kh*kw*C)
    return p.reshape(B * oh * ow, kh * kw * C), oh, ow
    # TODO(synk): im2col could be fused into the Pallas kernel (strided pl.ds
    # loads + 25-tap accumulation) to avoid materializing the patch matrix.


def conv2d_relu_nhwc(x, w2, b, kh, kw, stride):
    """x: (B,H,W,Cin) NHWC; w2: (kh*kw*Cin, Cout) pre-reshaped; -> (B,OH,OW,Cout)."""
    B = x.shape[0]
    cout = w2.shape[1]
    patches, oh, ow = im2col_nhwc(x, kh, kw, stride)
    out = pallas_linear(patches, w2, b, relu=True)     # (B*OH*OW, Cout)
    return out.reshape(B, oh, ow, cout)                # NHWC — no transpose back


# ----------------------------------------------------------------------------
# Parameters: PyTorch-layout init + one-time conversion to the kernel layout.
# ----------------------------------------------------------------------------
def init_params(key, num_actions):
    keys = jax.random.split(key, 12)
    s = 0.05
    return {
        "conv1_w": jax.random.normal(keys[0], (32, 4, 5, 5), jnp.float32) * s,
        "conv1_b": jax.random.normal(keys[1], (32,), jnp.float32) * s,
        "conv2_w": jax.random.normal(keys[2], (64, 32, 5, 5), jnp.float32) * s,
        "conv2_b": jax.random.normal(keys[3], (64,), jnp.float32) * s,
        "conv3_w": jax.random.normal(keys[4], (64, 64, 5, 5), jnp.float32) * s,
        "conv3_b": jax.random.normal(keys[5], (64,), jnp.float32) * s,
        "fc_w":    jax.random.normal(keys[6], (256, 1600), jnp.float32) * s,
        "fc_b":    jax.random.normal(keys[7], (256,), jnp.float32) * s,
        "pol_w":   jax.random.normal(keys[8], (num_actions, 256), jnp.float32) * s,
        "pol_b":   jax.random.normal(keys[9], (num_actions,), jnp.float32) * s,
        "val_w":   jax.random.normal(keys[10], (1, 256), jnp.float32) * s,
        "val_b":   jax.random.normal(keys[11], (1,), jnp.float32) * s,
    }


def prepare_params(p):
    """One-time weight permutation/reshape for the NHWC Pallas path."""
    def conv_w(w):  # (Cout, Cin, kh, kw) -> (kh*kw*Cin, Cout)
        cout, cin, kh, kw = w.shape
        return jnp.transpose(w, (2, 3, 1, 0)).reshape(kh * kw * cin, cout)

    # fc_w columns are in PyTorch's (C, H, W) flatten order; permute to (H, W, C)
    # to match our NHWC flatten, and store pre-transposed as (1600, 256).
    fc_w = jnp.transpose(p["fc_w"].reshape(256, 64, 5, 5), (2, 3, 1, 0)).reshape(1600, 256)
    heads_w = jnp.concatenate([p["pol_w"].T, p["val_w"].T], axis=1)   # (256, A+1)
    heads_b = jnp.concatenate([p["pol_b"], p["val_b"]], axis=0)       # (A+1,)
    return {
        "conv1_w": conv_w(p["conv1_w"]), "conv1_b": p["conv1_b"],
        "conv2_w": conv_w(p["conv2_w"]), "conv2_b": p["conv2_b"],
        "conv3_w": conv_w(p["conv3_w"]), "conv3_b": p["conv3_b"],
        "fc_w": fc_w, "fc_b": p["fc_b"],
        "heads_w": heads_w, "heads_b": heads_b,
    }


# ----------------------------------------------------------------------------
# Forward pass (matches A3C_Agent.forward: returns (policy [B, A], value [B]))
# ----------------------------------------------------------------------------
@jax.jit
def a3c_forward(prep, state):
    # state: (B, 4, 64, 64) NCHW float32 (PyTorch-compatible interface)
    B = state.shape[0]
    x = jnp.transpose(state, (0, 2, 3, 1))                                  # -> NHWC once
    x = conv2d_relu_nhwc(x, prep["conv1_w"], prep["conv1_b"], 5, 5, 2)      # (B,30,30,32)
    x = conv2d_relu_nhwc(x, prep["conv2_w"], prep["conv2_b"], 5, 5, 2)      # (B,13,13,64)
    x = conv2d_relu_nhwc(x, prep["conv3_w"], prep["conv3_b"], 5, 5, 2)      # (B,5,5,64)
    x = x.reshape(B, -1)                                                    # (B,1600) HWC order
    out = pallas_fc_heads(x, prep["fc_w"], prep["fc_b"],
                          prep["heads_w"], prep["heads_b"])                 # (B, A+1)
    a = prep["heads_w"].shape[1] - 1
    policy = out[:, :a]
    value = out[:, a]                                                       # squeeze(dim=-1)
    return policy, value


# ----------------------------------------------------------------------------
# Pure-JAX reference (PyTorch-layout params, NCHW, default MXU precision)
# ----------------------------------------------------------------------------
def reference_forward(params, state):
    def conv(x, w, b):
        y = jax.lax.conv_general_dilated(
            x, w, window_strides=(2, 2), padding="VALID",
            dimension_numbers=("NCHW", "OIHW", "NCHW"))
        return jax.nn.relu(y + b[None, :, None, None])

    B = state.shape[0]
    h = conv(state, params["conv1_w"], params["conv1_b"])
    h = conv(h, params["conv2_w"], params["conv2_b"])
    h = conv(h, params["conv3_w"], params["conv3_b"])
    h = h.reshape(B, -1)
    h = jax.nn.relu(h @ params["fc_w"].T + params["fc_b"])
    policy = h @ params["pol_w"].T + params["pol_b"]
    value = (h @ params["val_w"].T + params["val_b"])[:, 0]
    return policy, value


if __name__ == "__main__":
    num_actions = 6   # Pong action space
    batch = 2

    key = jax.random.PRNGKey(0)
    k_param, k_state = jax.random.split(key)
    params = init_params(k_param, num_actions)
    prep = prepare_params(params)
    # Input spatial size 64x64 is required so that Flatten produces 1600 features.
    state = jax.random.uniform(k_state, (batch, 4, 64, 64), jnp.float32)

    policy, value = jax.block_until_ready(a3c_forward(prep, state))

    ref_policy, ref_value = reference_forward(params, state)
    assert policy.shape == (batch, num_actions)
    assert value.shape == (batch,)
    # Both paths use default (bf16-multiply, f32-accumulate) MXU precision;
    # tolerance widened vs. an f32-exact check accordingly.
    assert jnp.allclose(policy, ref_policy, rtol=1e-2, atol=1e-2)
    assert jnp.allclose(value, ref_value, rtol=1e-2, atol=1e-2)

    print("KERNEL_OK")
</pallas_src>

<mosaic_0001>
module attributes {stable_mosaic.version = 11 : i64} {
  func.func @_matmul_bias_act_kernel(%arg0: i32, %arg1: memref<256x100xf32, #tpu.memory_space<vmem>>, %arg2: memref<100x32xf32, #tpu.memory_space<vmem>>, %arg3: memref<1x32xf32, #tpu.memory_space<vmem>>, %arg4: memref<256x32xf32, #tpu.memory_space<vmem>>) attributes {dimension_semantics = [#tpu.dimension_semantics<parallel>], iteration_bounds = array<i64: 8>, scalar_prefetch = 0 : i64, scratch_operands = 0 : i64, tpu.core_type = #tpu.core_type<tc>, window_params = [{transform_indices = @transform_0, window_bounds = array<i64: 256, 100>}, {pipeline_mode = #tpu.pipeline_mode<synchronous>, transform_indices = @transform_1, window_bounds = array<i64: 100, 32>}, {pipeline_mode = #tpu.pipeline_mode<synchronous>, transform_indices = @transform_2, window_bounds = array<i64: 1, 32>}, {transform_indices = @transform_3, window_bounds = array<i64: 256, 32>}]} {
    %c0 = arith.constant 0 : index
    %c0_0 = arith.constant 0 : index
    %0 = vector.load %arg1[%c0, %c0_0] : memref<256x100xf32, #tpu.memory_space<vmem>>, vector<256x100xf32>
    %c0_1 = arith.constant 0 : index
    %c0_2 = arith.constant 0 : index
    %1 = vector.load %arg2[%c0_1, %c0_2] : memref<100x32xf32, #tpu.memory_space<vmem>>, vector<100x32xf32>
    %cst = arith.constant dense<0.000000e+00> : vector<256x32xf32>
    %2 = tpu.matmul %0, %1, %cst {dimension_numbers = #tpu.dot_dimension_numbers<[1], [0], [0], [1], [0, 0, 1, 1], [], []>} : vector<256x100xf32>, vector<100x32xf32>, vector<256x32xf32> -> vector<256x32xf32>
    %c0_3 = arith.constant 0 : index
    %c0_4 = arith.constant 0 : index
    %3 = vector.load %arg3[%c0_3, %c0_4] : memref<1x32xf32, #tpu.memory_space<vmem>>, vector<1x32xf32>
    %4 = vector.broadcast %3 : vector<1x32xf32> to vector<256x32xf32>
    %5 = arith.addf %2, %4 : vector<256x32xf32>
    %cst_5 = arith.constant 0.000000e+00 : f32
    %6 = vector.broadcast %cst_5 : f32 to vector<256x32xf32>
    %7 = arith.maximumf %5, %6 : vector<256x32xf32>
    %c0_6 = arith.constant 0 : index
    %c0_7 = arith.constant 0 : index
    %8 = vector.load %arg4[%c0_6, %c0_7] : memref<256x32xf32, #tpu.memory_space<vmem>>, vector<256x32xf32>
    tpu.vector_store %arg4[%c0_6, %c0_7], %7 {strides = array<i32>} : memref<256x32xf32, #tpu.memory_space<vmem>>, vector<256x32xf32>,
    return
  }
  func.func @transform_0(%arg0: i32) -> (i32, i32) {
    %c0_i32 = arith.constant 0 : i32
    %c0_i32_0 = arith.constant 0 : i32
    return %arg0, %c0_i32 : i32, i32
  }
  func.func @transform_1(%arg0: i32) -> (i32, i32) {
    %c0_i32 = arith.constant 0 : i32
    %c0_i32_0 = arith.constant 0 : i32
    %c0_i32_1 = arith.constant 0 : i32
    return %c0_i32, %c0_i32_0 : i32, i32
  }
  func.func @transform_2(%arg0: i32) -> (i32, i32) {
    %c0_i32 = arith.constant 0 : i32
    %c0_i32_0 = arith.constant 0 : i32
    %c0_i32_1 = arith.constant 0 : i32
    return %c0_i32, %c0_i32_0 : i32, i32
  }
  func.func @transform_3(%arg0: i32) -> (i32, i32) {
    %c0_i32 = arith.constant 0 : i32
    %c0_i32_0 = arith.constant 0 : i32
    return %arg0, %c0_i32 : i32, i32
  }
}

module attributes {stable_mosaic.version = 11 : i64} {
  func.func @_matmul_bias_act_kernel(%arg0: i32, %arg1: memref<256x800xf32, #tpu.memory_space<vmem>>, %arg2: memref<800x64xf32, #tpu.memory_space<vmem>>, %arg3: memref<1x64xf32, #tpu.memory_space<vmem>>, %arg4: memref<256x64xf32, #tpu.memory_space<vmem>>) attributes {dimension_semantics = [#tpu.dimension_semantics<parallel>], iteration_bounds = array<i64: 2>, scalar_prefetch = 0 : i64, scratch_operands = 0 : i64, tpu.core_type = #tpu.core_type<tc>, window_params = [{transform_indices = @transform_0, window_bounds = array<i64: 256, 800>}, {pipeline_mode = #tpu.pipeline_mode<synchronous>, transform_indices = @transform_1, window_bounds = array<i64: 800, 64>}, {pipeline_mode = #tpu.pipeline_mode<synchronous>, transform_indices = @transform_2, window_bounds = array<i64: 1, 64>}, {transform_indices = @transform_3, window_bounds = array<i64: 256, 64>}]} {
    %c0 = arith.constant 0 : index
    %c0_0 = arith.constant 0 : index
    %0 = vector.load %arg1[%c0, %c0_0] : memref<256x800xf32, #tpu.memory_space<vmem>>, vector<256x800xf32>
    %c0_1 = arith.constant 0 : index
    %c0_2 = arith.constant 0 : index
    %1 = vector.load %arg2[%c0_1, %c0_2] : memref<800x64xf32, #tpu.memory_space<vmem>>, vector<800x64xf32>
    %cst = arith.constant dense<0.000000e+00> : vector<256x64xf32>
    %2 = tpu.matmul %0, %1, %cst {dimension_numbers = #tpu.dot_dimension_numbers<[1], [0], [0], [1], [0, 0, 1, 1], [], []>} : vector<256x800xf32>, vector<800x64xf32>, vector<256x64xf32> -> vector<256x64xf32>
    %c0_3 = arith.constant 0 : index
    %c0_4 = arith.constant 0 : index
    %3 = vector.load %arg3[%c0_3, %c0_4] : memref<1x64xf32, #tpu.memory_space<vmem>>, vector<1x64xf32>
    %4 = vector.broadcast %3 : vector<1x64xf32> to vector<256x64xf32>
    %5 = arith.addf %2, %4 : vector<256x64xf32>
    %cst_5 = arith.constant 0.000000e+00 : f32
    %6 = vector.broadcast %cst_5 : f32 to vector<256x64xf32>
    %7 = arith.maximumf %5, %6 : vector<256x64xf32>
    %c0_6 = arith.constant 0 : index
    %c0_7 = arith.constant 0 : index
    %8 = vector.load %arg4[%c0_6, %c0_7] : memref<256x64xf32, #tpu.memory_space<vmem>>, vector<256x64xf32>
    tpu.vector_store %arg4[%c0_6, %c0_7], %7 {strides = array<i32>} : memref<256x64xf32, #tpu.memory_space<vmem>>, vector<256x64xf32>,
    return
  }
  func.func @transform_0(%arg0: i32) -> (i32, i32) {
    %c0_i32 = arith.constant 0 : i32
    %c0_i32_0 = arith.constant 0 : i32
    return %arg0, %c0_i32 : i32, i32
  }
  func.func @transform_1(%arg0: i32) -> (i32, i32) {
    %c0_i32 = arith.constant 0 : i32
    %c0_i32_0 = arith.constant 0 : i32
    %c0_i32_1 = arith.constant 0 : i32
    return %c0_i32, %c0_i32_0 : i32, i32
  }
  func.func @transform_2(%arg0: i32) -> (i32, i32) {
    %c0_i32 = arith.constant 0 : i32
    %c0_i32_0 = arith.constant 0 : i32
    %c0_i32_1 = arith.constant 0 : i32
    return %c0_i32, %c0_i32_0 : i32, i32
  }
  func.func @transform_3(%arg0: i32) -> (i32, i32) {
    %c0_i32 = arith.constant 0 : i32
    %c0_i32_0 = arith.constant 0 : i32
    return %arg0, %c0_i32 : i32, i32
  }
}

module attributes {stable_mosaic.version = 11 : i64} {
  func.func @_matmul_bias_act_kernel(%arg0: i32, %arg1: memref<50x1600xf32, #tpu.memory_space<vmem>>, %arg2: memref<1600x64xf32, #tpu.memory_space<vmem>>, %arg3: memref<1x64xf32, #tpu.memory_space<vmem>>, %arg4: memref<50x64xf32, #tpu.memory_space<vmem>>) attributes {dimension_semantics = [#tpu.dimension_semantics<parallel>], iteration_bounds = array<i64: 1>, scalar_prefetch = 0 : i64, scratch_operands = 0 : i64, tpu.core_type = #tpu.core_type<tc>, window_params = [{transform_indices = @transform_0, window_bounds = array<i64: 50, 1600>}, {pipeline_mode = #tpu.pipeline_mode<synchronous>, transform_indices = @transform_1, window_bounds = array<i64: 1600, 64>}, {pipeline_mode = #tpu.pipeline_mode<synchronous>, transform_indices = @transform_2, window_bounds = array<i64: 1, 64>}, {transform_indices = @transform_3, window_bounds = array<i64: 50, 64>}]} {
    %c0 = arith.constant 0 : index
    %c0_0 = arith.constant 0 : index
    %0 = vector.load %arg1[%c0, %c0_0] : memref<50x1600xf32, #tpu.memory_space<vmem>>, vector<50x1600xf32>
    %c0_1 = arith.constant 0 : index
    %c0_2 = arith.constant 0 : index
    %1 = vector.load %arg2[%c0_1, %c0_2] : memref<1600x64xf32, #tpu.memory_space<vmem>>, vector<1600x64xf32>
    %cst = arith.constant dense<0.000000e+00> : vector<50x64xf32>
    %2 = tpu.matmul %0, %1, %cst {dimension_numbers = #tpu.dot_dimension_numbers<[1], [0], [0], [1], [0, 0, 1, 1], [], []>} : vector<50x1600xf32>, vector<1600x64xf32>, vector<50x64xf32> -> vector<50x64xf32>
    %c0_3 = arith.constant 0 : index
    %c0_4 = arith.constant 0 : index
    %3 = vector.load %arg3[%c0_3, %c0_4] : memref<1x64xf32, #tpu.memory_space<vmem>>, vector<1x64xf32>
    %4 = vector.broadcast %3 : vector<1x64xf32> to vector<50x64xf32>
    %5 = arith.addf %2, %4 : vector<50x64xf32>
    %cst_5 = arith.constant 0.000000e+00 : f32
    %6 = vector.broadcast %cst_5 : f32 to vector<50x64xf32>
    %7 = arith.maximumf %5, %6 : vector<50x64xf32>
    %c0_6 = arith.constant 0 : index
    %c0_7 = arith.constant 0 : index
    %8 = vector.load %arg4[%c0_6, %c0_7] : memref<50x64xf32, #tpu.memory_space<vmem>>, vector<50x64xf32>
    tpu.vector_store %arg4[%c0_6, %c0_7], %7 {strides = array<i32>} : memref<50x64xf32, #tpu.memory_space<vmem>>, vector<50x64xf32>,
    return
  }
  func.func @transform_0(%arg0: i32) -> (i32, i32) {
    %c0_i32 = arith.constant 0 : i32
    %c0_i32_0 = arith.constant 0 : i32
    return %arg0, %c0_i32 : i32, i32
  }
  func.func @transform_1(%arg0: i32) -> (i32, i32) {
    %c0_i32 = arith.constant 0 : i32
    %c0_i32_0 = arith.constant 0 : i32
    %c0_i32_1 = arith.constant 0 : i32
    return %c0_i32, %c0_i32_0 : i32, i32
  }
  func.func @transform_2(%arg0: i32) -> (i32, i32) {
    %c0_i32 = arith.constant 0 : i32
    %c0_i32_0 = arith.constant 0 : i32
    %c0_i32_1 = arith.constant 0 : i32
    return %c0_i32, %c0_i32_0 : i32, i32
  }
  func.func @transform_3(%arg0: i32) -> (i32, i32) {
    %c0_i32 = arith.constant 0 : i32
    %c0_i32_0 = arith.constant 0 : i32
    return %arg0, %c0_i32 : i32, i32
  }
}

module attributes {stable_mosaic.version = 11 : i64} {
  func.func @_fc_heads_kernel(%arg0: i32, %arg1: memref<2x1600xf32, #tpu.memory_space<vmem>>, %arg2: memref<1600x256xf32, #tpu.memory_space<vmem>>, %arg3: memref<1x256xf32, #tpu.memory_space<vmem>>, %arg4: memref<256x7xf32, #tpu.memory_space<vmem>>, %arg5: memref<1x7xf32, #tpu.memory_space<vmem>>, %arg6: memref<2x7xf32, #tpu.memory_space<vmem>>) attributes {dimension_semantics = [#tpu.dimension_semantics<arbitrary>], iteration_bounds = array<i64: 1>, scalar_prefetch = 0 : i64, scratch_operands = 0 : i64, tpu.core_type = #tpu.core_type<tc>, window_params = [{pipeline_mode = #tpu.pipeline_mode<synchronous>, transform_indices = @transform_0, window_bounds = array<i64: 2, 1600>}, {pipeline_mode = #tpu.pipeline_mode<synchronous>, transform_indices = @transform_1, window_bounds = array<i64: 1600, 256>}, {pipeline_mode = #tpu.pipeline_mode<synchronous>, transform_indices = @transform_2, window_bounds = array<i64: 1, 256>}, {pipeline_mode = #tpu.pipeline_mode<synchronous>, transform_indices = @transform_3, window_bounds = array<i64: 256, 7>}, {pipeline_mode = #tpu.pipeline_mode<synchronous>, transform_indices = @transform_4, window_bounds = array<i64: 1, 7>}, {pipeline_mode = #tpu.pipeline_mode<synchronous>, transform_indices = @transform_5, window_bounds = array<i64: 2, 7>}]} {
    %c0 = arith.constant 0 : index
    %c0_0 = arith.constant 0 : index
    %0 = vector.load %arg1[%c0, %c0_0] : memref<2x1600xf32, #tpu.memory_space<vmem>>, vector<2x1600xf32>
    %c0_1 = arith.constant 0 : index
    %c0_2 = arith.constant 0 : index
    %1 = vector.load %arg2[%c0_1, %c0_2] : memref<1600x256xf32, #tpu.memory_space<vmem>>, vector<1600x256xf32>
    %cst = arith.constant dense<0.000000e+00> : vector<2x256xf32>
    %2 = tpu.matmul %0, %1, %cst {dimension_numbers = #tpu.dot_dimension_numbers<[1], [0], [0], [1], [0, 0, 1, 1], [], []>} : vector<2x1600xf32>, vector<1600x256xf32>, vector<2x256xf32> -> vector<2x256xf32>
    %c0_3 = arith.constant 0 : index
    %c0_4 = arith.constant 0 : index
    %3 = vector.load %arg3[%c0_3, %c0_4] : memref<1x256xf32, #tpu.memory_space<vmem>>, vector<1x256xf32>
    %4 = vector.broadcast %3 : vector<1x256xf32> to vector<2x256xf32>
    %5 = arith.addf %2, %4 : vector<2x256xf32>
    %cst_5 = arith.constant 0.000000e+00 : f32
    %6 = vector.broadcast %cst_5 : f32 to vector<2x256xf32>
    %7 = arith.maximumf %5, %6 : vector<2x256xf32>
    %c0_6 = arith.constant 0 : index
    %c0_7 = arith.constant 0 : index
    %8 = vector.load %arg4[%c0_6, %c0_7] : memref<256x7xf32, #tpu.memory_space<vmem>>, vector<256x7xf32>
    %cst_8 = arith.constant dense<0.000000e+00> : vector<2x7xf32>
    %9 = tpu.matmul %7, %8, %cst_8 {dimension_numbers = #tpu.dot_dimension_numbers<[1], [0], [0], [1], [0, 0, 1, 1], [], []>} : vector<2x256xf32>, vector<256x7xf32>, vector<2x7xf32> -> vector<2x7xf32>
    %c0_9 = arith.constant 0 : index
    %c0_10 = arith.constant 0 : index
    %10 = vector.load %arg5[%c0_9, %c0_10] : memref<1x7xf32, #tpu.memory_space<vmem>>, vector<1x7xf32>
    %11 = vector.broadcast %10 : vector<1x7xf32> to vector<2x7xf32>
    %12 = arith.addf %9, %11 : vector<2x7xf32>
    %c0_11 = arith.constant 0 : index
    %c0_12 = arith.constant 0 : index
    %13 = vector.load %arg6[%c0_11, %c0_12] : memref<2x7xf32, #tpu.memory_space<vmem>>, vector<2x7xf32>
    tpu.vector_store %arg6[%c0_11, %c0_12], %12 {strides = array<i32>} : memref<2x7xf32, #tpu.memory_space<vmem>>, vector<2x7xf32>,
    return
  }
  func.func @transform_0(%arg0: i32) -> (i32, i32) {
    %c0_i32 = arith.constant 0 : i32
    %c0_i32_0 = arith.constant 0 : i32
    %c0_i32_1 = arith.constant 0 : i32
    return %c0_i32, %c0_i32_0 : i32, i32
  }
  func.func @transform_1(%arg0: i32) -> (i32, i32) {
    %c0_i32 = arith.constant 0 : i32
    %c0_i32_0 = arith.constant 0 : i32
    %c0_i32_1 = arith.constant 0 : i32
    return %c0_i32, %c0_i32_0 : i32, i32
  }
  func.func @transform_2(%arg0: i32) -> (i32, i32) {
    %c0_i32 = arith.constant 0 : i32
    %c0_i32_0 = arith.constant 0 : i32
    %c0_i32_1 = arith.constant 0 : i32
    return %c0_i32, %c0_i32_0 : i32, i32
  }
  func.func @transform_3(%arg0: i32) -> (i32, i32) {
    %c0_i32 = arith.constant 0 : i32
    %c0_i32_0 = arith.constant 0 : i32
    %c0_i32_1 = arith.constant 0 : i32
    return %c0_i32, %c0_i32_0 : i32, i32
  }
  func.func @transform_4(%arg0: i32) -> (i32, i32) {
    %c0_i32 = arith.constant 0 : i32
    %c0_i32_0 = arith.constant 0 : i32
    %c0_i32_1 = arith.constant 0 : i32
    return %c0_i32, %c0_i32_0 : i32, i32
  }
  func.func @transform_5(%arg0: i32) -> (i32, i32) {
    %c0_i32 = arith.constant 0 : i32
    %c0_i32_0 = arith.constant 0 : i32
    %c0_i32_1 = arith.constant 0 : i32
    return %c0_i32, %c0_i32_0 : i32, i32
  }
}

</mosaic_0001>

<llo_original>
// kernel: a3c_forward.4
$region0: #{a3c_forward.4}
  #allocation0 [shape = 'u32[]', space=smem, size = 0x4, offset = 0x4, fixed_abs, tag = 'smem constant byte address 0x4 - core index']
  #allocation1 [shape = 'u32[144,128]{1,0:T(1,128)}', space=vmem, size = 0x12000, scoped, tag = 'internal scratch']
  %s0 = inlined_call_operand.vmem [shape: f32[1800,100], index: 0, kind: input, shape index: {}]
  %s1 = inlined_call_operand.vmem [shape: f32[100,32], index: 1, kind: input, shape index: {}]
  %s2 = inlined_call_operand.vmem [shape: f32[1,32], index: 2, kind: input, shape index: {}]
  %s3 = inlined_call_operand.vmem [shape: f32[1800,32], index: 3, kind: output, shape index: {}]
  %s4 = sld [smem:[#allocation0]]
  $region93: #{a3c_forward.4} parent=0
    _
  %s6 = ssub.s32 1, %s4
  %s7 = scalar_select 0, %s6, %s4
  $region1: #{a3c_forward.4} parent=0
    #allocation2 [shape = 'u8[262144]{0}', space=vmem, size = 0x40000, scoped, tag = 'output window, operand 0']
    loop: start=0, step=1, limit=10
    $region2: #{a3c_forward.4} parent=1 // loop_pre_header
      _
    $region3: #{a3c_forward.4} parent=1 // loop_header
      %s9 = sphi 0, %s13
      %p10 = scmp.ge.s32.totalorder %s9, 10
      %s19 = sphi 0, %s21
      %s22 = sphi 0, %s19
      %s23 = sphi 0, %s22
      %s39 = sphi 0, %s23
      %s43 = sphi 0, %s43
      %s45 = sphi 0, %s43
      %s46 = sphi 0, %s45
      %s60 = sphi 0, %s46
      %s64 = sphi 0, %s64
      %s66 = sphi 0, %s64
      %s67 = sphi 0, %s66
      %s81 = sphi 0, %s67
      %s87 = sphi 0, %s89
      %s90 = sphi 0, %s87
      %s91 = sphi 0, %s90
      %s107 = sphi 0, %s91
    $region4: #{a3c_forward.4} parent=1 // loop_header_branch
      %12 = sbr.rel (%p10) target = $region8
    $region5: #{a3c_forward.4} parent=1 // loop_body
      %s14 = ssub.s32 %s9, 1
      %s15 = ssub.s32 %s9, 2
      %s16 = sadd.s32 %s9, 1
      %s17 = ssub.s32 %s9, %s16
      %p18 = scmp.eq.s32.totalorder %s17, 0
      %s20 = sadd.s32 %s19, 1
      %s21 = scalar_select %p18, %s19, %s20
      %p24 = pneg %p18
      %p25 = scmp.eq.s32.totalorder %s9, 7
      %p26 = por %p24, %p25
      %p27 = scmp.ne.s32.totalorder %s19, %s22
      %p28 = scmp.eq.s32.totalorder %s9, 0
      %p29 = por %p27, %p28
      %p30 = scmp.ne.s32.totalorder %s19, %s22
      %p31 = scmp.eq.s32.totalorder %s14, 7
      %p32 = por %p30, %p31
      %p33 = scmp.ne.s32.totalorder %s22, %s23
      %p34 = scmp.eq.s32.totalorder %s14, 0
      %p35 = por %p33, %p34
      %p36 = scmp.ne.s32.totalorder %s22, %s23
      %p37 = scmp.eq.s32.totalorder %s15, 7
      %p38 = por %p36, %p37
      %p40 = scmp.ne.s32.totalorder %s23, %s39
      %p41 = scmp.eq.s32.totalorder %s15, 0
      %p42 = por %p40, %p41
      %s44 = sadd.s32 %s43, 1
      %p47 = scmp.eq.s32.totalorder %s9, 7
      %p48 = scmp.ne.s32.totalorder %s43, %s45
      %p49 = scmp.eq.s32.totalorder %s9, 0
      %p50 = por %p48, %p49
      %p51 = scmp.ne.s32.totalorder %s43, %s45
      %p52 = scmp.eq.s32.totalorder %s14, 7
      %p53 = por %p51, %p52
      %p54 = scmp.ne.s32.totalorder %s45, %s46
      %p55 = scmp.eq.s32.totalorder %s14, 0
      %p56 = por %p54, %p55
      %p57 = scmp.ne.s32.totalorder %s45, %s46
      %p58 = scmp.eq.s32.totalorder %s15, 7
      %p59 = por %p57, %p58
      %p61 = scmp.ne.s32.totalorder %s46, %s60
      %p62 = scmp.eq.s32.totalorder %s15, 0
      %p63 = por %p61, %p62
      %s65 = sadd.s32 %s64, 1
      %p68 = scmp.eq.s32.totalorder %s9, 7
      %p69 = scmp.ne.s32.totalorder %s64, %s66
      %p70 = scmp.eq.s32.totalorder %s9, 0
      %p71 = por %p69, %p70
      %p72 = scmp.ne.s32.totalorder %s64, %s66
      %p73 = scmp.eq.s32.totalorder %s14, 7
      %p74 = por %p72, %p73
      %p75 = scmp.ne.s32.totalorder %s66, %s67
      %p76 = scmp.eq.s32.totalorder %s14, 0
      %p77 = por %p75, %p76
      %p78 = scmp.ne.s32.totalorder %s66, %s67
      %p79 = scmp.eq.s32.totalorder %s15, 7
      %p80 = por %p78, %p79
      %p82 = scmp.ne.s32.totalorder %s67, %s81
      %p83 = scmp.eq.s32.totalorder %s15, 0
      %p84 = por %p82, %p83
      %s85 = ssub.s32 %s9, %s16
      %p86 = scmp.eq.s32.totalorder %s85, 0
      %s88 = sadd.s32 %s87, 1
      %s89 = scalar_select %p86, %s87, %s88
      %p92 = pneg %p86
      %p93 = scmp.eq.s32.totalorder %s9, 7
      %p94 = por %p92, %p93
      %p95 = scmp.ne.s32.totalorder %s87, %s90
      %p96 = scmp.eq.s32.totalorder %s9, 0
      %p97 = por %p95, %p96
      %p98 = scmp.ne.s32.totalorder %s87, %s90
      %p99 = scmp.eq.s32.totalorder %s14, 7
      %p100 = por %p98, %p99
      %p101 = scmp.ne.s32.totalorder %s90, %s91
      %p102 = scmp.eq.s32.totalorder %s14, 0
      %p103 = por %p101, %p102
      %p104 = scmp.ne.s32.totalorder %s90, %s91
      %p105 = scmp.eq.s32.totalorder %s15, 7
      %p106 = por %p104, %p105
      %p108 = scmp.ne.s32.totalorder %s91, %s107
      %p109 = scmp.eq.s32.totalorder %s15, 0
      %p110 = por %p108, %p109
      %p111 = scmp.le.s32.totalorder 1, %s9
      %p112 = scmp.lt.s32.totalorder %s9, 9
      %p113 = pnand %p111, %p112
      %p114 = pneg %p113
      // Predicated region
      $region9: #{a3c_forward.4} parent=5 // pred_check
        _
      $region10: #{a3c_forward.4} parent=5 // pred_check_branch
        %116 = sbr.rel (%p113) target = $region12
      $region11: #{a3c_forward.4} parent=5 // pred_region
        %s117 = ssub.s32 %s9, 1
        // Predicated region
        $region13: #{a3c_forward.4} parent=11 // pred_check
          %p118 = pneg %p56
        $region14: #{a3c_forward.4} parent=11 // pred_check_branch
          %120 = sbr.rel (%p118) target = $region16
        $region15: #{a3c_forward.4} parent=11 // pred_region
          _
        $region16: #{a3c_forward.4} parent=11 // pred_fallthru
          _
        // Predicated region
        $region17: #{a3c_forward.4} parent=11 // pred_check
          %p121 = pneg %p77
        $region18: #{a3c_forward.4} parent=11 // pred_check_branch
          %123 = sbr.rel (%p121) target = $region20
        $region19: #{a3c_forward.4} parent=11 // pred_region
          _
        $region20: #{a3c_forward.4} parent=11 // pred_fallthru
          _
      $region12: #{a3c_forward.4} parent=5 // pred_fallthru
        _
      %p124 = scmp.lt.s32.totalorder %s9, 8
      // Predicated region
      $region21: #{a3c_forward.4} parent=5 // pred_check
        %p125 = pneg %p124
      $region22: #{a3c_forward.4} parent=5 // pred_check_branch
        %127 = sbr.rel (%p125) target = $region24
      $region23: #{a3c_forward.4} parent=5 // pred_region
        // Predicated region
        $region25: #{a3c_forward.4} parent=23 // pred_check
          %p128 = pneg %p29
        $region26: #{a3c_forward.4} parent=23 // pred_check_branch
          %130 = sbr.rel (%p128) target = $region28
        $region27: #{a3c_forward.4} parent=23 // pred_region
          %s131 = smul.u32 32, %s9
          %s132 = ssub.s32 225, %s131
          %p133 = scmp.lt.s32.totalorder %s132, 32
          %s134 = scalar_select %p133, %s132, 32
          %s135 = smul.u32 128, %s134
          %p136 = scmp.lt.s32.totalorder %s131, 224
          %s137 = scalar_select %p136, %s131, 224
          %s138 = smul.addr %s137, 8
          %s139 = scalar_lea.vmem %s0, %s138
          %s140 = smul.u32 32, %s9
          %s141 = ssub.s32 225, %s140
          %p142 = scmp.lt.s32.totalorder %s141, 32
          %s143 = scalar_select %p142, %s141, 32
          %s144 = smul.u32 128, %s143
        $region28: #{a3c_forward.4} parent=23 // pred_fallthru
          _
      $region24: #{a3c_forward.4} parent=5 // pred_fallthru
        _
      %p145 = scmp.le.s32.totalorder 1, %s9
      %p146 = scmp.lt.s32.totalorder %s9, 9
      %p147 = pnand %p145, %p146
      %p148 = pneg %p147
      // Predicated region
      $region29: #{a3c_forward.4} parent=5 // pred_check
        _
      $region30: #{a3c_forward.4} parent=5 // pred_check_branch
        %150 = sbr.rel (%p147) target = $region32
      $region31: #{a3c_forward.4} parent=5 // pred_region
        %s151 = ssub.s32 %s9, 1
        %s152 = smul.u32 32, %s14
        %s153 = ssub.s32 225, %s152
        %p154 = scmp.lt.s32.totalorder %s153, 32
        %s155 = scalar_select %p154, %s153, 32
        %s156 = smul.u32 128, %s155
        %p157 = scmp.lt.s32.totalorder %s152, 224
        %s158 = scalar_select %p157, %s152, 224
        %s159 = smul.addr %s158, 8
        %s160 = scalar_lea.vmem %s0, %s159
        %p161 = pneg %p35
        %p162 = pneg %p32
        %p163 = pneg %p56
        %p164 = pneg %p53
        %p165 = pneg %p77
        %p166 = pneg %p74
        %p167 = pneg %p103
        %p168 = pneg %p100
        %s169 = sand.u32 %s90, 1
        %s170 = sand.u32 %s90, 1
        %s171 = smul.addr %s170, 256
        %s172 = scalar_lea.vmem [#allocation2], %s171
        %s173 = smul.u32 32, %s14
        %s174 = ssub.s32 225, %s173
        %p175 = scmp.lt.s32.totalorder %s174, 32
        %s176 = scalar_select %p175, %s174, 32
        %s177 = smul.u32 128, %s176
        %p178 = scmp.lt.s32.totalorder %s173, 224
        %s179 = scalar_select %p178, %s173, 224
        %s180 = smul.addr %s179, 8
        %s181 = scalar_lea.vmem %s0, %s180
        %s182 = smul.u32 32, %s14
        %s183 = ssub.s32 225, %s182
        %p184 = scmp.lt.s32.totalorder %s183, 32
        %s185 = scalar_select %p184, %s183, 32
        %s186 = smul.u32 128, %s185
        %s187 = smul.u32 32, %s14
        %s188 = ssub.s32 225, %s187
        %p189 = scmp.lt.s32.totalorder %s188, 32
        %s190 = scalar_select %p189, %s188, 32
        %s191 = smul.u32 128, %s190
        %v192 = vld [vmem:[%s181] sm:$0xff]
        %v193 = vld [vmem:[%s181 + $0x8] sm:$0xff]
        %v194 = vld [vmem:[%s181 + $0x10] sm:$0xff]
        %v195 = vld [vmem:[%s181 + $0x18] sm:$0xff]
        %v196 = vld [vmem:[%s181 + $0x20] sm:$0xff]
        %v197 = vld [vmem:[%s181 + $0x28] sm:$0xff]
        %v198 = vld [vmem:[%s181 + $0x30] sm:$0xff]
        %v199 = vld [vmem:[%s181 + $0x38] sm:$0xff]
        %v200 = vld [vmem:[%s181 + $0x40] sm:$0xff]
        %v201 = vld [vmem:[%s181 + $0x48] sm:$0xff]
        %v202 = vld [vmem:[%s181 + $0x50] sm:$0xff]
        %v203 = vld [vmem:[%s181 + $0x58] sm:$0xff]
        %v204 = vld [vmem:[%s181 + $0x60] sm:$0xff]
        %v205 = vld [vmem:[%s181 + $0x68] sm:$0xff]
        %v206 = vld [vmem:[%s181 + $0x70] sm:$0xff]
        %v207 = vld [vmem:[%s181 + $0x78] sm:$0xff]
        %v208 = vld [vmem:[%s181 + $0x80] sm:$0xff]
        %v209 = vld [vmem:[%s181 + $0x88] sm:$0xff]
        %v210 = vld [vmem:[%s181 + $0x90] sm:$0xff]
        %v211 = vld [vmem:[%s181 + $0x98] sm:$0xff]
        %v212 = vld [vmem:[%s181 + $0xa0] sm:$0xff]
        %v213 = vld [vmem:[%s181 + $0xa8] sm:$0xff]
        %v214 = vld [vmem:[%s181 + $0xb0] sm:$0xff]
        %v215 = vld [vmem:[%s181 + $0xb8] sm:$0xff]
        %v216 = vld [vmem:[%s181 + $0xc0] sm:$0xff]
        %v217 = vld [vmem:[%s181 + $0xc8] sm:$0xff]
        %v218 = vld [vmem:[%s181 + $0xd0] sm:$0xff]
        %v219 = vld [vmem:[%s181 + $0xd8] sm:$0xff]
        %v220 = vld [vmem:[%s181 + $0xe0] sm:$0xff]
        %v221 = vld [vmem:[%s181 + $0xe8] sm:$0xff]
        %v222 = vld [vmem:[%s181 + $0xf0] sm:$0xff]
        %v223 = vld [vmem:[%s181 + $0xf8] sm:$0xff]
        %v224 = vld [vmem:[%s1] sm:$0xff]
        %v225 = vld [vmem:[%s1 + $0x8] sm:$0xff]
        %v226 = vld [vmem:[%s1 + $0x10] sm:$0xff]
        %v227 = vld [vmem:[%s1 + $0x18] sm:$0xff]
        %v228 = vld [vmem:[%s1 + $0x20] sm:$0xff]
        %v229 = vld [vmem:[%s1 + $0x28] sm:$0xff]
        %v230 = vld [vmem:[%s1 + $0x30] sm:$0xff]
        %v231 = vld [vmem:[%s1 + $0x38] sm:$0xff]
        %v232 = vld [vmem:[%s1 + $0x40] sm:$0xff]
        %v233 = vld [vmem:[%s1 + $0x48] sm:$0xff]
        %v234 = vld [vmem:[%s1 + $0x50] sm:$0xff]
        %v235 = vld [vmem:[%s1 + $0x58] sm:$0xff]
        %v236 = vld [vmem:[%s1 + $0x60] sm:$0xf]
        %v237 = vld [vmem:[%s2] sm:$0x1]
        %v239 = vlaneseq
        %v240 = vshrl.u32 %v239, 7
        %v241 = vsub.s32 0, %v240
        %v242 = vrot.slane %v237, %v241
        %vm244 = vcmask 818176
        %v246 = vsel %vm244, %v192, 0
        %v249 = vsel %vm244, %v193, 0
        %v252 = vsel %vm244, %v194, 0
        %v255 = vsel %vm244, %v195, 0
        %v258 = vsel %vm244, %v196, 0
        %v261 = vsel %vm244, %v197, 0
        %v264 = vsel %vm244, %v198, 0
        %v267 = vsel %vm244, %v199, 0
        %v270 = vsel %vm244, %v200, 0
        %v273 = vsel %vm244, %v201, 0
        %v276 = vsel %vm244, %v202, 0
        %v279 = vsel %vm244, %v203, 0
        %v282 = vsel %vm244, %v204, 0
        %v285 = vsel %vm244, %v205, 0
        %v288 = vsel %vm244, %v206, 0
        %v291 = vsel %vm244, %v207, 0
        %v294 = vsel %vm244, %v208, 0
        %v297 = vsel %vm244, %v209, 0
        %v300 = vsel %vm244, %v210, 0
        %v303 = vsel %vm244, %v211, 0
        %v306 = vsel %vm244, %v212, 0
        %v309 = vsel %vm244, %v213, 0
        %v312 = vsel %vm244, %v214, 0
        %v315 = vsel %vm244, %v215, 0
        %v318 = vsel %vm244, %v216, 0
        %v321 = vsel %vm244, %v217, 0
        %v324 = vsel %vm244, %v218, 0
        %v327 = vsel %vm244, %v219, 0
        %v330 = vsel %vm244, %v220, 0
        %v333 = vsel %vm244, %v221, 0
        %v336 = vsel %vm244, %v222, 0
        %v339 = vsel %vm244, %v223, 0
        %vm341 = vcmask 1043456
        %v343 = vsel %vm341, %v236, 0
        %345 = vmatprep.subr.mxu0 0.0
        %346 = vmatpush1.msra.mxu0 %v224
        %347 = vmatprep.subr.mxu0 0.0
        %348 = vmatpush1.msra.mxu0 %v225
        %349 = vmatprep.subr.mxu0 0.0
        %350 = vmatpush1.msra.mxu0 %v226
        %351 = vmatprep.subr.mxu0 0.0
        %352 = vmatpush1.msra.mxu0 %v227
        %353 = vmatprep.subr.mxu0 0.0
        %354 = vmatpush1.msra.mxu0 %v228
        %355 = vmatprep.subr.mxu0 0.0
        %356 = vmatpush1.msra.mxu0 %v229
        %357 = vmatprep.subr.mxu0 0.0
        %358 = vmatpush1.msra.mxu0 %v230
        %359 = vmatprep.subr.mxu0 0.0
        %360 = vmatpush1.msra.mxu0 %v231
        %361 = vmatprep.subr.mxu0 0.0
        %362 = vmatpush1.msra.mxu0 %v232
        %363 = vmatprep.subr.mxu0 0.0
        %364 = vmatpush1.msra.mxu0 %v233
        %365 = vmatprep.subr.mxu0 0.0
        %366 = vmatpush1.msra.mxu0 %v234
        %367 = vmatprep.subr.mxu0 0.0
        %368 = vmatpush1.msra.mxu0 %v235
        %369 = vmatprep.subr.mxu0 0.0
        %370 = vmatpush1.msra.mxu0 %v343
        %371 = vmatprep.subr.mxu0 0.0
        %372 = vmatpush1.msra.mxu0 0.0
        %373 = vmatprep.subr.mxu0 0.0
        %374 = vmatpush1.msra.mxu0 0.0
        %375 = vmatprep.subr.mxu0 0.0
        %376 = vmatpush1.msra.mxu0 0.0
        %377 = vmatprep.subr.mxu0 0.0
        %378 = vmatpush1.msra.mxu0 0.0
        %379 = vmatprep.subr.mxu0 0.0
        %380 = vmatpush1.msra.mxu0 0.0
        %381 = vmatprep.subr.mxu0 0.0
        %382 = vmatpush1.msra.mxu0 0.0
        %383 = vmatprep.subr.mxu0 0.0
        %384 = vmatpush1.msra.mxu0 0.0
        %385 = vmatprep.subr.mxu0 0.0
        %386 = vmatpush1.msra.mxu0 0.0
        %387 = vmatprep.subr.mxu0 0.0
        %388 = vmatpush1.msra.mxu0 0.0
        %389 = vmatprep.subr.mxu0 0.0
        %390 = vmatpush1.msra.mxu0 0.0
        %391 = vmatprep.subr.mxu0 0.0
        %392 = vmatpush1.msra.mxu0 0.0
        %393 = vmatprep.subr.mxu0 0.0
        %394 = vmatpush1.msra.mxu0 0.0
        %395 = vmatprep.subr.mxu0 0.0
        %396 = vmatpush1.msra.mxu0 0.0
        %397 = vmatprep.subr.mxu0 0.0
        %398 = vmatpush1.msra.mxu0 0.0
        %399 = vmatprep.subr.mxu0 0.0
        %400 = vmatpush1.msra.mxu0 0.0
        %401 = vmatprep.subr.mxu0 0.0
        %402 = vmatpush1.msra.mxu0 0.0
        %403 = vmatprep.subr.mxu0 0.0
        %404 = vmatpush1.msra.mxu0 0.0
        %405 = vmatprep.subr.mxu0 0.0
        %406 = vmatpush1.msra.mxu0 0.0
        %407 = vmatprep.subr.mxu0 0.0
        %408 = vmatpush1.msra.mxu0 0.0
        %409 = vmatprep.mubr.f32.mxu0 0.0
        %410 = vmatmul.mubr.f32.gmra.mrb[0].mxu0 %v246
        %v411 = vpop.f32.mrb[0].mxu0
        %v412 = vadd.f32 %v242, %v411
        %v413 = vpop.f32.mrb[0].mxu0
        %414 = vmatprep.mubr.f32.mxu0 0.0
        %415 = vmatmul.mubr.f32.gmra.mrb[0].mxu0 %v249
        %v416 = vpop.f32.mrb[0].mxu0
        %v417 = vadd.f32 %v242, %v416
        %v418 = vpop.f32.mrb[0].mxu0
        %419 = vmatprep.mubr.f32.mxu0 0.0
        %420 = vmatmul.mubr.f32.gmra.mrb[0].mxu0 %v252
        %v421 = vpop.f32.mrb[0].mxu0
        %v422 = vadd.f32 %v242, %v421
        %v423 = vpop.f32.mrb[0].mxu0
        %424 = vmatprep.mubr.f32.mxu0 0.0
        %425 = vmatmul.mubr.f32.gmra.mrb[0].mxu0 %v255
        %v426 = vpop.f32.mrb[0].mxu0
        %v427 = vadd.f32 %v242, %v426
        %v428 = vpop.f32.mrb[0].mxu0
        %429 = vmatprep.mubr.f32.mxu0 0.0
        %430 = vmatmul.mubr.f32.gmra.mrb[0].mxu0 %v258
        %v431 = vpop.f32.mrb[0].mxu0
        %v432 = vadd.f32 %v242, %v431
        %v433 = vpop.f32.mrb[0].mxu0
        %434 = vmatprep.mubr.f32.mxu0 0.0
        %435 = vmatmul.mubr.f32.gmra.mrb[0].mxu0 %v261
        %v436 = vpop.f32.mrb[0].mxu0
        %v437 = vadd.f32 %v242, %v436
        %v438 = vpop.f32.mrb[0].mxu0
        %439 = vmatprep.mubr.f32.mxu0 0.0
        %440 = vmatmul.mubr.f32.gmra.mrb[0].mxu0 %v264
        %v441 = vpop.f32.mrb[0].mxu0
        %v442 = vadd.f32 %v242, %v441
        %v443 = vpop.f32.mrb[0].mxu0
        %444 = vmatprep.mubr.f32.mxu0 0.0
        %445 = vmatmul.mubr.f32.gmra.mrb[0].mxu0 %v267
        %v446 = vpop.f32.mrb[0].mxu0
        %v447 = vadd.f32 %v242, %v446
        %v448 = vpop.f32.mrb[0].mxu0
        %449 = vmatprep.mubr.f32.mxu0 0.0
        %450 = vmatmul.mubr.f32.gmra.mrb[0].mxu0 %v270
        %v451 = vpop.f32.mrb[0].mxu0
        %v452 = vadd.f32 %v242, %v451
        %v453 = vpop.f32.mrb[0].mxu0
        %454 = vmatprep.mubr.f32.mxu0 0.0
        %455 = vmatmul.mubr.f32.gmra.mrb[0].mxu0 %v273
        %v456 = vpop.f32.mrb[0].mxu0
        %v457 = vadd.f32 %v242, %v456
        %v458 = vpop.f32.mrb[0].mxu0
        %459 = vmatprep.mubr.f32.mxu0 0.0
        %460 = vmatmul.mubr.f32.gmra.mrb[0].mxu0 %v276
        %v461 = vpop.f32.mrb[0].mxu0
        %v462 = vadd.f32 %v242, %v461
        %v463 = vpop.f32.mrb[0].mxu0
        %464 = vmatprep.mubr.f32.mxu0 0.0
        %465 = vmatmul.mubr.f32.gmra.mrb[0].mxu0 %v279
        %v466 = vpop.f32.mrb[0].mxu0
        %v467 = vadd.f32 %v242, %v466
        %v468 = vpop.f32.mrb[0].mxu0
        %469 = vmatprep.mubr.f32.mxu0 0.0
        %470 = vmatmul.mubr.f32.gmra.mrb[0].mxu0 %v282
        %v471 = vpop.f32.mrb[0].mxu0
        %v472 = vadd.f32 %v242, %v471
        %v473 = vpop.f32.mrb[0].mxu0
        %474 = vmatprep.mubr.f32.mxu0 0.0
        %475 = vmatmul.mubr.f32.gmra.mrb[0].mxu0 %v285
        %v476 = vpop.f32.mrb[0].mxu0
        %v477 = vadd.f32 %v242, %v476
        %v478 = vpop.f32.mrb[0].mxu0
        %479 = vmatprep.mubr.f32.mxu0 0.0
        %480 = vmatmul.mubr.f32.gmra.mrb[0].mxu0 %v288
        %v481 = vpop.f32.mrb[0].mxu0
        %v482 = vadd.f32 %v242, %v481
        %v483 = vpop.f32.mrb[0].mxu0
        %484 = vmatprep.mubr.f32.mxu0 0.0
        %485 = vmatmul.mubr.f32.gmra.mrb[0].mxu0 %v291
        %v486 = vpop.f32.mrb[0].mxu0
        %v487 = vadd.f32 %v242, %v486
        %v488 = vpop.f32.mrb[0].mxu0
        %489 = vmatprep.mubr.f32.mxu0 0.0
        %490 = vmatmul.mubr.f32.gmra.mrb[0].mxu0 %v294
        %v491 = vpop.f32.mrb[0].mxu0
        %v492 = vadd.f32 %v242, %v491
        %v493 = vpop.f32.mrb[0].mxu0
        %494 = vmatprep.mubr.f32.mxu0 0.0
        %495 = vmatmul.mubr.f32.gmra.mrb[0].mxu0 %v297
        %v496 = vpop.f32.mrb[0].mxu0
        %v497 = vadd.f32 %v242, %v496
        %v498 = vpop.f32.mrb[0].mxu0
        %499 = vmatprep.mubr.f32.mxu0 0.0
        %500 = vmatmul.mubr.f32.gmra.mrb[0].mxu0 %v300
        %v501 = vpop.f32.mrb[0].mxu0
        %v502 = vadd.f32 %v242, %v501
        %v503 = vpop.f32.mrb[0].mxu0
        %504 = vmatprep.mubr.f32.mxu0 0.0
        %505 = vmatmul.mubr.f32.gmra.mrb[0].mxu0 %v303
        %v506 = vpop.f32.mrb[0].mxu0
        %v507 = vadd.f32 %v242, %v506
        %v508 = vpop.f32.mrb[0].mxu0
        %509 = vmatprep.mubr.f32.mxu0 0.0
        %510 = vmatmul.mubr.f32.gmra.mrb[0].mxu0 %v306
        %v511 = vpop.f32.mrb[0].mxu0
        %v512 = vadd.f32 %v242, %v511
        %v513 = vpop.f32.mrb[0].mxu0
        %514 = vmatprep.mubr.f32.mxu0 0.0
        %515 = vmatmul.mubr.f32.gmra.mrb[0].mxu0 %v309
        %v516 = vpop.f32.mrb[0].mxu0
        %v517 = vadd.f32 %v242, %v516
        %v518 = vpop.f32.mrb[0].mxu0
        %519 = vmatprep.mubr.f32.mxu0 0.0
        %520 = vmatmul.mubr.f32.gmra.mrb[0].mxu0 %v312
        %v521 = vpop.f32.mrb[0].mxu0
        %v522 = vadd.f32 %v242, %v521
        %v523 = vpop.f32.mrb[0].mxu0
        %524 = vmatprep.mubr.f32.mxu0 0.0
        %525 = vmatmul.mubr.f32.gmra.mrb[0].mxu0 %v315
        %v526 = vpop.f32.mrb[0].mxu0
        %v527 = vadd.f32 %v242, %v526
        %v528 = vpop.f32.mrb[0].mxu0
        %529 = vmatprep.mubr.f32.mxu0 0.0
        %530 = vmatmul.mubr.f32.gmra.mrb[0].mxu0 %v318
        %v531 = vpop.f32.mrb[0].mxu0
        %v532 = vadd.f32 %v242, %v531
        %v533 = vpop.f32.mrb[0].mxu0
        %534 = vmatprep.mubr.f32.mxu0 0.0
        %535 = vmatmul.mubr.f32.gmra.mrb[0].mxu0 %v321
        %v536 = vpop.f32.mrb[0].mxu0
        %v537 = vadd.f32 %v242, %v536
        %v538 = vpop.f32.mrb[0].mxu0
        %539 = vmatprep.mubr.f32.mxu0 0.0
        %540 = vmatmul.mubr.f32.gmra.mrb[0].mxu0 %v324
        %v541 = vpop.f32.mrb[0].mxu0
        %v542 = vadd.f32 %v242, %v541
        %v543 = vpop.f32.mrb[0].mxu0
        %544 = vmatprep.mubr.f32.mxu0 0.0
        %545 = vmatmul.mubr.f32.gmra.mrb[0].mxu0 %v327
        %v546 = vpop.f32.mrb[0].mxu0
        %v547 = vadd.f32 %v242, %v546
        %v548 = vpop.f32.mrb[0].mxu0
        %549 = vmatprep.mubr.f32.mxu0 0.0
        %550 = vmatmul.mubr.f32.gmra.mrb[0].mxu0 %v330
        %v551 = vpop.f32.mrb[0].mxu0
        %v552 = vadd.f32 %v242, %v551
        %v553 = vpop.f32.mrb[0].mxu0
        %554 = vmatprep.mubr.f32.mxu0 0.0
        %555 = vmatmul.mubr.f32.gmra.mrb[0].mxu0 %v333
        %v556 = vpop.f32.mrb[0].mxu0
        %v557 = vadd.f32 %v242, %v556
        %v558 = vpop.f32.mrb[0].mxu0
        %559 = vmatprep.mubr.f32.mxu0 0.0
        %560 = vmatmul.mubr.f32.gmra.mrb[0].mxu0 %v336
        %v561 = vpop.f32.mrb[0].mxu0
        %v562 = vadd.f32 %v242, %v561
        %v563 = vpop.f32.mrb[0].mxu0
        %564 = vmatprep.mubr.f32.mxu0 0.0
        %565 = vmatmul.mubr.f32.gmra.mrb[0].mxu0 %v339
        %v566 = vpop.f32.mrb[0].mxu0
        %v567 = vadd.f32 %v242, %v566
        %v568 = vpop.f32.mrb[0].mxu0
        %569 = vdwg.mxu0
        %v570 = vmax.f32 %v412, 0.0
        %v571 = vmax.f32 %v417, 0.0
        %v572 = vmax.f32 %v422, 0.0
        %v573 = vmax.f32 %v427, 0.0
        %v574 = vmax.f32 %v432, 0.0
        %v575 = vmax.f32 %v437, 0.0
        %v576 = vmax.f32 %v442, 0.0
        %v577 = vmax.f32 %v447, 0.0
        %v578 = vmax.f32 %v452, 0.0
        %v579 = vmax.f32 %v457, 0.0
        %v580 = vmax.f32 %v462, 0.0
        %v581 = vmax.f32 %v467, 0.0
        %v582 = vmax.f32 %v472, 0.0
        %v583 = vmax.f32 %v477, 0.0
        %v584 = vmax.f32 %v482, 0.0
        %v585 = vmax.f32 %v487, 0.0
        %v586 = vmax.f32 %v492, 0.0
        %v587 = vmax.f32 %v497, 0.0
        %v588 = vmax.f32 %v502, 0.0
        %v589 = vmax.f32 %v507, 0.0
        %v590 = vmax.f32 %v512, 0.0
        %v591 = vmax.f32 %v517, 0.0
        %v592 = vmax.f32 %v522, 0.0
        %v593 = vmax.f32 %v527, 0.0
        %v594 = vmax.f32 %v532, 0.0
        %v595 = vmax.f32 %v537, 0.0
        %v596 = vmax.f32 %v542, 0.0
        %v597 = vmax.f32 %v547, 0.0
        %v598 = vmax.f32 %v552, 0.0
        %v599 = vmax.f32 %v557, 0.0
        %v600 = vmax.f32 %v562, 0.0
        %v601 = vmax.f32 %v567, 0.0
        %vm602 = vcmask 261120
        %603 = vst.msk [vmem:[%s172] sm:$0xff] %vm602, %v570
        %604 = vst.msk [vmem:[%s172 + $0x8] sm:$0xff] %vm602, %v571
        %605 = vst.msk [vmem:[%s172 + $0x10] sm:$0xff] %vm602, %v572
        %606 = vst.msk [vmem:[%s172 + $0x18] sm:$0xff] %vm602, %v573
        %607 = vst.msk [vmem:[%s172 + $0x20] sm:$0xff] %vm602, %v574
        %608 = vst.msk [vmem:[%s172 + $0x28] sm:$0xff] %vm602, %v575
        %609 = vst.msk [vmem:[%s172 + $0x30] sm:$0xff] %vm602, %v576
        %610 = vst.msk [vmem:[%s172 + $0x38] sm:$0xff] %vm602, %v577
        %611 = vst.msk [vmem:[%s172 + $0x40] sm:$0xff] %vm602, %v578
        %612 = vst.msk [vmem:[%s172 + $0x48] sm:$0xff] %vm602, %v579
        %613 = vst.msk [vmem:[%s172 + $0x50] sm:$0xff] %vm602, %v580
        %614 = vst.msk [vmem:[%s172 + $0x58] sm:$0xff] %vm602, %v581
        %615 = vst.msk [vmem:[%s172 + $0x60] sm:$0xff] %vm602, %v582
        %616 = vst.msk [vmem:[%s172 + $0x68] sm:$0xff] %vm602, %v583
        %617 = vst.msk [vmem:[%s172 + $0x70] sm:$0xff] %vm602, %v584
        %618 = vst.msk [vmem:[%s172 + $0x78] sm:$0xff] %vm602, %v585
        %619 = vst.msk [vmem:[%s172 + $0x80] sm:$0xff] %vm602, %v586
        %620 = vst.msk [vmem:[%s172 + $0x88] sm:$0xff] %vm602, %v587
        %621 = vst.msk [vmem:[%s172 + $0x90] sm:$0xff] %vm602, %v588
        %622 = vst.msk [vmem:[%s172 + $0x98] sm:$0xff] %vm602, %v589
        %623 = vst.msk [vmem:[%s172 + $0xa0] sm:$0xff] %vm602, %v590
        %624 = vst.msk [vmem:[%s172 + $0xa8] sm:$0xff] %vm602, %v591
        %625 = vst.msk [vmem:[%s172 + $0xb0] sm:$0xff] %vm602, %v592
        %626 = vst.msk [vmem:[%s172 + $0xb8] sm:$0xff] %vm602, %v593
        %627 = vst.msk [vmem:[%s172 + $0xc0] sm:$0xff] %vm602, %v594
        %628 = vst.msk [vmem:[%s172 + $0xc8] sm:$0xff] %vm602, %v595
        %629 = vst.msk [vmem:[%s172 + $0xd0] sm:$0xff] %vm602, %v596
        %630 = vst.msk [vmem:[%s172 + $0xd8] sm:$0xff] %vm602, %v597
        %631 = vst.msk [vmem:[%s172 + $0xe0] sm:$0xff] %vm602, %v598
        %632 = vst.msk [vmem:[%s172 + $0xe8] sm:$0xff] %vm602, %v599
        %633 = vst.msk [vmem:[%s172 + $0xf0] sm:$0xff] %vm602, %v600
        %634 = vst.msk [vmem:[%s172 + $0xf8] sm:$0xff] %vm602, %v601
        %s635 = sand.u32 %s90, 1
        %s636 = sand.u32 %s90, 1
        %s637 = smul.addr %s636, 256
        %s638 = scalar_lea.vmem [#allocation2], %s637
        // Predicated region
        $region33: #{a3c_forward.4} parent=31 // pred_check
          %p639 = pneg %p100
        $region34: #{a3c_forward.4} parent=31 // pred_check_branch
          %641 = sbr.rel (%p639) target = $region36
        $region35: #{a3c_forward.4} parent=31 // pred_region
          %s642 = smul.u32 32, %s14
          %s643 = ssub.s32 225, %s642
          %p644 = scmp.lt.s32.totalorder %s643, 32
          %s645 = scalar_select %p644, %s643, 32
          %s646 = smul.u32 128, %s645
          %p647 = scmp.ne.s32.totalorder 0, %s646
          %s648 = smul.addr %s642, 8
          %s649 = scalar_lea.vmem %s3, %s648
          // Predicated region
          $region37: #{a3c_forward.4} parent=35 // pred_check
            %p650 = pneg %p647
          $region38: #{a3c_forward.4} parent=35 // pred_check_branch
            %652 = sbr.rel (%p650) target = $region40
          $region39: #{a3c_forward.4} parent=35 // pred_region
            // Predicated region
            $region41: #{a3c_forward.4} parent=39 // pred_check
              _
            $region42: #{a3c_forward.4} parent=39 // pred_check_branch
              %654 = sbr.rel (0) target = $region44
            $region43: #{a3c_forward.4} parent=39 // pred_region
              // Predicated region
              $region63: #{a3c_forward.4} parent=43 // pred_check
                _
              $region64: #{a3c_forward.4} parent=43 // pred_check_branch
                %765 = sbr.rel (0) target = $region66
              $region65: #{a3c_forward.4} parent=43 // pred_region
                %s766 = sshrl.u32 %s645, 5
                // While loop
                $region67: #{a3c_forward.4} parent=65 // loop_pre_header
                  _
                $region68: #{a3c_forward.4} parent=65 // loop_header
                  %s768 = sphi 0, %s770
                  %p769 = scmp.ge.s32.totalorder %s768, %s766
                  %s773 = sphi 0, %s842
                  %s774 = sphi %s638, %s845
                  %s775 = sphi %s649, %s846
                $region69: #{a3c_forward.4} parent=65 // loop_header_branch
                  %772 = sbr.rel (%p769) target = $region73
                $region70: #{a3c_forward.4} parent=65 // loop_body
                  %v776 = vld [vmem:[%s774] sm:$0xff]
                  %777 = vst [vmem:[%s775] sm:$0xff] %v776
                  %v778 = vld [vmem:[%s774 + $0x8] sm:$0xff]
                  %779 = vst [vmem:[%s775 + $0x8] sm:$0xff] %v778
                  %v780 = vld [vmem:[%s774 + $0x10] sm:$0xff]
                  %781 = vst [vmem:[%s775 + $0x10] sm:$0xff] %v780
                  %v782 = vld [vmem:[%s774 + $0x18] sm:$0xff]
                  %783 = vst [vmem:[%s775 + $0x18] sm:$0xff] %v782
                  %v784 = vld [vmem:[%s774 + $0x20] sm:$0xff]
                  %785 = vst [vmem:[%s775 + $0x20] sm:$0xff] %v784
                  %v786 = vld [vmem:[%s774 + $0x28] sm:$0xff]
                  %787 = vst [vmem:[%s775 + $0x28] sm:$0xff] %v786
                  %v788 = vld [vmem:[%s774 + $0x30] sm:$0xff]
                  %789 = vst [vmem:[%s775 + $0x30] sm:$0xff] %v788
                  %v790 = vld [vmem:[%s774 + $0x38] sm:$0xff]
                  %791 = vst [vmem:[%s775 + $0x38] sm:$0xff] %v790
                  %v792 = vld [vmem:[%s774 + $0x40] sm:$0xff]
                  %793 = vst [vmem:[%s775 + $0x40] sm:$0xff] %v792
                  %v794 = vld [vmem:[%s774 + $0x48] sm:$0xff]
                  %795 = vst [vmem:[%s775 + $0x48] sm:$0xff] %v794
                  %v796 = vld [vmem:[%s774 + $0x50] sm:$0xff]
                  %797 = vst [vmem:[%s775 + $0x50] sm:$0xff] %v796
                  %v798 = vld [vmem:[%s774 + $0x58] sm:$0xff]
                  %799 = vst [vmem:[%s775 + $0x58] sm:$0xff] %v798
                  %v800 = vld [vmem:[%s774 + $0x60] sm:$0xff]
                  %801 = vst [vmem:[%s775 + $0x60] sm:$0xff] %v800
                  %v802 = vld [vmem:[%s774 + $0x68] sm:$0xff]
                  %803 = vst [vmem:[%s775 + $0x68] sm:$0xff] %v802
                  %v804 = vld [vmem:[%s774 + $0x70] sm:$0xff]
                  %805 = vst [vmem:[%s775 + $0x70] sm:$0xff] %v804
                  %v806 = vld [vmem:[%s774 + $0x78] sm:$0xff]
                  %807 = vst [vmem:[%s775 + $0x78] sm:$0xff] %v806
                  %v808 = vld [vmem:[%s774 + $0x80] sm:$0xff]
                  %809 = vst [vmem:[%s775 + $0x80] sm:$0xff] %v808
                  %v810 = vld [vmem:[%s774 + $0x88] sm:$0xff]
                  %811 = vst [vmem:[%s775 + $0x88] sm:$0xff] %v810
                  %v812 = vld [vmem:[%s774 + $0x90] sm:$0xff]
                  %813 = vst [vmem:[%s775 + $0x90] sm:$0xff] %v812
                  %v814 = vld [vmem:[%s774 + $0x98] sm:$0xff]
                  %815 = vst [vmem:[%s775 + $0x98] sm:$0xff] %v814
                  %v816 = vld [vmem:[%s774 + $0xa0] sm:$0xff]
                  %817 = vst [vmem:[%s775 + $0xa0] sm:$0xff] %v816
                  %v818 = vld [vmem:[%s774 + $0xa8] sm:$0xff]
                  %819 = vst [vmem:[%s775 + $0xa8] sm:$0xff] %v818
                  %v820 = vld [vmem:[%s774 + $0xb0] sm:$0xff]
                  %821 = vst [vmem:[%s775 + $0xb0] sm:$0xff] %v820
                  %v822 = vld [vmem:[%s774 + $0xb8] sm:$0xff]
                  %823 = vst [vmem:[%s775 + $0xb8] sm:$0xff] %v822
                  %v824 = vld [vmem:[%s774 + $0xc0] sm:$0xff]
                  %825 = vst [vmem:[%s775 + $0xc0] sm:$0xff] %v824
                  %v826 = vld [vmem:[%s774 + $0xc8] sm:$0xff]
                  %827 = vst [vmem:[%s775 + $0xc8] sm:$0xff] %v826
                  %v828 = vld [vmem:[%s774 + $0xd0] sm:$0xff]
                  %829 = vst [vmem:[%s775 + $0xd0] sm:$0xff] %v828
                  %v830 = vld [vmem:[%s774 + $0xd8] sm:$0xff]
                  %831 = vst [vmem:[%s775 + $0xd8] sm:$0xff] %v830
                  %v832 = vld [vmem:[%s774 + $0xe0] sm:$0xff]
                  %833 = vst [vmem:[%s775 + $0xe0] sm:$0xff] %v832
                  %v834 = vld [vmem:[%s774 + $0xe8] sm:$0xff]
                  %835 = vst [vmem:[%s775 + $0xe8] sm:$0xff] %v834
                  %v836 = vld [vmem:[%s774 + $0xf0] sm:$0xff]
                  %837 = vst [vmem:[%s775 + $0xf0] sm:$0xff] %v836
                  %v838 = vld [vmem:[%s774 + $0xf8] sm:$0xff]
                  %839 = vst [vmem:[%s775 + $0xf8] sm:$0xff] %v838
                  %s840 = sadd.s32 1, %s773
                  %p841 = scmp.ge.s32.totalorder %s840, %s766
                  %s842 = scalar_select %p841, 0, %s840
                  %s843 = smul.u32 %s842, 256
                  %s844 = smul.u32 %s842, 256
                  %s845 = scalar_lea.vmem %s638, %s843 [#allocation2]
                  %s846 = scalar_lea.vmem %s649, %s844
                $region71: #{a3c_forward.4} parent=65 // loop_footer
                  %s770 = sadd.s32 %s768, 1
                $region72: #{a3c_forward.4} parent=65 // loop_footer_branch
                  %767 = sbr.rel target = $region68
                $region73: #{a3c_forward.4} parent=65 // loop_exit
                  _
                %s847 = sshrl.u32 %s645, 5
                %s848 = sand.u32 %s645, 31
                %s849 = smul.u32 %s847, 32
                %s850 = smul.u32 8, %s849
                %s851 = scalar_lea.vmem %s638, %s850 [#allocation2]
                %s852 = smul.u32 8, %s849
                %s853 = scalar_lea.vmem %s649, %s852
                // While loop
                $region74: #{a3c_forward.4} parent=65 // loop_pre_header
                  _
                $region75: #{a3c_forward.4} parent=65 // loop_header
                  %s855 = sphi 0, %s857
                  %p856 = scmp.ge.s32.totalorder %s855, %s848
                  %s860 = sphi 0, %s867
                  %s861 = sphi %s851, %s870
                  %s862 = sphi %s853, %s871
                $region76: #{a3c_forward.4} parent=65 // loop_header_branch
                  %859 = sbr.rel (%p856) target = $region80
                $region77: #{a3c_forward.4} parent=65 // loop_body
                  %v863 = vld [vmem:[%s861] sm:$0xff]
                  %864 = vst [vmem:[%s862] sm:$0xff] %v863
                  %s865 = sadd.s32 1, %s860
                  %p866 = scmp.ge.s32.totalorder %s865, %s848
                  %s867 = scalar_select %p866, 0, %s865
                  %s868 = smul.u32 %s867, 8
                  %s869 = smul.u32 %s867, 8
                  %s870 = scalar_lea.vmem %s851, %s868 [#allocation2]
                  %s871 = scalar_lea.vmem %s853, %s869
                $region78: #{a3c_forward.4} parent=65 // loop_footer
                  %s857 = sadd.s32 %s855, 1
                $region79: #{a3c_forward.4} parent=65 // loop_footer_branch
                  %854 = sbr.rel target = $region75
                $region80: #{a3c_forward.4} parent=65 // loop_exit
                  _
              $region66: #{a3c_forward.4} parent=43 // pred_fallthru
                _
              // Predicated region
              $region81: #{a3c_forward.4} parent=43 // pred_check
                _
              $region82: #{a3c_forward.4} parent=43 // pred_check_branch
                %873 = sbr.rel target = $region84
              $region83: #{a3c_forward.4} parent=43 // pred_region
                _
              $region84: #{a3c_forward.4} parent=43 // pred_fallthru
                _
            $region44: #{a3c_forward.4} parent=39 // pred_fallthru
              _
            // Predicated region
            $region45: #{a3c_forward.4} parent=39 // pred_check
              _
            $region46: #{a3c_forward.4} parent=39 // pred_check_branch
              %656 = sbr.rel target = $region48
            $region47: #{a3c_forward.4} parent=39 // pred_region
              %s658 = sshrl.u32 %s645, 5
              // While loop
              $region49: #{a3c_forward.4} parent=47 // loop_pre_header
                _
              $region50: #{a3c_forward.4} parent=47 // loop_header
                %s660 = sphi 0, %s662
                %p661 = scmp.ge.s32.totalorder %s660, %s658
                %s665 = sphi 0, %s734
                %s666 = sphi %s638, %s737
                %s667 = sphi %s649, %s738
              $region51: #{a3c_forward.4} parent=47 // loop_header_branch
                %664 = sbr.rel (%p661) target = $region55
              $region52: #{a3c_forward.4} parent=47 // loop_body
                %v668 = vld [vmem:[%s666] sm:$0xff]
                %669 = vst [vmem:[%s667] sm:$0xff] %v668
                %v670 = vld [vmem:[%s666 + $0x8] sm:$0xff]
                %671 = vst [vmem:[%s667 + $0x8] sm:$0xff] %v670
                %v672 = vld [vmem:[%s666 + $0x10] sm:$0xff]
                %673 = vst [vmem:[%s667 + $0x10] sm:$0xff] %v672
                %v674 = vld [vmem:[%s666 + $0x18] sm:$0xff]
                %675 = vst [vmem:[%s667 + $0x18] sm:$0xff] %v674
                %v676 = vld [vmem:[%s666 + $0x20] sm:$0xff]
                %677 = vst [vmem:[%s667 + $0x20] sm:$0xff] %v676
                %v678 = vld [vmem:[%s666 + $0x28] sm:$0xff]
                %679 = vst [vmem:[%s667 + $0x28] sm:$0xff] %v678
                %v680 = vld [vmem:[%s666 + $0x30] sm:$0xff]
                %681 = vst [vmem:[%s667 + $0x30] sm:$0xff] %v680
                %v682 = vld [vmem:[%s666 + $0x38] sm:$0xff]
                %683 = vst [vmem:[%s667 + $0x38] sm:$0xff] %v682
                %v684 = vld [vmem:[%s666 + $0x40] sm:$0xff]
                %685 = vst [vmem:[%s667 + $0x40] sm:$0xff] %v684
                %v686 = vld [vmem:[%s666 + $0x48] sm:$0xff]
                %687 = vst [vmem:[%s667 + $0x48] sm:$0xff] %v686
                %v688 = vld [vmem:[%s666 + $0x50] sm:$0xff]
                %689 = vst [vmem:[%s667 + $0x50] sm:$0xff] %v688
                %v690 = vld [vmem:[%s666 + $0x58] sm:$0xff]
                %691 = vst [vmem:[%s667 + $0x58] sm:$0xff] %v690
                %v692 = vld [vmem:[%s666 + $0x60] sm:$0xff]
                %693 = vst [vmem:[%s667 + $0x60] sm:$0xff] %v692
                %v694 = vld [vmem:[%s666 + $0x68] sm:$0xff]
                %695 = vst [vmem:[%s667 + $0x68] sm:$0xff] %v694
                %v696 = vld [vmem:[%s666 + $0x70] sm:$0xff]
                %697 = vst [vmem:[%s667 + $0x70] sm:$0xff] %v696
                %v698 = vld [vmem:[%s666 + $0x78] sm:$0xff]
                %699 = vst [vmem:[%s667 + $0x78] sm:$0xff] %v698
                %v700 = vld [vmem:[%s666 + $0x80] sm:$0xff]
                %701 = vst [vmem:[%s667 + $0x80] sm:$0xff] %v700
                %v702 = vld [vmem:[%s666 + $0x88] sm:$0xff]
                %703 = vst [vmem:[%s667 + $0x88] sm:$0xff] %v702
                %v704 = vld [vmem:[%s666 + $0x90] sm:$0xff]
                %705 = vst [vmem:[%s667 + $0x90] sm:$0xff] %v704
                %v706 = vld [vmem:[%s666 + $0x98] sm:$0xff]
                %707 = vst [vmem:[%s667 + $0x98] sm:$0xff] %v706
                %v708 = vld [vmem:[%s666 + $0xa0] sm:$0xff]
                %709 = vst [vmem:[%s667 + $0xa0] sm:$0xff] %v708
                %v710 = vld [vmem:[%s666 + $0xa8] sm:$0xff]
                %711 = vst [vmem:[%s667 + $0xa8] sm:$0xff] %v710
                %v712 = vld [vmem:[%s666 + $0xb0] sm:$0xff]
                %713 = vst [vmem:[%s667 + $0xb0] sm:$0xff] %v712
                %v714 = vld [vmem:[%s666 + $0xb8] sm:$0xff]
                %715 = vst [vmem:[%s667 + $0xb8] sm:$0xff] %v714
                %v716 = vld [vmem:[%s666 + $0xc0] sm:$0xff]
                %717 = vst [vmem:[%s667 + $0xc0] sm:$0xff] %v716
                %v718 = vld [vmem:[%s666 + $0xc8] sm:$0xff]
                %719 = vst [vmem:[%s667 + $0xc8] sm:$0xff] %v718
                %v720 = vld [vmem:[%s666 + $0xd0] sm:$0xff]
                %721 = vst [vmem:[%s667 + $0xd0] sm:$0xff] %v720
                %v722 = vld [vmem:[%s666 + $0xd8] sm:$0xff]
                %723 = vst [vmem:[%s667 + $0xd8] sm:$0xff] %v722
                %v724 = vld [vmem:[%s666 + $0xe0] sm:$0xff]
                %725 = vst [vmem:[%s667 + $0xe0] sm:$0xff] %v724
                %v726 = vld [vmem:[%s666 + $0xe8] sm:$0xff]
                %727 = vst [vmem:[%s667 + $0xe8] sm:$0xff] %v726
                %v728 = vld [vmem:[%s666 + $0xf0] sm:$0xff]
                %729 = vst [vmem:[%s667 + $0xf0] sm:$0xff] %v728
                %v730 = vld [vmem:[%s666 + $0xf8] sm:$0xff]
                %731 = vst [vmem:[%s667 + $0xf8] sm:$0xff] %v730
                %s732 = sadd.s32 1, %s665
                %p733 = scmp.ge.s32.totalorder %s732, %s658
                %s734 = scalar_select %p733, 0, %s732
                %s735 = smul.u32 %s734, 256
                %s736 = smul.u32 %s734, 256
                %s737 = scalar_lea.vmem %s638, %s735 [#allocation2]
                %s738 = scalar_lea.vmem %s649, %s736
              $region53: #{a3c_forward.4} parent=47 // loop_footer
                %s662 = sadd.s32 %s660, 1
              $region54: #{a3c_forward.4} parent=47 // loop_footer_branch
                %659 = sbr.rel target = $region50
              $region55: #{a3c_forward.4} parent=47 // loop_exit
                _
              %s739 = sshrl.u32 %s645, 5
              %s740 = sand.u32 %s645, 31
              %s741 = smul.u32 %s739, 32
              %s742 = smul.u32 8, %s741
              %s743 = scalar_lea.vmem %s638, %s742 [#allocation2]
              %s744 = smul.u32 8, %s741
              %s745 = scalar_lea.vmem %s649, %s744
              // While loop
              $region56: #{a3c_forward.4} parent=47 // loop_pre_header
                _
              $region57: #{a3c_forward.4} parent=47 // loop_header
                %s747 = sphi 0, %s749
                %p748 = scmp.ge.s32.totalorder %s747, %s740
                %s752 = sphi 0, %s759
                %s753 = sphi %s743, %s762
                %s754 = sphi %s745, %s763
              $region58: #{a3c_forward.4} parent=47 // loop_header_branch
                %751 = sbr.rel (%p748) target = $region62
              $region59: #{a3c_forward.4} parent=47 // loop_body
                %v755 = vld [vmem:[%s753] sm:$0xff]
                %756 = vst [vmem:[%s754] sm:$0xff] %v755
                %s757 = sadd.s32 1, %s752
                %p758 = scmp.ge.s32.totalorder %s757, %s740
                %s759 = scalar_select %p758, 0, %s757
                %s760 = smul.u32 %s759, 8
                %s761 = smul.u32 %s759, 8
                %s762 = scalar_lea.vmem %s743, %s760 [#allocation2]
                %s763 = scalar_lea.vmem %s745, %s761
              $region60: #{a3c_forward.4} parent=47 // loop_footer
                %s749 = sadd.s32 %s747, 1
              $region61: #{a3c_forward.4} parent=47 // loop_footer_branch
                %746 = sbr.rel target = $region57
              $region62: #{a3c_forward.4} parent=47 // loop_exit
                _
            $region48: #{a3c_forward.4} parent=39 // pred_fallthru
              _
          $region40: #{a3c_forward.4} parent=35 // pred_fallthru
            _
          %874 = vnop
        $region36: #{a3c_forward.4} parent=31 // pred_fallthru
          _
      $region32: #{a3c_forward.4} parent=5 // pred_fallthru
        _
      %p875 = scmp.le.s32.totalorder 2, %s9
      // Predicated region
      $region85: #{a3c_forward.4} parent=5 // pred_check
        %p876 = pneg %p875
      $region86: #{a3c_forward.4} parent=5 // pred_check_branch
        %878 = sbr.rel (%p876) target = $region88
      $region87: #{a3c_forward.4} parent=5 // pred_region
        %s879 = ssub.s32 %s9, 2
        // Predicated region
        $region89: #{a3c_forward.4} parent=87 // pred_check
          %p880 = pneg %p106
        $region90: #{a3c_forward.4} parent=87 // pred_check_branch
          %882 = sbr.rel (%p880) target = $region92
        $region91: #{a3c_forward.4} parent=87 // pred_region
          %s883 = sand.u32 %s91, 1
          %s884 = sand.u32 %s91, 1
          %s885 = smul.addr %s884, 256
          %s886 = scalar_lea.vmem [#allocation2], %s885
        $region92: #{a3c_forward.4} parent=87 // pred_fallthru
          _
      $region88: #{a3c_forward.4} parent=5 // pred_fallthru
        _
    $region6: #{a3c_forward.4} parent=1 // loop_footer
      %s13 = sadd.s32 1, %s9
    $region7: #{a3c_forward.4} parent=1 // loop_footer_branch
      %8 = sbr.rel target = $region3
    $region8: #{a3c_forward.4} parent=1 // loop_exit
      _

// kernel: a3c_forward.5
$region0: #{a3c_forward.5}
  #allocation0 [shape = 'u32[]', space=smem, size = 0x4, offset = 0x4, fixed_abs, tag = 'smem constant byte address 0x4 - core index']
  #allocation1 [shape = 'u32[144,128]{1,0:T(1,128)}', space=vmem, size = 0x12000, scoped, tag = 'internal scratch']
  %s0 = inlined_call_operand.vmem [shape: f32[338,800], index: 0, kind: input, shape index: {}]
  %s1 = inlined_call_operand.vmem [shape: f32[800,64], index: 1, kind: input, shape index: {}]
  %s2 = inlined_call_operand.vmem [shape: f32[1,64], index: 2, kind: input, shape index: {}]
  %s3 = inlined_call_operand.vmem [shape: f32[338,64], index: 3, kind: output, shape index: {}]
  %s4 = sld [smem:[#allocation0]]
  $region93: #{a3c_forward.5} parent=0
    _
  %s6 = ssub.s32 1, %s4
  %s7 = scalar_select 0, %s6, %s4
  $region1: #{a3c_forward.5} parent=0
    #allocation2 [shape = 'u8[262144]{0}', space=vmem, size = 0x40000, scoped, tag = 'output window, operand 0']
    loop: start=0, step=1, limit=4
    $region2: #{a3c_forward.5} parent=1 // loop_pre_header
      _
    $region3: #{a3c_forward.5} parent=1 // loop_header
      %s9 = sphi 0, %s13
      %p10 = scmp.ge.s32.totalorder %s9, 4
      %s19 = sphi 0, %s21
      %s22 = sphi 0, %s19
      %s23 = sphi 0, %s22
      %s39 = sphi 0, %s23
      %s43 = sphi 0, %s43
      %s45 = sphi 0, %s43
      %s46 = sphi 0, %s45
      %s60 = sphi 0, %s46
      %s64 = sphi 0, %s64
      %s66 = sphi 0, %s64
      %s67 = sphi 0, %s66
      %s81 = sphi 0, %s67
      %s87 = sphi 0, %s89
      %s90 = sphi 0, %s87
      %s91 = sphi 0, %s90
      %s107 = sphi 0, %s91
    $region4: #{a3c_forward.5} parent=1 // loop_header_branch
      %12 = sbr.rel (%p10) target = $region8
    $region5: #{a3c_forward.5} parent=1 // loop_body
      %s14 = ssub.s32 %s9, 1
      %s15 = ssub.s32 %s9, 2
      %s16 = sadd.s32 %s9, 1
      %s17 = ssub.s32 %s9, %s16
      %p18 = scmp.eq.s32.totalorder %s17, 0
      %s20 = sadd.s32 %s19, 1
      %s21 = scalar_select %p18, %s19, %s20
      %p24 = pneg %p18
      %p25 = scmp.eq.s32.totalorder %s9, 1
      %p26 = por %p24, %p25
      %p27 = scmp.ne.s32.totalorder %s19, %s22
      %p28 = scmp.eq.s32.totalorder %s9, 0
      %p29 = por %p27, %p28
      %p30 = scmp.ne.s32.totalorder %s19, %s22
      %p31 = scmp.eq.s32.totalorder %s14, 1
      %p32 = por %p30, %p31
      %p33 = scmp.ne.s32.totalorder %s22, %s23
      %p34 = scmp.eq.s32.totalorder %s14, 0
      %p35 = por %p33, %p34
      %p36 = scmp.ne.s32.totalorder %s22, %s23
      %p37 = scmp.eq.s32.totalorder %s15, 1
      %p38 = por %p36, %p37
      %p40 = scmp.ne.s32.totalorder %s23, %s39
      %p41 = scmp.eq.s32.totalorder %s15, 0
      %p42 = por %p40, %p41
      %s44 = sadd.s32 %s43, 1
      %p47 = scmp.eq.s32.totalorder %s9, 1
      %p48 = scmp.ne.s32.totalorder %s43, %s45
      %p49 = scmp.eq.s32.totalorder %s9, 0
      %p50 = por %p48, %p49
      %p51 = scmp.ne.s32.totalorder %s43, %s45
      %p52 = scmp.eq.s32.totalorder %s14, 1
      %p53 = por %p51, %p52
      %p54 = scmp.ne.s32.totalorder %s45, %s46
      %p55 = scmp.eq.s32.totalorder %s14, 0
      %p56 = por %p54, %p55
      %p57 = scmp.ne.s32.totalorder %s45, %s46
      %p58 = scmp.eq.s32.totalorder %s15, 1
      %p59 = por %p57, %p58
      %p61 = scmp.ne.s32.totalorder %s46, %s60
      %p62 = scmp.eq.s32.totalorder %s15, 0
      %p63 = por %p61, %p62
      %s65 = sadd.s32 %s64, 1
      %p68 = scmp.eq.s32.totalorder %s9, 1
      %p69 = scmp.ne.s32.totalorder %s64, %s66
      %p70 = scmp.eq.s32.totalorder %s9, 0
      %p71 = por %p69, %p70
      %p72 = scmp.ne.s32.totalorder %s64, %s66
      %p73 = scmp.eq.s32.totalorder %s14, 1
      %p74 = por %p72, %p73
      %p75 = scmp.ne.s32.totalorder %s66, %s67
      %p76 = scmp.eq.s32.totalorder %s14, 0
      %p77 = por %p75, %p76
      %p78 = scmp.ne.s32.totalorder %s66, %s67
      %p79 = scmp.eq.s32.totalorder %s15, 1
      %p80 = por %p78, %p79
      %p82 = scmp.ne.s32.totalorder %s67, %s81
      %p83 = scmp.eq.s32.totalorder %s15, 0
      %p84 = por %p82, %p83
      %s85 = ssub.s32 %s9, %s16
      %p86 = scmp.eq.s32.totalorder %s85, 0
      %s88 = sadd.s32 %s87, 1
      %s89 = scalar_select %p86, %s87, %s88
      %p92 = pneg %p86
      %p93 = scmp.eq.s32.totalorder %s9, 1
      %p94 = por %p92, %p93
      %p95 = scmp.ne.s32.totalorder %s87, %s90
      %p96 = scmp.eq.s32.totalorder %s9, 0
      %p97 = por %p95, %p96
      %p98 = scmp.ne.s32.totalorder %s87, %s90
      %p99 = scmp.eq.s32.totalorder %s14, 1
      %p100 = por %p98, %p99
      %p101 = scmp.ne.s32.totalorder %s90, %s91
      %p102 = scmp.eq.s32.totalorder %s14, 0
      %p103 = por %p101, %p102
      %p104 = scmp.ne.s32.totalorder %s90, %s91
      %p105 = scmp.eq.s32.totalorder %s15, 1
      %p106 = por %p104, %p105
      %p108 = scmp.ne.s32.totalorder %s91, %s107
      %p109 = scmp.eq.s32.totalorder %s15, 0
      %p110 = por %p108, %p109
      %p111 = scmp.le.s32.totalorder 1, %s9
      %p112 = scmp.lt.s32.totalorder %s9, 3
      %p113 = pnand %p111, %p112
      %p114 = pneg %p113
      // Predicated region
      $region9: #{a3c_forward.5} parent=5 // pred_check
        _
      $region10: #{a3c_forward.5} parent=5 // pred_check_branch
        %116 = sbr.rel (%p113) target = $region12
      $region11: #{a3c_forward.5} parent=5 // pred_region
        %s117 = ssub.s32 %s9, 1
        // Predicated region
        $region13: #{a3c_forward.5} parent=11 // pred_check
          %p118 = pneg %p56
        $region14: #{a3c_forward.5} parent=11 // pred_check_branch
          %120 = sbr.rel (%p118) target = $region16
        $region15: #{a3c_forward.5} parent=11 // pred_region
          _
        $region16: #{a3c_forward.5} parent=11 // pred_fallthru
          _
        // Predicated region
        $region17: #{a3c_forward.5} parent=11 // pred_check
          %p121 = pneg %p77
        $region18: #{a3c_forward.5} parent=11 // pred_check_branch
          %123 = sbr.rel (%p121) target = $region20
        $region19: #{a3c_forward.5} parent=11 // pred_region
          _
        $region20: #{a3c_forward.5} parent=11 // pred_fallthru
          _
      $region12: #{a3c_forward.5} parent=5 // pred_fallthru
        _
      %p124 = scmp.lt.s32.totalorder %s9, 2
      // Predicated region
      $region21: #{a3c_forward.5} parent=5 // pred_check
        %p125 = pneg %p124
      $region22: #{a3c_forward.5} parent=5 // pred_check_branch
        %127 = sbr.rel (%p125) target = $region24
      $region23: #{a3c_forward.5} parent=5 // pred_region
        // Predicated region
        $region25: #{a3c_forward.5} parent=23 // pred_check
          %p128 = pneg %p29
        $region26: #{a3c_forward.5} parent=23 // pred_check_branch
          %130 = sbr.rel (%p128) target = $region28
        $region27: #{a3c_forward.5} parent=23 // pred_region
          %s131 = smul.u32 32, %s9
          %s132 = ssub.s32 43, %s131
          %p133 = scmp.lt.s32.totalorder %s132, 32
          %s134 = scalar_select %p133, %s132, 32
          %s135 = smul.u32 128, %s134
          %s136 = smul.u32 %s135, 7
          %p137 = scmp.lt.s32.totalorder %s131, 42
          %s138 = scalar_select %p137, %s131, 42
          %s139 = smul.addr %s138, 7
          %s140 = smul.addr %s139, 8
          %s141 = scalar_lea.vmem %s0, %s140
          %s142 = smul.u32 32, %s9
          %s143 = ssub.s32 43, %s142
          %p144 = scmp.lt.s32.totalorder %s143, 32
          %s145 = scalar_select %p144, %s143, 32
          %s146 = smul.u32 128, %s145
          %s147 = smul.u32 %s146, 7
        $region28: #{a3c_forward.5} parent=23 // pred_fallthru
          _
      $region24: #{a3c_forward.5} parent=5 // pred_fallthru
        _
      %p148 = scmp.le.s32.totalorder 1, %s9
      %p149 = scmp.lt.s32.totalorder %s9, 3
      %p150 = pnand %p148, %p149
      %p151 = pneg %p150
      // Predicated region
      $region29: #{a3c_forward.5} parent=5 // pred_check
        _
      $region30: #{a3c_forward.5} parent=5 // pred_check_branch
        %153 = sbr.rel (%p150) target = $region32
      $region31: #{a3c_forward.5} parent=5 // pred_region
        %s154 = ssub.s32 %s9, 1
        %s155 = smul.u32 32, %s14
        %s156 = ssub.s32 43, %s155
        %p157 = scmp.lt.s32.totalorder %s156, 32
        %s158 = scalar_select %p157, %s156, 32
        %s159 = smul.u32 128, %s158
        %s160 = smul.u32 %s159, 7
        %p161 = scmp.lt.s32.totalorder %s155, 42
        %s162 = scalar_select %p161, %s155, 42
        %s163 = smul.addr %s162, 7
        %s164 = smul.addr %s163, 8
        %s165 = scalar_lea.vmem %s0, %s164
        %p166 = pneg %p35
        %p167 = pneg %p32
        %p168 = pneg %p56
        %p169 = pneg %p53
        %p170 = pneg %p77
        %p171 = pneg %p74
        %p172 = pneg %p103
        %p173 = pneg %p100
        %s174 = sand.u32 %s90, 1
        %s175 = sand.u32 %s90, 1
        %s176 = smul.addr %s175, 256
        %s177 = scalar_lea.vmem [#allocation2], %s176
        %s178 = smul.u32 32, %s14
        %s179 = ssub.s32 43, %s178
        %p180 = scmp.lt.s32.totalorder %s179, 32
        %s181 = scalar_select %p180, %s179, 32
        %s182 = smul.u32 128, %s181
        %s183 = smul.u32 %s182, 7
        %p184 = scmp.lt.s32.totalorder %s178, 42
        %s185 = scalar_select %p184, %s178, 42
        %s186 = smul.addr %s185, 7
        %s187 = smul.addr %s186, 8
        %s188 = scalar_lea.vmem %s0, %s187
        %s189 = smul.u32 32, %s14
        %s190 = ssub.s32 43, %s189
        %p191 = scmp.lt.s32.totalorder %s190, 32
        %s192 = scalar_select %p191, %s190, 32
        %s193 = smul.u32 128, %s192
        %s194 = smul.u32 %s193, 7
        %s195 = smul.u32 32, %s14
        %s196 = ssub.s32 43, %s195
        %p197 = scmp.lt.s32.totalorder %s196, 32
        %s198 = scalar_select %p197, %s196, 32
        %s199 = smul.u32 128, %s198
        %v200 = vld [vmem:[%s188] sm:$0xff]
        %v201 = vld [vmem:[%s188 + $0x8] sm:$0xff]
        %v202 = vld [vmem:[%s188 + $0x10] sm:$0xff]
        %v203 = vld [vmem:[%s188 + $0x18] sm:$0xff]
        %v204 = vld [vmem:[%s188 + $0x20] sm:$0xff]
        %v205 = vld [vmem:[%s188 + $0x28] sm:$0xff]
        %v206 = vld [vmem:[%s188 + $0x30] sm:$0xff]
        %v207 = vld [vmem:[%s188 + $0x38] sm:$0xff]
        %v208 = vld [vmem:[%s188 + $0x40] sm:$0xff]
        %v209 = vld [vmem:[%s188 + $0x48] sm:$0xff]
        %v210 = vld [vmem:[%s188 + $0x50] sm:$0xff]
        %v211 = vld [vmem:[%s188 + $0x58] sm:$0xff]
        %v212 = vld [vmem:[%s188 + $0x60] sm:$0xff]
        %v213 = vld [vmem:[%s188 + $0x68] sm:$0xff]
        %v214 = vld [vmem:[%s188 + $0x70] sm:$0xff]
        %v215 = vld [vmem:[%s188 + $0x78] sm:$0xff]
        %v216 = vld [vmem:[%s188 + $0x80] sm:$0xff]
        %v217 = vld [vmem:[%s188 + $0x88] sm:$0xff]
        %v218 = vld [vmem:[%s188 + $0x90] sm:$0xff]
        %v219 = vld [vmem:[%s188 + $0x98] sm:$0xff]
        %v220 = vld [vmem:[%s188 + $0xa0] sm:$0xff]
        %v221 = vld [vmem:[%s188 + $0xa8] sm:$0xff]
        %v222 = vld [vmem:[%s188 + $0xb0] sm:$0xff]
        %v223 = vld [vmem:[%s188 + $0xb8] sm:$0xff]
        %v224 = vld [vmem:[%s188 + $0xc0] sm:$0xff]
        %v225 = vld [vmem:[%s188 + $0xc8] sm:$0xff]
        %v226 = vld [vmem:[%s188 + $0xd0] sm:$0xff]
        %v227 = vld [vmem:[%s188 + $0xd8] sm:$0xff]
        %v228 = vld [vmem:[%s188 + $0xe0] sm:$0xff]
        %v229 = vld [vmem:[%s188 + $0xe8] sm:$0xff]
        %v230 = vld [vmem:[%s188 + $0xf0] sm:$0xff]
        %v231 = vld [vmem:[%s188 + $0xf8] sm:$0xff]
        %v232 = vld [vmem:[%s188 + $0x100] sm:$0xff]
        %v233 = vld [vmem:[%s188 + $0x108] sm:$0xff]
        %v234 = vld [vmem:[%s188 + $0x110] sm:$0xff]
        %v235 = vld [vmem:[%s188 + $0x118] sm:$0xff]
        %v236 = vld [vmem:[%s188 + $0x120] sm:$0xff]
        %v237 = vld [vmem:[%s188 + $0x128] sm:$0xff]
        %v238 = vld [vmem:[%s188 + $0x130] sm:$0xff]
        %v239 = vld [vmem:[%s188 + $0x138] sm:$0xff]
        %v240 = vld [vmem:[%s188 + $0x140] sm:$0xff]
        %v241 = vld [vmem:[%s188 + $0x148] sm:$0xff]
        %v242 = vld [vmem:[%s188 + $0x150] sm:$0xff]
        %v243 = vld [vmem:[%s188 + $0x158] sm:$0xff]
        %v244 = vld [vmem:[%s188 + $0x160] sm:$0xff]
        %v245 = vld [vmem:[%s188 + $0x168] sm:$0xff]
        %v246 = vld [vmem:[%s188 + $0x170] sm:$0xff]
        %v247 = vld [vmem:[%s188 + $0x178] sm:$0xff]
        %v248 = vld [vmem:[%s188 + $0x180] sm:$0xff]
        %v249 = vld [vmem:[%s188 + $0x188] sm:$0xff]
        %v250 = vld [vmem:[%s188 + $0x190] sm:$0xff]
        %v251 = vld [vmem:[%s188 + $0x198] sm:$0xff]
        %v252 = vld [vmem:[%s188 + $0x1a0] sm:$0xff]
        %v253 = vld [vmem:[%s188 + $0x1a8] sm:$0xff]
        %v254 = vld [vmem:[%s188 + $0x1b0] sm:$0xff]
        %v255 = vld [vmem:[%s188 + $0x1b8] sm:$0xff]
        %v256 = vld [vmem:[%s188 + $0x1c0] sm:$0xff]
        %v257 = vld [vmem:[%s188 + $0x1c8] sm:$0xff]
        %v258 = vld [vmem:[%s188 + $0x1d0] sm:$0xff]
        %v259 = vld [vmem:[%s188 + $0x1d8] sm:$0xff]
        %v260 = vld [vmem:[%s188 + $0x1e0] sm:$0xff]
        %v261 = vld [vmem:[%s188 + $0x1e8] sm:$0xff]
        %v262 = vld [vmem:[%s188 + $0x1f0] sm:$0xff]
        %v263 = vld [vmem:[%s188 + $0x1f8] sm:$0xff]
        %v264 = vld [vmem:[%s188 + $0x200] sm:$0xff]
        %v265 = vld [vmem:[%s188 + $0x208] sm:$0xff]
        %v266 = vld [vmem:[%s188 + $0x210] sm:$0xff]
        %v267 = vld [vmem:[%s188 + $0x218] sm:$0xff]
        %v268 = vld [vmem:[%s188 + $0x220] sm:$0xff]
        %v269 = vld [vmem:[%s188 + $0x228] sm:$0xff]
        %v270 = vld [vmem:[%s188 + $0x230] sm:$0xff]
        %v271 = vld [vmem:[%s188 + $0x238] sm:$0xff]
        %v272 = vld [vmem:[%s188 + $0x240] sm:$0xff]
        %v273 = vld [vmem:[%s188 + $0x248] sm:$0xff]
        %v274 = vld [vmem:[%s188 + $0x250] sm:$0xff]
        %v275 = vld [vmem:[%s188 + $0x258] sm:$0xff]
        %v276 = vld [vmem:[%s188 + $0x260] sm:$0xff]
        %v277 = vld [vmem:[%s188 + $0x268] sm:$0xff]
        %v278 = vld [vmem:[%s188 + $0x270] sm:$0xff]
        %v279 = vld [vmem:[%s188 + $0x278] sm:$0xff]
        %v280 = vld [vmem:[%s188 + $0x280] sm:$0xff]
        %v281 = vld [vmem:[%s188 + $0x288] sm:$0xff]
        %v282 = vld [vmem:[%s188 + $0x290] sm:$0xff]
        %v283 = vld [vmem:[%s188 + $0x298] sm:$0xff]
        %v284 = vld [vmem:[%s188 + $0x2a0] sm:$0xff]
        %v285 = vld [vmem:[%s188 + $0x2a8] sm:$0xff]
        %v286 = vld [vmem:[%s188 + $0x2b0] sm:$0xff]
        %v287 = vld [vmem:[%s188 + $0x2b8] sm:$0xff]
        %v288 = vld [vmem:[%s188 + $0x2c0] sm:$0xff]
        %v289 = vld [vmem:[%s188 + $0x2c8] sm:$0xff]
        %v290 = vld [vmem:[%s188 + $0x2d0] sm:$0xff]
        %v291 = vld [vmem:[%s188 + $0x2d8] sm:$0xff]
        %v292 = vld [vmem:[%s188 + $0x2e0] sm:$0xff]
        %v293 = vld [vmem:[%s188 + $0x2e8] sm:$0xff]
        %v294 = vld [vmem:[%s188 + $0x2f0] sm:$0xff]
        %v295 = vld [vmem:[%s188 + $0x2f8] sm:$0xff]
        %v296 = vld [vmem:[%s188 + $0x300] sm:$0xff]
        %v297 = vld [vmem:[%s188 + $0x308] sm:$0xff]
        %v298 = vld [vmem:[%s188 + $0x310] sm:$0xff]
        %v299 = vld [vmem:[%s188 + $0x318] sm:$0xff]
        %v300 = vld [vmem:[%s188 + $0x320] sm:$0xff]
        %v301 = vld [vmem:[%s188 + $0x328] sm:$0xff]
        %v302 = vld [vmem:[%s188 + $0x330] sm:$0xff]
        %v303 = vld [vmem:[%s188 + $0x338] sm:$0xff]
        %v304 = vld [vmem:[%s188 + $0x340] sm:$0xff]
        %v305 = vld [vmem:[%s188 + $0x348] sm:$0xff]
        %v306 = vld [vmem:[%s188 + $0x350] sm:$0xff]
        %v307 = vld [vmem:[%s188 + $0x358] sm:$0xff]
        %v308 = vld [vmem:[%s188 + $0x360] sm:$0xff]
        %v309 = vld [vmem:[%s188 + $0x368] sm:$0xff]
        %v310 = vld [vmem:[%s188 + $0x370] sm:$0xff]
        %v311 = vld [vmem:[%s188 + $0x378] sm:$0xff]
        %v312 = vld [vmem:[%s188 + $0x380] sm:$0xff]
        %v313 = vld [vmem:[%s188 + $0x388] sm:$0xff]
        %v314 = vld [vmem:[%s188 + $0x390] sm:$0xff]
        %v315 = vld [vmem:[%s188 + $0x398] sm:$0xff]
        %v316 = vld [vmem:[%s188 + $0x3a0] sm:$0xff]
        %v317 = vld [vmem:[%s188 + $0x3a8] sm:$0xff]
        %v318 = vld [vmem:[%s188 + $0x3b0] sm:$0xff]
        %v319 = vld [vmem:[%s188 + $0x3b8] sm:$0xff]
        %v320 = vld [vmem:[%s188 + $0x3c0] sm:$0xff]
        %v321 = vld [vmem:[%s188 + $0x3c8] sm:$0xff]
        %v322 = vld [vmem:[%s188 + $0x3d0] sm:$0xff]
        %v323 = vld [vmem:[%s188 + $0x3d8] sm:$0xff]
        %v324 = vld [vmem:[%s188 + $0x3e0] sm:$0xff]
        %v325 = vld [vmem:[%s188 + $0x3e8] sm:$0xff]
        %v326 = vld [vmem:[%s188 + $0x3f0] sm:$0xff]
        %v327 = vld [vmem:[%s188 + $0x3f8] sm:$0xff]
        %v328 = vld [vmem:[%s188 + $0x400] sm:$0xff]
        %v329 = vld [vmem:[%s188 + $0x408] sm:$0xff]
        %v330 = vld [vmem:[%s188 + $0x410] sm:$0xff]
        %v331 = vld [vmem:[%s188 + $0x418] sm:$0xff]
        %v332 = vld [vmem:[%s188 + $0x420] sm:$0xff]
        %v333 = vld [vmem:[%s188 + $0x428] sm:$0xff]
        %v334 = vld [vmem:[%s188 + $0x430] sm:$0xff]
        %v335 = vld [vmem:[%s188 + $0x438] sm:$0xff]
        %v336 = vld [vmem:[%s188 + $0x440] sm:$0xff]
        %v337 = vld [vmem:[%s188 + $0x448] sm:$0xff]
        %v338 = vld [vmem:[%s188 + $0x450] sm:$0xff]
        %v339 = vld [vmem:[%s188 + $0x458] sm:$0xff]
        %v340 = vld [vmem:[%s188 + $0x460] sm:$0xff]
        %v341 = vld [vmem:[%s188 + $0x468] sm:$0xff]
        %v342 = vld [vmem:[%s188 + $0x470] sm:$0xff]
        %v343 = vld [vmem:[%s188 + $0x478] sm:$0xff]
        %v344 = vld [vmem:[%s188 + $0x480] sm:$0xff]
        %v345 = vld [vmem:[%s188 + $0x488] sm:$0xff]
        %v346 = vld [vmem:[%s188 + $0x490] sm:$0xff]
        %v347 = vld [vmem:[%s188 + $0x498] sm:$0xff]
        %v348 = vld [vmem:[%s188 + $0x4a0] sm:$0xff]
        %v349 = vld [vmem:[%s188 + $0x4a8] sm:$0xff]
        %v350 = vld [vmem:[%s188 + $0x4b0] sm:$0xff]
        %v351 = vld [vmem:[%s188 + $0x4b8] sm:$0xff]
        %v352 = vld [vmem:[%s188 + $0x4c0] sm:$0xff]
        %v353 = vld [vmem:[%s188 + $0x4c8] sm:$0xff]
        %v354 = vld [vmem:[%s188 + $0x4d0] sm:$0xff]
        %v355 = vld [vmem:[%s188 + $0x4d8] sm:$0xff]
        %v356 = vld [vmem:[%s188 + $0x4e0] sm:$0xff]
        %v357 = vld [vmem:[%s188 + $0x4e8] sm:$0xff]
        %v358 = vld [vmem:[%s188 + $0x4f0] sm:$0xff]
        %v359 = vld [vmem:[%s188 + $0x4f8] sm:$0xff]
        %v360 = vld [vmem:[%s188 + $0x500] sm:$0xff]
        %v361 = vld [vmem:[%s188 + $0x508] sm:$0xff]
        %v362 = vld [vmem:[%s188 + $0x510] sm:$0xff]
        %v363 = vld [vmem:[%s188 + $0x518] sm:$0xff]
        %v364 = vld [vmem:[%s188 + $0x520] sm:$0xff]
        %v365 = vld [vmem:[%s188 + $0x528] sm:$0xff]
        %v366 = vld [vmem:[%s188 + $0x530] sm:$0xff]
        %v367 = vld [vmem:[%s188 + $0x538] sm:$0xff]
        %v368 = vld [vmem:[%s188 + $0x540] sm:$0xff]
        %v369 = vld [vmem:[%s188 + $0x548] sm:$0xff]
        %v370 = vld [vmem:[%s188 + $0x550] sm:$0xff]
        %v371 = vld [vmem:[%s188 + $0x558] sm:$0xff]
        %v372 = vld [vmem:[%s188 + $0x560] sm:$0xff]
        %v373 = vld [vmem:[%s188 + $0x568] sm:$0xff]
        %v374 = vld [vmem:[%s188 + $0x570] sm:$0xff]
        %v375 = vld [vmem:[%s188 + $0x578] sm:$0xff]
        %v376 = vld [vmem:[%s188 + $0x580] sm:$0xff]
        %v377 = vld [vmem:[%s188 + $0x588] sm:$0xff]
        %v378 = vld [vmem:[%s188 + $0x590] sm:$0xff]
        %v379 = vld [vmem:[%s188 + $0x598] sm:$0xff]
        %v380 = vld [vmem:[%s188 + $0x5a0] sm:$0xff]
        %v381 = vld [vmem:[%s188 + $0x5a8] sm:$0xff]
        %v382 = vld [vmem:[%s188 + $0x5b0] sm:$0xff]
        %v383 = vld [vmem:[%s188 + $0x5b8] sm:$0xff]
        %v384 = vld [vmem:[%s188 + $0x5c0] sm:$0xff]
        %v385 = vld [vmem:[%s188 + $0x5c8] sm:$0xff]
        %v386 = vld [vmem:[%s188 + $0x5d0] sm:$0xff]
        %v387 = vld [vmem:[%s188 + $0x5d8] sm:$0xff]
        %v388 = vld [vmem:[%s188 + $0x5e0] sm:$0xff]
        %v389 = vld [vmem:[%s188 + $0x5e8] sm:$0xff]
        %v390 = vld [vmem:[%s188 + $0x5f0] sm:$0xff]
        %v391 = vld [vmem:[%s188 + $0x5f8] sm:$0xff]
        %v392 = vld [vmem:[%s188 + $0x600] sm:$0xff]
        %v393 = vld [vmem:[%s188 + $0x608] sm:$0xff]
        %v394 = vld [vmem:[%s188 + $0x610] sm:$0xff]
        %v395 = vld [vmem:[%s188 + $0x618] sm:$0xff]
        %v396 = vld [vmem:[%s188 + $0x620] sm:$0xff]
        %v397 = vld [vmem:[%s188 + $0x628] sm:$0xff]
        %v398 = vld [vmem:[%s188 + $0x630] sm:$0xff]
        %v399 = vld [vmem:[%s188 + $0x638] sm:$0xff]
        %v400 = vld [vmem:[%s188 + $0x640] sm:$0xff]
        %v401 = vld [vmem:[%s188 + $0x648] sm:$0xff]
        %v402 = vld [vmem:[%s188 + $0x650] sm:$0xff]
        %v403 = vld [vmem:[%s188 + $0x658] sm:$0xff]
        %v404 = vld [vmem:[%s188 + $0x660] sm:$0xff]
        %v405 = vld [vmem:[%s188 + $0x668] sm:$0xff]
        %v406 = vld [vmem:[%s188 + $0x670] sm:$0xff]
        %v407 = vld [vmem:[%s188 + $0x678] sm:$0xff]
        %v408 = vld [vmem:[%s188 + $0x680] sm:$0xff]
        %v409 = vld [vmem:[%s188 + $0x688] sm:$0xff]
        %v410 = vld [vmem:[%s188 + $0x690] sm:$0xff]
        %v411 = vld [vmem:[%s188 + $0x698] sm:$0xff]
        %v412 = vld [vmem:[%s188 + $0x6a0] sm:$0xff]
        %v413 = vld [vmem:[%s188 + $0x6a8] sm:$0xff]
        %v414 = vld [vmem:[%s188 + $0x6b0] sm:$0xff]
        %v415 = vld [vmem:[%s188 + $0x6b8] sm:$0xff]
        %v416 = vld [vmem:[%s188 + $0x6c0] sm:$0xff]
        %v417 = vld [vmem:[%s188 + $0x6c8] sm:$0xff]
        %v418 = vld [vmem:[%s188 + $0x6d0] sm:$0xff]
        %v419 = vld [vmem:[%s188 + $0x6d8] sm:$0xff]
        %v420 = vld [vmem:[%s188 + $0x6e0] sm:$0xff]
        %v421 = vld [vmem:[%s188 + $0x6e8] sm:$0xff]
        %v422 = vld [vmem:[%s188 + $0x6f0] sm:$0xff]
        %v423 = vld [vmem:[%s188 + $0x6f8] sm:$0xff]
        %v424 = vld [vmem:[%s1] sm:$0xff]
        %v425 = vld [vmem:[%s1 + $0x8] sm:$0xff]
        %v426 = vld [vmem:[%s1 + $0x10] sm:$0xff]
        %v427 = vld [vmem:[%s1 + $0x18] sm:$0xff]
        %v428 = vld [vmem:[%s1 + $0x20] sm:$0xff]
        %v429 = vld [vmem:[%s1 + $0x28] sm:$0xff]
        %v430 = vld [vmem:[%s1 + $0x30] sm:$0xff]
        %v431 = vld [vmem:[%s1 + $0x38] sm:$0xff]
        %v432 = vld [vmem:[%s1 + $0x40] sm:$0xff]
        %v433 = vld [vmem:[%s1 + $0x48] sm:$0xff]
        %v434 = vld [vmem:[%s1 + $0x50] sm:$0xff]
        %v435 = vld [vmem:[%s1 + $0x58] sm:$0xff]
        %v436 = vld [vmem:[%s1 + $0x60] sm:$0xff]
        %v437 = vld [vmem:[%s1 + $0x68] sm:$0xff]
        %v438 = vld [vmem:[%s1 + $0x70] sm:$0xff]
        %v439 = vld [vmem:[%s1 + $0x78] sm:$0xff]
        %v440 = vld [vmem:[%s1 + $0x80] sm:$0xff]
        %v441 = vld [vmem:[%s1 + $0x88] sm:$0xff]
        %v442 = vld [vmem:[%s1 + $0x90] sm:$0xff]
        %v443 = vld [vmem:[%s1 + $0x98] sm:$0xff]
        %v444 = vld [vmem:[%s1 + $0xa0] sm:$0xff]
        %v445 = vld [vmem:[%s1 + $0xa8] sm:$0xff]
        %v446 = vld [vmem:[%s1 + $0xb0] sm:$0xff]
        %v447 = vld [vmem:[%s1 + $0xb8] sm:$0xff]
        %v448 = vld [vmem:[%s1 + $0xc0] sm:$0xff]
        %v449 = vld [vmem:[%s1 + $0xc8] sm:$0xff]
        %v450 = vld [vmem:[%s1 + $0xd0] sm:$0xff]
        %v451 = vld [vmem:[%s1 + $0xd8] sm:$0xff]
        %v452 = vld [vmem:[%s1 + $0xe0] sm:$0xff]
        %v453 = vld [vmem:[%s1 + $0xe8] sm:$0xff]
        %v454 = vld [vmem:[%s1 + $0xf0] sm:$0xff]
        %v455 = vld [vmem:[%s1 + $0xf8] sm:$0xff]
        %v456 = vld [vmem:[%s1 + $0x100] sm:$0xff]
        %v457 = vld [vmem:[%s1 + $0x108] sm:$0xff]
        %v458 = vld [vmem:[%s1 + $0x110] sm:$0xff]
        %v459 = vld [vmem:[%s1 + $0x118] sm:$0xff]
        %v460 = vld [vmem:[%s1 + $0x120] sm:$0xff]
        %v461 = vld [vmem:[%s1 + $0x128] sm:$0xff]
        %v462 = vld [vmem:[%s1 + $0x130] sm:$0xff]
        %v463 = vld [vmem:[%s1 + $0x138] sm:$0xff]
        %v464 = vld [vmem:[%s1 + $0x140] sm:$0xff]
        %v465 = vld [vmem:[%s1 + $0x148] sm:$0xff]
        %v466 = vld [vmem:[%s1 + $0x150] sm:$0xff]
        %v467 = vld [vmem:[%s1 + $0x158] sm:$0xff]
        %v468 = vld [vmem:[%s1 + $0x160] sm:$0xff]
        %v469 = vld [vmem:[%s1 + $0x168] sm:$0xff]
        %v470 = vld [vmem:[%s1 + $0x170] sm:$0xff]
        %v471 = vld [vmem:[%s1 + $0x178] sm:$0xff]
        %v472 = vld [vmem:[%s1 + $0x180] sm:$0xff]
        %v473 = vld [vmem:[%s1 + $0x188] sm:$0xff]
        %v474 = vld [vmem:[%s1 + $0x190] sm:$0xff]
        %v475 = vld [vmem:[%s1 + $0x198] sm:$0xff]
        %v476 = vld [vmem:[%s1 + $0x1a0] sm:$0xff]
        %v477 = vld [vmem:[%s1 + $0x1a8] sm:$0xff]
        %v478 = vld [vmem:[%s1 + $0x1b0] sm:$0xff]
        %v479 = vld [vmem:[%s1 + $0x1b8] sm:$0xff]
        %v480 = vld [vmem:[%s1 + $0x1c0] sm:$0xff]
        %v481 = vld [vmem:[%s1 + $0x1c8] sm:$0xff]
        %v482 = vld [vmem:[%s1 + $0x1d0] sm:$0xff]
        %v483 = vld [vmem:[%s1 + $0x1d8] sm:$0xff]
        %v484 = vld [vmem:[%s1 + $0x1e0] sm:$0xff]
        %v485 = vld [vmem:[%s1 + $0x1e8] sm:$0xff]
        %v486 = vld [vmem:[%s1 + $0x1f0] sm:$0xff]
        %v487 = vld [vmem:[%s1 + $0x1f8] sm:$0xff]
        %v488 = vld [vmem:[%s1 + $0x200] sm:$0xff]
        %v489 = vld [vmem:[%s1 + $0x208] sm:$0xff]
        %v490 = vld [vmem:[%s1 + $0x210] sm:$0xff]
        %v491 = vld [vmem:[%s1 + $0x218] sm:$0xff]
        %v492 = vld [vmem:[%s1 + $0x220] sm:$0xff]
        %v493 = vld [vmem:[%s1 + $0x228] sm:$0xff]
        %v494 = vld [vmem:[%s1 + $0x230] sm:$0xff]
        %v495 = vld [vmem:[%s1 + $0x238] sm:$0xff]
        %v496 = vld [vmem:[%s1 + $0x240] sm:$0xff]
        %v497 = vld [vmem:[%s1 + $0x248] sm:$0xff]
        %v498 = vld [vmem:[%s1 + $0x250] sm:$0xff]
        %v499 = vld [vmem:[%s1 + $0x258] sm:$0xff]
        %v500 = vld [vmem:[%s1 + $0x260] sm:$0xff]
        %v501 = vld [vmem:[%s1 + $0x268] sm:$0xff]
        %v502 = vld [vmem:[%s1 + $0x270] sm:$0xff]
        %v503 = vld [vmem:[%s1 + $0x278] sm:$0xff]
        %v504 = vld [vmem:[%s1 + $0x280] sm:$0xff]
        %v505 = vld [vmem:[%s1 + $0x288] sm:$0xff]
        %v506 = vld [vmem:[%s1 + $0x290] sm:$0xff]
        %v507 = vld [vmem:[%s1 + $0x298] sm:$0xff]
        %v508 = vld [vmem:[%s1 + $0x2a0] sm:$0xff]
        %v509 = vld [vmem:[%s1 + $0x2a8] sm:$0xff]
        %v510 = vld [vmem:[%s1 + $0x2b0] sm:$0xff]
        %v511 = vld [vmem:[%s1 + $0x2b8] sm:$0xff]
        %v512 = vld [vmem:[%s1 + $0x2c0] sm:$0xff]
        %v513 = vld [vmem:[%s1 + $0x2c8] sm:$0xff]
        %v514 = vld [vmem:[%s1 + $0x2d0] sm:$0xff]
        %v515 = vld [vmem:[%s1 + $0x2d8] sm:$0xff]
        %v516 = vld [vmem:[%s1 + $0x2e0] sm:$0xff]
        %v517 = vld [vmem:[%s1 + $0x2e8] sm:$0xff]
        %v518 = vld [vmem:[%s1 + $0x2f0] sm:$0xff]
        %v519 = vld [vmem:[%s1 + $0x2f8] sm:$0xff]
        %v520 = vld [vmem:[%s1 + $0x300] sm:$0xff]
        %v521 = vld [vmem:[%s1 + $0x308] sm:$0xff]
        %v522 = vld [vmem:[%s1 + $0x310] sm:$0xff]
        %v523 = vld [vmem:[%s1 + $0x318] sm:$0xff]
        %v524 = vld [vmem:[%s2] sm:$0x1]
        %v526 = vlaneseq
        %v527 = vshrl.u32 %v526, 7
        %v528 = vsub.s32 0, %v527
        %v529 = vrot.slane %v524, %v528
        %vm531 = vcmask 261120
        %v533 = vsel %vm531, %v206, 0
        %v536 = vsel %vm531, %v213, 0
        %v539 = vsel %vm531, %v220, 0
        %v542 = vsel %vm531, %v227, 0
        %v545 = vsel %vm531, %v234, 0
        %v548 = vsel %vm531, %v241, 0
        %v551 = vsel %vm531, %v248, 0
        %v554 = vsel %vm531, %v255, 0
        %v557 = vsel %vm531, %v262, 0
        %v560 = vsel %vm531, %v269, 0
        %v563 = vsel %vm531, %v276, 0
        %v566 = vsel %vm531, %v283, 0
        %v569 = vsel %vm531, %v290, 0
        %v572 = vsel %vm531, %v297, 0
        %v575 = vsel %vm531, %v304, 0
        %v578 = vsel %vm531, %v311, 0
        %v581 = vsel %vm531, %v318, 0
        %v584 = vsel %vm531, %v325, 0
        %v587 = vsel %vm531, %v332, 0
        %v590 = vsel %vm531, %v339, 0
        %v593 = vsel %vm531, %v346, 0
        %v596 = vsel %vm531, %v353, 0
        %v599 = vsel %vm531, %v360, 0
        %v602 = vsel %vm531, %v367, 0
        %v605 = vsel %vm531, %v374, 0
        %v608 = vsel %vm531, %v381, 0
        %v611 = vsel %vm531, %v388, 0
        %v614 = vsel %vm531, %v395, 0
        %v617 = vsel %vm531, %v402, 0
        %v620 = vsel %vm531, %v409, 0
        %v623 = vsel %vm531, %v416, 0
        %v626 = vsel %vm531, %v423, 0
        %628 = vmatprep.subr.mxu0 0.0
        %629 = vmatpush1.msra.mxu0 %v424
        %630 = vmatprep.subr.mxu0 0.0
        %631 = vmatpush1.msra.mxu0 %v425
        %632 = vmatprep.subr.mxu0 0.0
        %633 = vmatpush1.msra.mxu0 %v426
        %634 = vmatprep.subr.mxu0 0.0
        %635 = vmatpush1.msra.mxu0 %v427
        %636 = vmatprep.subr.mxu0 0.0
        %637 = vmatpush1.msra.mxu0 %v428
        %638 = vmatprep.subr.mxu0 0.0
        %639 = vmatpush1.msra.mxu0 %v429
        %640 = vmatprep.subr.mxu0 0.0
        %641 = vmatpush1.msra.mxu0 %v430
        %642 = vmatprep.subr.mxu0 0.0
        %643 = vmatpush1.msra.mxu0 %v431
        %644 = vmatprep.subr.mxu0 0.0
        %645 = vmatpush1.msra.mxu0 %v432
        %646 = vmatprep.subr.mxu0 0.0
        %647 = vmatpush1.msra.mxu0 %v433
        %648 = vmatprep.subr.mxu0 0.0
        %649 = vmatpush1.msra.mxu0 %v434
        %650 = vmatprep.subr.mxu0 0.0
        %651 = vmatpush1.msra.mxu0 %v435
        %652 = vmatprep.subr.mxu0 0.0
        %653 = vmatpush1.msra.mxu0 %v436
        %654 = vmatprep.subr.mxu0 0.0
        %655 = vmatpush1.msra.mxu0 %v437
        %656 = vmatprep.subr.mxu0 0.0
        %657 = vmatpush1.msra.mxu0 %v438
        %658 = vmatprep.subr.mxu0 0.0
        %659 = vmatpush1.msra.mxu0 %v439
        %660 = vmatprep.subr.mxu0 0.0
        %661 = vmatpush1.msra.mxu0 %v440
        %662 = vmatprep.subr.mxu0 0.0
        %663 = vmatpush1.msra.mxu0 %v441
        %664 = vmatprep.subr.mxu0 0.0
        %665 = vmatpush1.msra.mxu0 %v442
        %666 = vmatprep.subr.mxu0 0.0
        %667 = vmatpush1.msra.mxu0 %v443
        %668 = vmatprep.subr.mxu0 0.0
        %669 = vmatpush1.msra.mxu0 %v444
        %670 = vmatprep.subr.mxu0 0.0
        %671 = vmatpush1.msra.mxu0 %v445
        %672 = vmatprep.subr.mxu0 0.0
        %673 = vmatpush1.msra.mxu0 %v446
        %674 = vmatprep.subr.mxu0 0.0
        %675 = vmatpush1.msra.mxu0 %v447
        %676 = vmatprep.subr.mxu0 0.0
        %677 = vmatpush1.msra.mxu0 %v448
        %678 = vmatprep.subr.mxu0 0.0
        %679 = vmatpush1.msra.mxu0 %v449
        %680 = vmatprep.subr.mxu0 0.0
        %681 = vmatpush1.msra.mxu0 %v450
        %682 = vmatprep.subr.mxu0 0.0
        %683 = vmatpush1.msra.mxu0 %v451
        %684 = vmatprep.subr.mxu0 0.0
        %685 = vmatpush1.msra.mxu0 %v452
        %686 = vmatprep.subr.mxu0 0.0
        %687 = vmatpush1.msra.mxu0 %v453
        %688 = vmatprep.subr.mxu0 0.0
        %689 = vmatpush1.msra.mxu0 %v454
        %690 = vmatprep.subr.mxu0 0.0
        %691 = vmatpush1.msra.mxu0 %v455
        %692 = vmatprep.mubr.f32.mxu0 %v201
        %693 = vmatmul.mubr.f32.gmra.mrb[0].mxu0 %v200
        %v694 = vpop.f32.mrb[0].mxu0
        %v695 = vadd.f32 %v529, %v694
        %v696 = vpop.f32.mrb[0].mxu0
        %697 = vmatprep.mubr.f32.mxu0 %v208
        %698 = vmatmul.mubr.f32.gmra.mrb[0].mxu0 %v207
        %v699 = vpop.f32.mrb[0].mxu0
        %v700 = vadd.f32 %v529, %v699
        %v701 = vpop.f32.mrb[0].mxu0
        %702 = vmatprep.mubr.f32.mxu0 %v215
        %703 = vmatmul.mubr.f32.gmra.mrb[0].mxu0 %v214
        %v704 = vpop.f32.mrb[0].mxu0
        %v705 = vadd.f32 %v529, %v704
        %v706 = vpop.f32.mrb[0].mxu0
        %707 = vmatprep.mubr.f32.mxu0 %v222
        %708 = vmatmul.mubr.f32.gmra.mrb[0].mxu0 %v221
        %v709 = vpop.f32.mrb[0].mxu0
        %v710 = vadd.f32 %v529, %v709
        %v711 = vpop.f32.mrb[0].mxu0
        %712 = vmatprep.mubr.f32.mxu0 %v229
        %713 = vmatmul.mubr.f32.gmra.mrb[0].mxu0 %v228
        %v714 = vpop.f32.mrb[0].mxu0
        %v715 = vadd.f32 %v529, %v714
        %v716 = vpop.f32.mrb[0].mxu0
        %717 = vmatprep.mubr.f32.mxu0 %v236
        %718 = vmatmul.mubr.f32.gmra.mrb[0].mxu0 %v235
        %v719 = vpop.f32.mrb[0].mxu0
        %v720 = vadd.f32 %v529, %v719
        %v721 = vpop.f32.mrb[0].mxu0
        %722 = vmatprep.mubr.f32.mxu0 %v243
        %723 = vmatmul.mubr.f32.gmra.mrb[0].mxu0 %v242
        %v724 = vpop.f32.mrb[0].mxu0
        %v725 = vadd.f32 %v529, %v724
        %v726 = vpop.f32.mrb[0].mxu0
        %727 = vmatprep.mubr.f32.mxu0 %v250
        %728 = vmatmul.mubr.f32.gmra.mrb[0].mxu0 %v249
        %v729 = vpop.f32.mrb[0].mxu0
        %v730 = vadd.f32 %v529, %v729
        %v731 = vpop.f32.mrb[0].mxu0
        %732 = vmatprep.mubr.f32.mxu0 %v257
        %733 = vmatmul.mubr.f32.gmra.mrb[0].mxu0 %v256
        %v734 = vpop.f32.mrb[0].mxu0
        %v735 = vadd.f32 %v529, %v734
        %v736 = vpop.f32.mrb[0].mxu0
        %737 = vmatprep.mubr.f32.mxu0 %v264
        %738 = vmatmul.mubr.f32.gmra.mrb[0].mxu0 %v263
        %v739 = vpop.f32.mrb[0].mxu0
        %v740 = vadd.f32 %v529, %v739
        %v741 = vpop.f32.mrb[0].mxu0
        %742 = vmatprep.mubr.f32.mxu0 %v271
        %743 = vmatmul.mubr.f32.gmra.mrb[0].mxu0 %v270
        %v744 = vpop.f32.mrb[0].mxu0
        %v745 = vadd.f32 %v529, %v744
        %v746 = vpop.f32.mrb[0].mxu0
        %747 = vmatprep.mubr.f32.mxu0 %v278
        %748 = vmatmul.mubr.f32.gmra.mrb[0].mxu0 %v277
        %v749 = vpop.f32.mrb[0].mxu0
        %v750 = vadd.f32 %v529, %v749
        %v751 = vpop.f32.mrb[0].mxu0
        %752 = vmatprep.mubr.f32.mxu0 %v285
        %753 = vmatmul.mubr.f32.gmra.mrb[0].mxu0 %v284
        %v754 = vpop.f32.mrb[0].mxu0
        %v755 = vadd.f32 %v529, %v754
        %v756 = vpop.f32.mrb[0].mxu0
        %757 = vmatprep.mubr.f32.mxu0 %v292
        %758 = vmatmul.mubr.f32.gmra.mrb[0].mxu0 %v291
        %v759 = vpop.f32.mrb[0].mxu0
        %v760 = vadd.f32 %v529, %v759
        %v761 = vpop.f32.mrb[0].mxu0
        %762 = vmatprep.mubr.f32.mxu0 %v299
        %763 = vmatmul.mubr.f32.gmra.mrb[0].mxu0 %v298
        %v764 = vpop.f32.mrb[0].mxu0
        %v765 = vadd.f32 %v529, %v764
        %v766 = vpop.f32.mrb[0].mxu0
        %767 = vmatprep.mubr.f32.mxu0 %v306
        %768 = vmatmul.mubr.f32.gmra.mrb[0].mxu0 %v305
        %v769 = vpop.f32.mrb[0].mxu0
        %v770 = vadd.f32 %v529, %v769
        %v771 = vpop.f32.mrb[0].mxu0
        %772 = vmatprep.mubr.f32.mxu0 %v313
        %773 = vmatmul.mubr.f32.gmra.mrb[0].mxu0 %v312
        %v774 = vpop.f32.mrb[0].mxu0
        %v775 = vadd.f32 %v529, %v774
        %v776 = vpop.f32.mrb[0].mxu0
        %777 = vmatprep.mubr.f32.mxu0 %v320
        %778 = vmatmul.mubr.f32.gmra.mrb[0].mxu0 %v319
        %v779 = vpop.f32.mrb[0].mxu0
        %v780 = vadd.f32 %v529, %v779
        %v781 = vpop.f32.mrb[0].mxu0
        %782 = vmatprep.mubr.f32.mxu0 %v327
        %783 = vmatmul.mubr.f32.gmra.mrb[0].mxu0 %v326
        %v784 = vpop.f32.mrb[0].mxu0
        %v785 = vadd.f32 %v529, %v784
        %v786 = vpop.f32.mrb[0].mxu0
        %787 = vmatprep.mubr.f32.mxu0 %v334
        %788 = vmatmul.mubr.f32.gmra.mrb[0].mxu0 %v333
        %v789 = vpop.f32.mrb[0].mxu0
        %v790 = vadd.f32 %v529, %v789
        %v791 = vpop.f32.mrb[0].mxu0
        %792 = vmatprep.mubr.f32.mxu0 %v341
        %793 = vmatmul.mubr.f32.gmra.mrb[0].mxu0 %v340
        %v794 = vpop.f32.mrb[0].mxu0
        %v795 = vadd.f32 %v529, %v794
        %v796 = vpop.f32.mrb[0].mxu0
        %797 = vmatprep.mubr.f32.mxu0 %v348
        %798 = vmatmul.mubr.f32.gmra.mrb[0].mxu0 %v347
        %v799 = vpop.f32.mrb[0].mxu0
        %v800 = vadd.f32 %v529, %v799
        %v801 = vpop.f32.mrb[0].mxu0
        %802 = vmatprep.mubr.f32.mxu0 %v355
        %803 = vmatmul.mubr.f32.gmra.mrb[0].mxu0 %v354
        %v804 = vpop.f32.mrb[0].mxu0
        %v805 = vadd.f32 %v529, %v804
        %v806 = vpop.f32.mrb[0].mxu0
        %807 = vmatprep.mubr.f32.mxu0 %v362
        %808 = vmatmul.mubr.f32.gmra.mrb[0].mxu0 %v361
        %v809 = vpop.f32.mrb[0].mxu0
        %v810 = vadd.f32 %v529, %v809
        %v811 = vpop.f32.mrb[0].mxu0
        %812 = vmatprep.mubr.f32.mxu0 %v369
        %813 = vmatmul.mubr.f32.gmra.mrb[0].mxu0 %v368
        %v814 = vpop.f32.mrb[0].mxu0
        %v815 = vadd.f32 %v529, %v814
        %v816 = vpop.f32.mrb[0].mxu0
        %817 = vmatprep.mubr.f32.mxu0 %v376
        %818 = vmatmul.mubr.f32.gmra.mrb[0].mxu0 %v375
        %v819 = vpop.f32.mrb[0].mxu0
        %v820 = vadd.f32 %v529, %v819
        %v821 = vpop.f32.mrb[0].mxu0
        %822 = vmatprep.mubr.f32.mxu0 %v383
        %823 = vmatmul.mubr.f32.gmra.mrb[0].mxu0 %v382
        %v824 = vpop.f32.mrb[0].mxu0
        %v825 = vadd.f32 %v529, %v824
        %v826 = vpop.f32.mrb[0].mxu0
        %827 = vmatprep.mubr.f32.mxu0 %v390
        %828 = vmatmul.mubr.f32.gmra.mrb[0].mxu0 %v389
        %v829 = vpop.f32.mrb[0].mxu0
        %v830 = vadd.f32 %v529, %v829
        %v831 = vpop.f32.mrb[0].mxu0
        %832 = vmatprep.mubr.f32.mxu0 %v397
        %833 = vmatmul.mubr.f32.gmra.mrb[0].mxu0 %v396
        %v834 = vpop.f32.mrb[0].mxu0
        %v835 = vadd.f32 %v529, %v834
        %v836 = vpop.f32.mrb[0].mxu0
        %837 = vmatprep.mubr.f32.mxu0 %v404
        %838 = vmatmul.mubr.f32.gmra.mrb[0].mxu0 %v403
        %v839 = vpop.f32.mrb[0].mxu0
        %v840 = vadd.f32 %v529, %v839
        %v841 = vpop.f32.mrb[0].mxu0
        %842 = vmatprep.mubr.f32.mxu0 %v411
        %843 = vmatmul.mubr.f32.gmra.mrb[0].mxu0 %v410
        %v844 = vpop.f32.mrb[0].mxu0
        %v845 = vadd.f32 %v529, %v844
        %v846 = vpop.f32.mrb[0].mxu0
        %847 = vmatprep.mubr.f32.mxu0 %v418
        %848 = vmatmul.mubr.f32.gmra.mrb[0].mxu0 %v417
        %v849 = vpop.f32.mrb[0].mxu0
        %v850 = vadd.f32 %v529, %v849
        %v851 = vpop.f32.mrb[0].mxu0
        %852 = vdwg.mxu0
        %853 = vmatprep.subr.mxu0 0.0
        %854 = vmatpush1.msra.mxu0 %v456
        %855 = vmatprep.subr.mxu0 0.0
        %856 = vmatpush1.msra.mxu0 %v457
        %857 = vmatprep.subr.mxu0 0.0
        %858 = vmatpush1.msra.mxu0 %v458
        %859 = vmatprep.subr.mxu0 0.0
        %860 = vmatpush1.msra.mxu0 %v459
        %861 = vmatprep.subr.mxu0 0.0
        %862 = vmatpush1.msra.mxu0 %v460
        %863 = vmatprep.subr.mxu0 0.0
        %864 = vmatpush1.msra.mxu0 %v461
        %865 = vmatprep.subr.mxu0 0.0
        %866 = vmatpush1.msra.mxu0 %v462
        %867 = vmatprep.subr.mxu0 0.0
        %868 = vmatpush1.msra.mxu0 %v463
        %869 = vmatprep.subr.mxu0 0.0
        %870 = vmatpush1.msra.mxu0 %v464
        %871 = vmatprep.subr.mxu0 0.0
        %872 = vmatpush1.msra.mxu0 %v465
        %873 = vmatprep.subr.mxu0 0.0
        %874 = vmatpush1.msra.mxu0 %v466
        %875 = vmatprep.subr.mxu0 0.0
        %876 = vmatpush1.msra.mxu0 %v467
        %877 = vmatprep.subr.mxu0 0.0
        %878 = vmatpush1.msra.mxu0 %v468
        %879 = vmatprep.subr.mxu0 0.0
        %880 = vmatpush1.msra.mxu0 %v469
        %881 = vmatprep.subr.mxu0 0.0
        %882 = vmatpush1.msra.mxu0 %v470
        %883 = vmatprep.subr.mxu0 0.0
        %884 = vmatpush1.msra.mxu0 %v471
        %885 = vmatprep.subr.mxu0 0.0
        %886 = vmatpush1.msra.mxu0 %v472
        %887 = vmatprep.subr.mxu0 0.0
        %888 = vmatpush1.msra.mxu0 %v473
        %889 = vmatprep.subr.mxu0 0.0
        %890 = vmatpush1.msra.mxu0 %v474
        %891 = vmatprep.subr.mxu0 0.0
        %892 = vmatpush1.msra.mxu0 %v475
        %893 = vmatprep.subr.mxu0 0.0
        %894 = vmatpush1.msra.mxu0 %v476
        %895 = vmatprep.subr.mxu0 0.0
        %896 = vmatpush1.msra.mxu0 %v477
        %897 = vmatprep.subr.mxu0 0.0
        %898 = vmatpush1.msra.mxu0 %v478
        %899 = vmatprep.subr.mxu0 0.0
        %900 = vmatpush1.msra.mxu0 %v479
        %901 = vmatprep.subr.mxu0 0.0
        %902 = vmatpush1.msra.mxu0 %v480
        %903 = vmatprep.subr.mxu0 0.0
        %904 = vmatpush1.msra.mxu0 %v481
        %905 = vmatprep.subr.mxu0 0.0
        %906 = vmatpush1.msra.mxu0 %v482
        %907 = vmatprep.subr.mxu0 0.0
        %908 = vmatpush1.msra.mxu0 %v483
        %909 = vmatprep.subr.mxu0 0.0
        %910 = vmatpush1.msra.mxu0 %v484
        %911 = vmatprep.subr.mxu0 0.0
        %912 = vmatpush1.msra.mxu0 %v485
        %913 = vmatprep.subr.mxu0 0.0
        %914 = vmatpush1.msra.mxu0 %v486
        %915 = vmatprep.subr.mxu0 0.0
        %916 = vmatpush1.msra.mxu0 %v487
        %917 = vmatprep.mubr.f32.mxu0 %v203
        %918 = vmatmul.mubr.f32.gmra.mrb[0].mxu0 %v202
        %v919 = vpop.f32.mrb[0].mxu0
        %v920 = vadd.f32 %v695, %v919
        %v921 = vpop.f32.mrb[0].mxu0
        %922 = vmatprep.mubr.f32.mxu0 %v210
        %923 = vmatmul.mubr.f32.gmra.mrb[0].mxu0 %v209
        %v924 = vpop.f32.mrb[0].mxu0
        %v925 = vadd.f32 %v700, %v924
        %v926 = vpop.f32.mrb[0].mxu0
        %927 = vmatprep.mubr.f32.mxu0 %v217
        %928 = vmatmul.mubr.f32.gmra.mrb[0].mxu0 %v216
        %v929 = vpop.f32.mrb[0].mxu0
        %v930 = vadd.f32 %v705, %v929
        %v931 = vpop.f32.mrb[0].mxu0
        %932 = vmatprep.mubr.f32.mxu0 %v224
        %933 = vmatmul.mubr.f32.gmra.mrb[0].mxu0 %v223
        %v934 = vpop.f32.mrb[0].mxu0
        %v935 = vadd.f32 %v710, %v934
        %v936 = vpop.f32.mrb[0].mxu0
        %937 = vmatprep.mubr.f32.mxu0 %v231
        %938 = vmatmul.mubr.f32.gmra.mrb[0].mxu0 %v230
        %v939 = vpop.f32.mrb[0].mxu0
        %v940 = vadd.f32 %v715, %v939
        %v941 = vpop.f32.mrb[0].mxu0
        %942 = vmatprep.mubr.f32.mxu0 %v238
        %943 = vmatmul.mubr.f32.gmra.mrb[0].mxu0 %v237
        %v944 = vpop.f32.mrb[0].mxu0
        %v945 = vadd.f32 %v720, %v944
        %v946 = vpop.f32.mrb[0].mxu0
        %947 = vmatprep.mubr.f32.mxu0 %v245
        %948 = vmatmul.mubr.f32.gmra.mrb[0].mxu0 %v244
        %v949 = vpop.f32.mrb[0].mxu0
        %v950 = vadd.f32 %v725, %v949
        %v951 = vpop.f32.mrb[0].mxu0
        %952 = vmatprep.mubr.f32.mxu0 %v252
        %953 = vmatmul.mubr.f32.gmra.mrb[0].mxu0 %v251
        %v954 = vpop.f32.mrb[0].mxu0
        %v955 = vadd.f32 %v730, %v954
        %v956 = vpop.f32.mrb[0].mxu0
        %957 = vmatprep.mubr.f32.mxu0 %v259
        %958 = vmatmul.mubr.f32.gmra.mrb[0].mxu0 %v258
        %v959 = vpop.f32.mrb[0].mxu0
        %v960 = vadd.f32 %v735, %v959
        %v961 = vpop.f32.mrb[0].mxu0
        %962 = vmatprep.mubr.f32.mxu0 %v266
        %963 = vmatmul.mubr.f32.gmra.mrb[0].mxu0 %v265
        %v964 = vpop.f32.mrb[0].mxu0
        %v965 = vadd.f32 %v740, %v964
        %v966 = vpop.f32.mrb[0].mxu0
        %967 = vmatprep.mubr.f32.mxu0 %v273
        %968 = vmatmul.mubr.f32.gmra.mrb[0].mxu0 %v272
        %v969 = vpop.f32.mrb[0].mxu0
        %v970 = vadd.f32 %v745, %v969
        %v971 = vpop.f32.mrb[0].mxu0
        %972 = vmatprep.mubr.f32.mxu0 %v280
        %973 = vmatmul.mubr.f32.gmra.mrb[0].mxu0 %v279
        %v974 = vpop.f32.mrb[0].mxu0
        %v975 = vadd.f32 %v750, %v974
        %v976 = vpop.f32.mrb[0].mxu0
        %977 = vmatprep.mubr.f32.mxu0 %v287
        %978 = vmatmul.mubr.f32.gmra.mrb[0].mxu0 %v286
        %v979 = vpop.f32.mrb[0].mxu0
        %v980 = vadd.f32 %v755, %v979
        %v981 = vpop.f32.mrb[0].mxu0
        %982 = vmatprep.mubr.f32.mxu0 %v294
        %983 = vmatmul.mubr.f32.gmra.mrb[0].mxu0 %v293
        %v984 = vpop.f32.mrb[0].mxu0
        %v985 = vadd.f32 %v760, %v984
        %v986 = vpop.f32.mrb[0].mxu0
        %987 = vmatprep.mubr.f32.mxu0 %v301
        %988 = vmatmul.mubr.f32.gmra.mrb[0].mxu0 %v300
        %v989 = vpop.f32.mrb[0].mxu0
        %v990 = vadd.f32 %v765, %v989
        %v991 = vpop.f32.mrb[0].mxu0
        %992 = vmatprep.mubr.f32.mxu0 %v308
        %993 = vmatmul.mubr.f32.gmra.mrb[0].mxu0 %v307
        %v994 = vpop.f32.mrb[0].mxu0
        %v995 = vadd.f32 %v770, %v994
        %v996 = vpop.f32.mrb[0].mxu0
        %997 = vmatprep.mubr.f32.mxu0 %v315
        %998 = vmatmul.mubr.f32.gmra.mrb[0].mxu0 %v314
        %v999 = vpop.f32.mrb[0].mxu0
        %v1000 = vadd.f32 %v775, %v999
        %v1001 = vpop.f32.mrb[0].mxu0
        %1002 = vmatprep.mubr.f32.mxu0 %v322
        %1003 = vmatmul.mubr.f32.gmra.mrb[0].mxu0 %v321
        %v1004 = vpop.f32.mrb[0].mxu0
        %v1005 = vadd.f32 %v780, %v1004
        %v1006 = vpop.f32.mrb[0].mxu0
        %1007 = vmatprep.mubr.f32.mxu0 %v329
        %1008 = vmatmul.mubr.f32.gmra.mrb[0].mxu0 %v328
        %v1009 = vpop.f32.mrb[0].mxu0
        %v1010 = vadd.f32 %v785, %v1009
        %v1011 = vpop.f32.mrb[0].mxu0
        %1012 = vmatprep.mubr.f32.mxu0 %v336
        %1013 = vmatmul.mubr.f32.gmra.mrb[0].mxu0 %v335
        %v1014 = vpop.f32.mrb[0].mxu0
        %v1015 = vadd.f32 %v790, %v1014
        %v1016 = vpop.f32.mrb[0].mxu0
        %1017 = vmatprep.mubr.f32.mxu0 %v343
        %1018 = vmatmul.mubr.f32.gmra.mrb[0].mxu0 %v342
        %v1019 = vpop.f32.mrb[0].mxu0
        %v1020 = vadd.f32 %v795, %v1019
        %v1021 = vpop.f32.mrb[0].mxu0
        %1022 = vmatprep.mubr.f32.mxu0 %v350
        %1023 = vmatmul.mubr.f32.gmra.mrb[0].mxu0 %v349
        %v1024 = vpop.f32.mrb[0].mxu0
        %v1025 = vadd.f32 %v800, %v1024
        %v1026 = vpop.f32.mrb[0].mxu0
        %1027 = vmatprep.mubr.f32.mxu0 %v357
        %1028 = vmatmul.mubr.f32.gmra.mrb[0].mxu0 %v356
        %v1029 = vpop.f32.mrb[0].mxu0
        %v1030 = vadd.f32 %v805, %v1029
        %v1031 = vpop.f32.mrb[0].mxu0
        %1032 = vmatprep.mubr.f32.mxu0 %v364
        %1033 = vmatmul.mubr.f32.gmra.mrb[0].mxu0 %v363
        %v1034 = vpop.f32.mrb[0].mxu0
        %v1035 = vadd.f32 %v810, %v1034
        %v1036 = vpop.f32.mrb[0].mxu0
        %1037 = vmatprep.mubr.f32.mxu0 %v371
        %1038 = vmatmul.mubr.f32.gmra.mrb[0].mxu0 %v370
        %v1039 = vpop.f32.mrb[0].mxu0
        %v1040 = vadd.f32 %v815, %v1039
        %v1041 = vpop.f32.mrb[0].mxu0
        %1042 = vmatprep.mubr.f32.mxu0 %v378
        %1043 = vmatmul.mubr.f32.gmra.mrb[0].mxu0 %v377
        %v1044 = vpop.f32.mrb[0].mxu0
        %v1045 = vadd.f32 %v820, %v1044
        %v1046 = vpop.f32.mrb[0].mxu0
        %1047 = vmatprep.mubr.f32.mxu0 %v385
        %1048 = vmatmul.mubr.f32.gmra.mrb[0].mxu0 %v384
        %v1049 = vpop.f32.mrb[0].mxu0
        %v1050 = vadd.f32 %v825, %v1049
        %v1051 = vpop.f32.mrb[0].mxu0
        %1052 = vmatprep.mubr.f32.mxu0 %v392
        %1053 = vmatmul.mubr.f32.gmra.mrb[0].mxu0 %v391
        %v1054 = vpop.f32.mrb[0].mxu0
        %v1055 = vadd.f32 %v830, %v1054
        %v1056 = vpop.f32.mrb[0].mxu0
        %1057 = vmatprep.mubr.f32.mxu0 %v399
        %1058 = vmatmul.mubr.f32.gmra.mrb[0].mxu0 %v398
        %v1059 = vpop.f32.mrb[0].mxu0
        %v1060 = vadd.f32 %v835, %v1059
        %v1061 = vpop.f32.mrb[0].mxu0
        %1062 = vmatprep.mubr.f32.mxu0 %v406
        %1063 = vmatmul.mubr.f32.gmra.mrb[0].mxu0 %v405
        %v1064 = vpop.f32.mrb[0].mxu0
        %v1065 = vadd.f32 %v840, %v1064
        %v1066 = vpop.f32.mrb[0].mxu0
        %1067 = vmatprep.mubr.f32.mxu0 %v413
        %1068 = vmatmul.mubr.f32.gmra.mrb[0].mxu0 %v412
        %v1069 = vpop.f32.mrb[0].mxu0
        %v1070 = vadd.f32 %v845, %v1069
        %v1071 = vpop.f32.mrb[0].mxu0
        %1072 = vmatprep.mubr.f32.mxu0 %v420
        %1073 = vmatmul.mubr.f32.gmra.mrb[0].mxu0 %v419
        %v1074 = vpop.f32.mrb[0].mxu0
        %v1075 = vadd.f32 %v850, %v1074
        %v1076 = vpop.f32.mrb[0].mxu0
        %1077 = vdwg.mxu0
        %1078 = vmatprep.subr.mxu0 0.0
        %1079 = vmatpush1.msra.mxu0 %v488
        %1080 = vmatprep.subr.mxu0 0.0
        %1081 = vmatpush1.msra.mxu0 %v489
        %1082 = vmatprep.subr.mxu0 0.0
        %1083 = vmatpush1.msra.mxu0 %v490
        %1084 = vmatprep.subr.mxu0 0.0
        %1085 = vmatpush1.msra.mxu0 %v491
        %1086 = vmatprep.subr.mxu0 0.0
        %1087 = vmatpush1.msra.mxu0 %v492
        %1088 = vmatprep.subr.mxu0 0.0
        %1089 = vmatpush1.msra.mxu0 %v493
        %1090 = vmatprep.subr.mxu0 0.0
        %1091 = vmatpush1.msra.mxu0 %v494
        %1092 = vmatprep.subr.mxu0 0.0
        %1093 = vmatpush1.msra.mxu0 %v495
        %1094 = vmatprep.subr.mxu0 0.0
        %1095 = vmatpush1.msra.mxu0 %v496
        %1096 = vmatprep.subr.mxu0 0.0
        %1097 = vmatpush1.msra.mxu0 %v497
        %1098 = vmatprep.subr.mxu0 0.0
        %1099 = vmatpush1.msra.mxu0 %v498
        %1100 = vmatprep.subr.mxu0 0.0
        %1101 = vmatpush1.msra.mxu0 %v499
        %1102 = vmatprep.subr.mxu0 0.0
        %1103 = vmatpush1.msra.mxu0 %v500
        %1104 = vmatprep.subr.mxu0 0.0
        %1105 = vmatpush1.msra.mxu0 %v501
        %1106 = vmatprep.subr.mxu0 0.0
        %1107 = vmatpush1.msra.mxu0 %v502
        %1108 = vmatprep.subr.mxu0 0.0
        %1109 = vmatpush1.msra.mxu0 %v503
        %1110 = vmatprep.subr.mxu0 0.0
        %1111 = vmatpush1.msra.mxu0 %v504
        %1112 = vmatprep.subr.mxu0 0.0
        %1113 = vmatpush1.msra.mxu0 %v505
        %1114 = vmatprep.subr.mxu0 0.0
        %1115 = vmatpush1.msra.mxu0 %v506
        %1116 = vmatprep.subr.mxu0 0.0
        %1117 = vmatpush1.msra.mxu0 %v507
        %1118 = vmatprep.subr.mxu0 0.0
        %1119 = vmatpush1.msra.mxu0 %v508
        %1120 = vmatprep.subr.mxu0 0.0
        %1121 = vmatpush1.msra.mxu0 %v509
        %1122 = vmatprep.subr.mxu0 0.0
        %1123 = vmatpush1.msra.mxu0 %v510
        %1124 = vmatprep.subr.mxu0 0.0
        %1125 = vmatpush1.msra.mxu0 %v511
        %1126 = vmatprep.subr.mxu0 0.0
        %1127 = vmatpush1.msra.mxu0 %v512
        %1128 = vmatprep.subr.mxu0 0.0
        %1129 = vmatpush1.msra.mxu0 %v513
        %1130 = vmatprep.subr.mxu0 0.0
        %1131 = vmatpush1.msra.mxu0 %v514
        %1132 = vmatprep.subr.mxu0 0.0
        %1133 = vmatpush1.msra.mxu0 %v515
        %1134 = vmatprep.subr.mxu0 0.0
        %1135 = vmatpush1.msra.mxu0 %v516
        %1136 = vmatprep.subr.mxu0 0.0
        %1137 = vmatpush1.msra.mxu0 %v517
        %1138 = vmatprep.subr.mxu0 0.0
        %1139 = vmatpush1.msra.mxu0 %v518
        %1140 = vmatprep.subr.mxu0 0.0
        %1141 = vmatpush1.msra.mxu0 %v519
        %1142 = vmatprep.mubr.f32.mxu0 %v205
        %1143 = vmatmul.mubr.f32.gmra.mrb[0].mxu0 %v204
        %v1144 = vpop.f32.mrb[0].mxu0
        %v1145 = vadd.f32 %v920, %v1144
        %v1146 = vpop.f32.mrb[0].mxu0
        %1147 = vmatprep.mubr.f32.mxu0 %v212
        %1148 = vmatmul.mubr.f32.gmra.mrb[0].mxu0 %v211
        %v1149 = vpop.f32.mrb[0].mxu0
        %v1150 = vadd.f32 %v925, %v1149
        %v1151 = vpop.f32.mrb[0].mxu0
        %1152 = vmatprep.mubr.f32.mxu0 %v219
        %1153 = vmatmul.mubr.f32.gmra.mrb[0].mxu0 %v218
        %v1154 = vpop.f32.mrb[0].mxu0
        %v1155 = vadd.f32 %v930, %v1154
        %v1156 = vpop.f32.mrb[0].mxu0
        %1157 = vmatprep.mubr.f32.mxu0 %v226
        %1158 = vmatmul.mubr.f32.gmra.mrb[0].mxu0 %v225
        %v1159 = vpop.f32.mrb[0].mxu0
        %v1160 = vadd.f32 %v935, %v1159
        %v1161 = vpop.f32.mrb[0].mxu0
        %1162 = vmatprep.mubr.f32.mxu0 %v233
        %1163 = vmatmul.mubr.f32.gmra.mrb[0].mxu0 %v232
        %v1164 = vpop.f32.mrb[0].mxu0
        %v1165 = vadd.f32 %v940, %v1164
        %v1166 = vpop.f32.mrb[0].mxu0
        %1167 = vmatprep.mubr.f32.mxu0 %v240
        %1168 = vmatmul.mubr.f32.gmra.mrb[0].mxu0 %v239
        %v1169 = vpop.f32.mrb[0].mxu0
        %v1170 = vadd.f32 %v945, %v1169
        %v1171 = vpop.f32.mrb[0].mxu0
        %1172 = vmatprep.mubr.f32.mxu0 %v247
        %1173 = vmatmul.mubr.f32.gmra.mrb[0].mxu0 %v246
        %v1174 = vpop.f32.mrb[0].mxu0
        %v1175 = vadd.f32 %v950, %v1174
        %v1176 = vpop.f32.mrb[0].mxu0
        %1177 = vmatprep.mubr.f32.mxu0 %v254
        %1178 = vmatmul.mubr.f32.gmra.mrb[0].mxu0 %v253
        %v1179 = vpop.f32.mrb[0].mxu0
        %v1180 = vadd.f32 %v955, %v1179
        %v1181 = vpop.f32.mrb[0].mxu0
        %1182 = vmatprep.mubr.f32.mxu0 %v261
        %1183 = vmatmul.mubr.f32.gmra.mrb[0].mxu0 %v260
        %v1184 = vpop.f32.mrb[0].mxu0
        %v1185 = vadd.f32 %v960, %v1184
        %v1186 = vpop.f32.mrb[0].mxu0
        %1187 = vmatprep.mubr.f32.mxu0 %v268
        %1188 = vmatmul.mubr.f32.gmra.mrb[0].mxu0 %v267
        %v1189 = vpop.f32.mrb[0].mxu0
        %v1190 = vadd.f32 %v965, %v1189
        %v1191 = vpop.f32.mrb[0].mxu0
        %1192 = vmatprep.mubr.f32.mxu0 %v275
        %1193 = vmatmul.mubr.f32.gmra.mrb[0].mxu0 %v274
        %v1194 = vpop.f32.mrb[0].mxu0
        %v1195 = vadd.f32 %v970, %v1194
        %v1196 = vpop.f32.mrb[0].mxu0
        %1197 = vmatprep.mubr.f32.mxu0 %v282
        %1198 = vmatmul.mubr.f32.gmra.mrb[0].mxu0 %v281
        %v1199 = vpop.f32.mrb[0].mxu0
        %v1200 = vadd.f32 %v975, %v1199
        %v1201 = vpop.f32.mrb[0].mxu0
        %1202 = vmatprep.mubr.f32.mxu0 %v289
        %1203 = vmatmul.mubr.f32.gmra.mrb[0].mxu0 %v288
        %v1204 = vpop.f32.mrb[0].mxu0
        %v1205 = vadd.f32 %v980, %v1204
        %v1206 = vpop.f32.mrb[0].mxu0
        %1207 = vmatprep.mubr.f32.mxu0 %v296
        %1208 = vmatmul.mubr.f32.gmra.mrb[0].mxu0 %v295
        %v1209 = vpop.f32.mrb[0].mxu0
        %v1210 = vadd.f32 %v985, %v1209
        %v1211 = vpop.f32.mrb[0].mxu0
        %1212 = vmatprep.mubr.f32.mxu0 %v303
        %1213 = vmatmul.mubr.f32.gmra.mrb[0].mxu0 %v302
        %v1214 = vpop.f32.mrb[0].mxu0
        %v1215 = vadd.f32 %v990, %v1214
        %v1216 = vpop.f32.mrb[0].mxu0
        %1217 = vmatprep.mubr.f32.mxu0 %v310
        %1218 = vmatmul.mubr.f32.gmra.mrb[0].mxu0 %v309
        %v1219 = vpop.f32.mrb[0].mxu0
        %v1220 = vadd.f32 %v995, %v1219
        %v1221 = vpop.f32.mrb[0].mxu0
        %1222 = vmatprep.mubr.f32.mxu0 %v317
        %1223 = vmatmul.mubr.f32.gmra.mrb[0].mxu0 %v316
        %v1224 = vpop.f32.mrb[0].mxu0
        %v1225 = vadd.f32 %v1000, %v1224
        %v1226 = vpop.f32.mrb[0].mxu0
        %1227 = vmatprep.mubr.f32.mxu0 %v324
        %1228 = vmatmul.mubr.f32.gmra.mrb[0].mxu0 %v323
        %v1229 = vpop.f32.mrb[0].mxu0
        %v1230 = vadd.f32 %v1005, %v1229
        %v1231 = vpop.f32.mrb[0].mxu0
        %1232 = vmatprep.mubr.f32.mxu0 %v331
        %1233 = vmatmul.mubr.f32.gmra.mrb[0].mxu0 %v330
        %v1234 = vpop.f32.mrb[0].mxu0
        %v1235 = vadd.f32 %v1010, %v1234
        %v1236 = vpop.f32.mrb[0].mxu0
        %1237 = vmatprep.mubr.f32.mxu0 %v338
        %1238 = vmatmul.mubr.f32.gmra.mrb[0].mxu0 %v337
        %v1239 = vpop.f32.mrb[0].mxu0
        %v1240 = vadd.f32 %v1015, %v1239
        %v1241 = vpop.f32.mrb[0].mxu0
        %1242 = vmatprep.mubr.f32.mxu0 %v345
        %1243 = vmatmul.mubr.f32.gmra.mrb[0].mxu0 %v344
        %v1244 = vpop.f32.mrb[0].mxu0
        %v1245 = vadd.f32 %v1020, %v1244
        %v1246 = vpop.f32.mrb[0].mxu0
        %1247 = vmatprep.mubr.f32.mxu0 %v352
        %1248 = vmatmul.mubr.f32.gmra.mrb[0].mxu0 %v351
        %v1249 = vpop.f32.mrb[0].mxu0
        %v1250 = vadd.f32 %v1025, %v1249
        %v1251 = vpop.f32.mrb[0].mxu0
        %1252 = vmatprep.mubr.f32.mxu0 %v359
        %1253 = vmatmul.mubr.f32.gmra.mrb[0].mxu0 %v358
        %v1254 = vpop.f32.mrb[0].mxu0
        %v1255 = vadd.f32 %v1030, %v1254
        %v1256 = vpop.f32.mrb[0].mxu0
        %1257 = vmatprep.mubr.f32.mxu0 %v366
        %1258 = vmatmul.mubr.f32.gmra.mrb[0].mxu0 %v365
        %v1259 = vpop.f32.mrb[0].mxu0
        %v1260 = vadd.f32 %v1035, %v1259
        %v1261 = vpop.f32.mrb[0].mxu0
        %1262 = vmatprep.mubr.f32.mxu0 %v373
        %1263 = vmatmul.mubr.f32.gmra.mrb[0].mxu0 %v372
        %v1264 = vpop.f32.mrb[0].mxu0
        %v1265 = vadd.f32 %v1040, %v1264
        %v1266 = vpop.f32.mrb[0].mxu0
        %1267 = vmatprep.mubr.f32.mxu0 %v380
        %1268 = vmatmul.mubr.f32.gmra.mrb[0].mxu0 %v379
        %v1269 = vpop.f32.mrb[0].mxu0
        %v1270 = vadd.f32 %v1045, %v1269
        %v1271 = vpop.f32.mrb[0].mxu0
        %1272 = vmatprep.mubr.f32.mxu0 %v387
        %1273 = vmatmul.mubr.f32.gmra.mrb[0].mxu0 %v386
        %v1274 = vpop.f32.mrb[0].mxu0
        %v1275 = vadd.f32 %v1050, %v1274
        %v1276 = vpop.f32.mrb[0].mxu0
        %1277 = vmatprep.mubr.f32.mxu0 %v394
        %1278 = vmatmul.mubr.f32.gmra.mrb[0].mxu0 %v393
        %v1279 = vpop.f32.mrb[0].mxu0
        %v1280 = vadd.f32 %v1055, %v1279
        %v1281 = vpop.f32.mrb[0].mxu0
        %1282 = vmatprep.mubr.f32.mxu0 %v401
        %1283 = vmatmul.mubr.f32.gmra.mrb[0].mxu0 %v400
        %v1284 = vpop.f32.mrb[0].mxu0
        %v1285 = vadd.f32 %v1060, %v1284
        %v1286 = vpop.f32.mrb[0].mxu0
        %1287 = vmatprep.mubr.f32.mxu0 %v408
        %1288 = vmatmul.mubr.f32.gmra.mrb[0].mxu0 %v407
        %v1289 = vpop.f32.mrb[0].mxu0
        %v1290 = vadd.f32 %v1065, %v1289
        %v1291 = vpop.f32.mrb[0].mxu0
        %1292 = vmatprep.mubr.f32.mxu0 %v415
        %1293 = vmatmul.mubr.f32.gmra.mrb[0].mxu0 %v414
        %v1294 = vpop.f32.mrb[0].mxu0
        %v1295 = vadd.f32 %v1070, %v1294
        %v1296 = vpop.f32.mrb[0].mxu0
        %1297 = vmatprep.mubr.f32.mxu0 %v422
        %1298 = vmatmul.mubr.f32.gmra.mrb[0].mxu0 %v421
        %v1299 = vpop.f32.mrb[0].mxu0
        %v1300 = vadd.f32 %v1075, %v1299
        %v1301 = vpop.f32.mrb[0].mxu0
        %1302 = vdwg.mxu0
        %1303 = vmatprep.subr.mxu0 0.0
        %1304 = vmatpush1.msra.mxu0 %v520
        %1305 = vmatprep.subr.mxu0 0.0
        %1306 = vmatpush1.msra.mxu0 %v521
        %1307 = vmatprep.subr.mxu0 0.0
        %1308 = vmatpush1.msra.mxu0 %v522
        %1309 = vmatprep.subr.mxu0 0.0
        %1310 = vmatpush1.msra.mxu0 %v523
        %1311 = vmatprep.subr.mxu0 0.0
        %1312 = vmatpush1.msra.mxu0 0.0
        %1313 = vmatprep.subr.mxu0 0.0
        %1314 = vmatpush1.msra.mxu0 0.0
        %1315 = vmatprep.subr.mxu0 0.0
        %1316 = vmatpush1.msra.mxu0 0.0
        %1317 = vmatprep.subr.mxu0 0.0
        %1318 = vmatpush1.msra.mxu0 0.0
        %1319 = vmatprep.subr.mxu0 0.0
        %1320 = vmatpush1.msra.mxu0 0.0
        %1321 = vmatprep.subr.mxu0 0.0
        %1322 = vmatpush1.msra.mxu0 0.0
        %1323 = vmatprep.subr.mxu0 0.0
        %1324 = vmatpush1.msra.mxu0 0.0
        %1325 = vmatprep.subr.mxu0 0.0
        %1326 = vmatpush1.msra.mxu0 0.0
        %1327 = vmatprep.subr.mxu0 0.0
        %1328 = vmatpush1.msra.mxu0 0.0
        %1329 = vmatprep.subr.mxu0 0.0
        %1330 = vmatpush1.msra.mxu0 0.0
        %1331 = vmatprep.subr.mxu0 0.0
        %1332 = vmatpush1.msra.mxu0 0.0
        %1333 = vmatprep.subr.mxu0 0.0
        %1334 = vmatpush1.msra.mxu0 0.0
        %1335 = vmatprep.subr.mxu0 0.0
        %1336 = vmatpush1.msra.mxu0 0.0
        %1337 = vmatprep.subr.mxu0 0.0
        %1338 = vmatpush1.msra.mxu0 0.0
        %1339 = vmatprep.subr.mxu0 0.0
        %1340 = vmatpush1.msra.mxu0 0.0
        %1341 = vmatprep.subr.mxu0 0.0
        %1342 = vmatpush1.msra.mxu0 0.0
        %1343 = vmatprep.subr.mxu0 0.0
        %1344 = vmatpush1.msra.mxu0 0.0
        %1345 = vmatprep.subr.mxu0 0.0
        %1346 = vmatpush1.msra.mxu0 0.0
        %1347 = vmatprep.subr.mxu0 0.0
        %1348 = vmatpush1.msra.mxu0 0.0
        %1349 = vmatprep.subr.mxu0 0.0
        %1350 = vmatpush1.msra.mxu0 0.0
        %1351 = vmatprep.subr.mxu0 0.0
        %1352 = vmatpush1.msra.mxu0 0.0
        %1353 = vmatprep.subr.mxu0 0.0
        %1354 = vmatpush1.msra.mxu0 0.0
        %1355 = vmatprep.subr.mxu0 0.0
        %1356 = vmatpush1.msra.mxu0 0.0
        %1357 = vmatprep.subr.mxu0 0.0
        %1358 = vmatpush1.msra.mxu0 0.0
        %1359 = vmatprep.subr.mxu0 0.0
        %1360 = vmatpush1.msra.mxu0 0.0
        %1361 = vmatprep.subr.mxu0 0.0
        %1362 = vmatpush1.msra.mxu0 0.0
        %1363 = vmatprep.subr.mxu0 0.0
        %1364 = vmatpush1.msra.mxu0 0.0
        %1365 = vmatprep.subr.mxu0 0.0
        %1366 = vmatpush1.msra.mxu0 0.0
        %1367 = vmatprep.mubr.f32.mxu0 0.0
        %1368 = vmatmul.mubr.f32.gmra.mrb[0].mxu0 %v533
        %v1369 = vpop.f32.mrb[0].mxu0
        %v1370 = vadd.f32 %v1145, %v1369
        %v1371 = vpop.f32.mrb[0].mxu0
        %1372 = vmatprep.mubr.f32.mxu0 0.0
        %1373 = vmatmul.mubr.f32.gmra.mrb[0].mxu0 %v536
        %v1374 = vpop.f32.mrb[0].mxu0
        %v1375 = vadd.f32 %v1150, %v1374
        %v1376 = vpop.f32.mrb[0].mxu0
        %1377 = vmatprep.mubr.f32.mxu0 0.0
        %1378 = vmatmul.mubr.f32.gmra.mrb[0].mxu0 %v539
        %v1379 = vpop.f32.mrb[0].mxu0
        %v1380 = vadd.f32 %v1155, %v1379
        %v1381 = vpop.f32.mrb[0].mxu0
        %1382 = vmatprep.mubr.f32.mxu0 0.0
        %1383 = vmatmul.mubr.f32.gmra.mrb[0].mxu0 %v542
        %v1384 = vpop.f32.mrb[0].mxu0
        %v1385 = vadd.f32 %v1160, %v1384
        %v1386 = vpop.f32.mrb[0].mxu0
        %1387 = vmatprep.mubr.f32.mxu0 0.0
        %1388 = vmatmul.mubr.f32.gmra.mrb[0].mxu0 %v545
        %v1389 = vpop.f32.mrb[0].mxu0
        %v1390 = vadd.f32 %v1165, %v1389
        %v1391 = vpop.f32.mrb[0].mxu0
        %1392 = vmatprep.mubr.f32.mxu0 0.0
        %1393 = vmatmul.mubr.f32.gmra.mrb[0].mxu0 %v548
        %v1394 = vpop.f32.mrb[0].mxu0
        %v1395 = vadd.f32 %v1170, %v1394
        %v1396 = vpop.f32.mrb[0].mxu0
        %1397 = vmatprep.mubr.f32.mxu0 0.0
        %1398 = vmatmul.mubr.f32.gmra.mrb[0].mxu0 %v551
        %v1399 = vpop.f32.mrb[0].mxu0
        %v1400 = vadd.f32 %v1175, %v1399
        %v1401 = vpop.f32.mrb[0].mxu0
        %1402 = vmatprep.mubr.f32.mxu0 0.0
        %1403 = vmatmul.mubr.f32.gmra.mrb[0].mxu0 %v554
        %v1404 = vpop.f32.mrb[0].mxu0
        %v1405 = vadd.f32 %v1180, %v1404
        %v1406 = vpop.f32.mrb[0].mxu0
        %1407 = vmatprep.mubr.f32.mxu0 0.0
        %1408 = vmatmul.mubr.f32.gmra.mrb[0].mxu0 %v557
        %v1409 = vpop.f32.mrb[0].mxu0
        %v1410 = vadd.f32 %v1185, %v1409
        %v1411 = vpop.f32.mrb[0].mxu0
        %1412 = vmatprep.mubr.f32.mxu0 0.0
        %1413 = vmatmul.mubr.f32.gmra.mrb[0].mxu0 %v560
        %v1414 = vpop.f32.mrb[0].mxu0
        %v1415 = vadd.f32 %v1190, %v1414
        %v1416 = vpop.f32.mrb[0].mxu0
        %1417 = vmatprep.mubr.f32.mxu0 0.0
        %1418 = vmatmul.mubr.f32.gmra.mrb[0].mxu0 %v563
        %v1419 = vpop.f32.mrb[0].mxu0
        %v1420 = vadd.f32 %v1195, %v1419
        %v1421 = vpop.f32.mrb[0].mxu0
        %1422 = vmatprep.mubr.f32.mxu0 0.0
        %1423 = vmatmul.mubr.f32.gmra.mrb[0].mxu0 %v566
        %v1424 = vpop.f32.mrb[0].mxu0
        %v1425 = vadd.f32 %v1200, %v1424
        %v1426 = vpop.f32.mrb[0].mxu0
        %1427 = vmatprep.mubr.f32.mxu0 0.0
        %1428 = vmatmul.mubr.f32.gmra.mrb[0].mxu0 %v569
        %v1429 = vpop.f32.mrb[0].mxu0
        %v1430 = vadd.f32 %v1205, %v1429
        %v1431 = vpop.f32.mrb[0].mxu0
        %1432 = vmatprep.mubr.f32.mxu0 0.0
        %1433 = vmatmul.mubr.f32.gmra.mrb[0].mxu0 %v572
        %v1434 = vpop.f32.mrb[0].mxu0
        %v1435 = vadd.f32 %v1210, %v1434
        %v1436 = vpop.f32.mrb[0].mxu0
        %1437 = vmatprep.mubr.f32.mxu0 0.0
        %1438 = vmatmul.mubr.f32.gmra.mrb[0].mxu0 %v575
        %v1439 = vpop.f32.mrb[0].mxu0
        %v1440 = vadd.f32 %v1215, %v1439
        %v1441 = vpop.f32.mrb[0].mxu0
        %1442 = vmatprep.mubr.f32.mxu0 0.0
        %1443 = vmatmul.mubr.f32.gmra.mrb[0].mxu0 %v578
        %v1444 = vpop.f32.mrb[0].mxu0
        %v1445 = vadd.f32 %v1220, %v1444
        %v1446 = vpop.f32.mrb[0].mxu0
        %1447 = vmatprep.mubr.f32.mxu0 0.0
        %1448 = vmatmul.mubr.f32.gmra.mrb[0].mxu0 %v581
        %v1449 = vpop.f32.mrb[0].mxu0
        %v1450 = vadd.f32 %v1225, %v1449
        %v1451 = vpop.f32.mrb[0].mxu0
        %1452 = vmatprep.mubr.f32.mxu0 0.0
        %1453 = vmatmul.mubr.f32.gmra.mrb[0].mxu0 %v584
        %v1454 = vpop.f32.mrb[0].mxu0
        %v1455 = vadd.f32 %v1230, %v1454
        %v1456 = vpop.f32.mrb[0].mxu0
        %1457 = vmatprep.mubr.f32.mxu0 0.0
        %1458 = vmatmul.mubr.f32.gmra.mrb[0].mxu0 %v587
        %v1459 = vpop.f32.mrb[0].mxu0
        %v1460 = vadd.f32 %v1235, %v1459
        %v1461 = vpop.f32.mrb[0].mxu0
        %1462 = vmatprep.mubr.f32.mxu0 0.0
        %1463 = vmatmul.mubr.f32.gmra.mrb[0].mxu0 %v590
        %v1464 = vpop.f32.mrb[0].mxu0
        %v1465 = vadd.f32 %v1240, %v1464
        %v1466 = vpop.f32.mrb[0].mxu0
        %1467 = vmatprep.mubr.f32.mxu0 0.0
        %1468 = vmatmul.mubr.f32.gmra.mrb[0].mxu0 %v593
        %v1469 = vpop.f32.mrb[0].mxu0
        %v1470 = vadd.f32 %v1245, %v1469
        %v1471 = vpop.f32.mrb[0].mxu0
        %1472 = vmatprep.mubr.f32.mxu0 0.0
        %1473 = vmatmul.mubr.f32.gmra.mrb[0].mxu0 %v596
        %v1474 = vpop.f32.mrb[0].mxu0
        %v1475 = vadd.f32 %v1250, %v1474
        %v1476 = vpop.f32.mrb[0].mxu0
        %1477 = vmatprep.mubr.f32.mxu0 0.0
        %1478 = vmatmul.mubr.f32.gmra.mrb[0].mxu0 %v599
        %v1479 = vpop.f32.mrb[0].mxu0
        %v1480 = vadd.f32 %v1255, %v1479
        %v1481 = vpop.f32.mrb[0].mxu0
        %1482 = vmatprep.mubr.f32.mxu0 0.0
        %1483 = vmatmul.mubr.f32.gmra.mrb[0].mxu0 %v602
        %v1484 = vpop.f32.mrb[0].mxu0
        %v1485 = vadd.f32 %v1260, %v1484
        %v1486 = vpop.f32.mrb[0].mxu0
        %1487 = vmatprep.mubr.f32.mxu0 0.0
        %1488 = vmatmul.mubr.f32.gmra.mrb[0].mxu0 %v605
        %v1489 = vpop.f32.mrb[0].mxu0
        %v1490 = vadd.f32 %v1265, %v1489
        %v1491 = vpop.f32.mrb[0].mxu0
        %1492 = vmatprep.mubr.f32.mxu0 0.0
        %1493 = vmatmul.mubr.f32.gmra.mrb[0].mxu0 %v608
        %v1494 = vpop.f32.mrb[0].mxu0
        %v1495 = vadd.f32 %v1270, %v1494
        %v1496 = vpop.f32.mrb[0].mxu0
        %1497 = vmatprep.mubr.f32.mxu0 0.0
        %1498 = vmatmul.mubr.f32.gmra.mrb[0].mxu0 %v611
        %v1499 = vpop.f32.mrb[0].mxu0
        %v1500 = vadd.f32 %v1275, %v1499
        %v1501 = vpop.f32.mrb[0].mxu0
        %1502 = vmatprep.mubr.f32.mxu0 0.0
        %1503 = vmatmul.mubr.f32.gmra.mrb[0].mxu0 %v614
        %v1504 = vpop.f32.mrb[0].mxu0
        %v1505 = vadd.f32 %v1280, %v1504
        %v1506 = vpop.f32.mrb[0].mxu0
        %1507 = vmatprep.mubr.f32.mxu0 0.0
        %1508 = vmatmul.mubr.f32.gmra.mrb[0].mxu0 %v617
        %v1509 = vpop.f32.mrb[0].mxu0
        %v1510 = vadd.f32 %v1285, %v1509
        %v1511 = vpop.f32.mrb[0].mxu0
        %1512 = vmatprep.mubr.f32.mxu0 0.0
        %1513 = vmatmul.mubr.f32.gmra.mrb[0].mxu0 %v620
        %v1514 = vpop.f32.mrb[0].mxu0
        %v1515 = vadd.f32 %v1290, %v1514
        %v1516 = vpop.f32.mrb[0].mxu0
        %1517 = vmatprep.mubr.f32.mxu0 0.0
        %1518 = vmatmul.mubr.f32.gmra.mrb[0].mxu0 %v623
        %v1519 = vpop.f32.mrb[0].mxu0
        %v1520 = vadd.f32 %v1295, %v1519
        %v1521 = vpop.f32.mrb[0].mxu0
        %1522 = vmatprep.mubr.f32.mxu0 0.0
        %1523 = vmatmul.mubr.f32.gmra.mrb[0].mxu0 %v626
        %v1524 = vpop.f32.mrb[0].mxu0
        %v1525 = vadd.f32 %v1300, %v1524
        %v1526 = vpop.f32.mrb[0].mxu0
        %1527 = vdwg.mxu0
        %v1528 = vmax.f32 %v1370, 0.0
        %v1529 = vmax.f32 %v1375, 0.0
        %v1530 = vmax.f32 %v1380, 0.0
        %v1531 = vmax.f32 %v1385, 0.0
        %v1532 = vmax.f32 %v1390, 0.0
        %v1533 = vmax.f32 %v1395, 0.0
        %v1534 = vmax.f32 %v1400, 0.0
        %v1535 = vmax.f32 %v1405, 0.0
        %v1536 = vmax.f32 %v1410, 0.0
        %v1537 = vmax.f32 %v1415, 0.0
        %v1538 = vmax.f32 %v1420, 0.0
        %v1539 = vmax.f32 %v1425, 0.0
        %v1540 = vmax.f32 %v1430, 0.0
        %v1541 = vmax.f32 %v1435, 0.0
        %v1542 = vmax.f32 %v1440, 0.0
        %v1543 = vmax.f32 %v1445, 0.0
        %v1544 = vmax.f32 %v1450, 0.0
        %v1545 = vmax.f32 %v1455, 0.0
        %v1546 = vmax.f32 %v1460, 0.0
        %v1547 = vmax.f32 %v1465, 0.0
        %v1548 = vmax.f32 %v1470, 0.0
        %v1549 = vmax.f32 %v1475, 0.0
        %v1550 = vmax.f32 %v1480, 0.0
        %v1551 = vmax.f32 %v1485, 0.0
        %v1552 = vmax.f32 %v1490, 0.0
        %v1553 = vmax.f32 %v1495, 0.0
        %v1554 = vmax.f32 %v1500, 0.0
        %v1555 = vmax.f32 %v1505, 0.0
        %v1556 = vmax.f32 %v1510, 0.0
        %v1557 = vmax.f32 %v1515, 0.0
        %v1558 = vmax.f32 %v1520, 0.0
        %v1559 = vmax.f32 %v1525, 0.0
        %vm1560 = vcmask 523264
        %1561 = vst.msk [vmem:[%s177] sm:$0xff] %vm1560, %v1528
        %1562 = vst.msk [vmem:[%s177 + $0x8] sm:$0xff] %vm1560, %v1529
        %1563 = vst.msk [vmem:[%s177 + $0x10] sm:$0xff] %vm1560, %v1530
        %1564 = vst.msk [vmem:[%s177 + $0x18] sm:$0xff] %vm1560, %v1531
        %1565 = vst.msk [vmem:[%s177 + $0x20] sm:$0xff] %vm1560, %v1532
        %1566 = vst.msk [vmem:[%s177 + $0x28] sm:$0xff] %vm1560, %v1533
        %1567 = vst.msk [vmem:[%s177 + $0x30] sm:$0xff] %vm1560, %v1534
        %1568 = vst.msk [vmem:[%s177 + $0x38] sm:$0xff] %vm1560, %v1535
        %1569 = vst.msk [vmem:[%s177 + $0x40] sm:$0xff] %vm1560, %v1536
        %1570 = vst.msk [vmem:[%s177 + $0x48] sm:$0xff] %vm1560, %v1537
        %1571 = vst.msk [vmem:[%s177 + $0x50] sm:$0xff] %vm1560, %v1538
        %1572 = vst.msk [vmem:[%s177 + $0x58] sm:$0xff] %vm1560, %v1539
        %1573 = vst.msk [vmem:[%s177 + $0x60] sm:$0xff] %vm1560, %v1540
        %1574 = vst.msk [vmem:[%s177 + $0x68] sm:$0xff] %vm1560, %v1541
        %1575 = vst.msk [vmem:[%s177 + $0x70] sm:$0xff] %vm1560, %v1542
        %1576 = vst.msk [vmem:[%s177 + $0x78] sm:$0xff] %vm1560, %v1543
        %1577 = vst.msk [vmem:[%s177 + $0x80] sm:$0xff] %vm1560, %v1544
        %1578 = vst.msk [vmem:[%s177 + $0x88] sm:$0xff] %vm1560, %v1545
        %1579 = vst.msk [vmem:[%s177 + $0x90] sm:$0xff] %vm1560, %v1546
        %1580 = vst.msk [vmem:[%s177 + $0x98] sm:$0xff] %vm1560, %v1547
        %1581 = vst.msk [vmem:[%s177 + $0xa0] sm:$0xff] %vm1560, %v1548
        %1582 = vst.msk [vmem:[%s177 + $0xa8] sm:$0xff] %vm1560, %v1549
        %1583 = vst.msk [vmem:[%s177 + $0xb0] sm:$0xff] %vm1560, %v1550
        %1584 = vst.msk [vmem:[%s177 + $0xb8] sm:$0xff] %vm1560, %v1551
        %1585 = vst.msk [vmem:[%s177 + $0xc0] sm:$0xff] %vm1560, %v1552
        %1586 = vst.msk [vmem:[%s177 + $0xc8] sm:$0xff] %vm1560, %v1553
        %1587 = vst.msk [vmem:[%s177 + $0xd0] sm:$0xff] %vm1560, %v1554
        %1588 = vst.msk [vmem:[%s177 + $0xd8] sm:$0xff] %vm1560, %v1555
        %1589 = vst.msk [vmem:[%s177 + $0xe0] sm:$0xff] %vm1560, %v1556
        %1590 = vst.msk [vmem:[%s177 + $0xe8] sm:$0xff] %vm1560, %v1557
        %1591 = vst.msk [vmem:[%s177 + $0xf0] sm:$0xff] %vm1560, %v1558
        %1592 = vst.msk [vmem:[%s177 + $0xf8] sm:$0xff] %vm1560, %v1559
        %s1593 = sand.u32 %s90, 1
        %s1594 = sand.u32 %s90, 1
        %s1595 = smul.addr %s1594, 256
        %s1596 = scalar_lea.vmem [#allocation2], %s1595
        // Predicated region
        $region33: #{a3c_forward.5} parent=31 // pred_check
          %p1597 = pneg %p100
        $region34: #{a3c_forward.5} parent=31 // pred_check_branch
          %1599 = sbr.rel (%p1597) target = $region36
        $region35: #{a3c_forward.5} parent=31 // pred_region
          %s1600 = smul.u32 32, %s14
          %s1601 = ssub.s32 43, %s1600
          %p1602 = scmp.lt.s32.totalorder %s1601, 32
          %s1603 = scalar_select %p1602, %s1601, 32
          %s1604 = smul.u32 128, %s1603
          %p1605 = scmp.ne.s32.totalorder 0, %s1604
          %s1606 = smul.addr %s1600, 8
          %s1607 = scalar_lea.vmem %s3, %s1606
          // Predicated region
          $region37: #{a3c_forward.5} parent=35 // pred_check
            %p1608 = pneg %p1605
          $region38: #{a3c_forward.5} parent=35 // pred_check_branch
            %1610 = sbr.rel (%p1608) target = $region40
          $region39: #{a3c_forward.5} parent=35 // pred_region
            // Predicated region
            $region41: #{a3c_forward.5} parent=39 // pred_check
              _
            $region42: #{a3c_forward.5} parent=39 // pred_check_branch
              %1612 = sbr.rel (0) target = $region44
            $region43: #{a3c_forward.5} parent=39 // pred_region
              // Predicated region
              $region63: #{a3c_forward.5} parent=43 // pred_check
                _
              $region64: #{a3c_forward.5} parent=43 // pred_check_branch
                %1723 = sbr.rel (0) target = $region66
              $region65: #{a3c_forward.5} parent=43 // pred_region
                %s1724 = sshrl.u32 %s1603, 5
                // While loop
                $region67: #{a3c_forward.5} parent=65 // loop_pre_header
                  _
                $region68: #{a3c_forward.5} parent=65 // loop_header
                  %s1726 = sphi 0, %s1728
                  %p1727 = scmp.ge.s32.totalorder %s1726, %s1724
                  %s1731 = sphi 0, %s1800
                  %s1732 = sphi %s1596, %s1803
                  %s1733 = sphi %s1607, %s1804
                $region69: #{a3c_forward.5} parent=65 // loop_header_branch
                  %1730 = sbr.rel (%p1727) target = $region73
                $region70: #{a3c_forward.5} parent=65 // loop_body
                  %v1734 = vld [vmem:[%s1732] sm:$0xff]
                  %1735 = vst [vmem:[%s1733] sm:$0xff] %v1734
                  %v1736 = vld [vmem:[%s1732 + $0x8] sm:$0xff]
                  %1737 = vst [vmem:[%s1733 + $0x8] sm:$0xff] %v1736
                  %v1738 = vld [vmem:[%s1732 + $0x10] sm:$0xff]
                  %1739 = vst [vmem:[%s1733 + $0x10] sm:$0xff] %v1738
                  %v1740 = vld [vmem:[%s1732 + $0x18] sm:$0xff]
                  %1741 = vst [vmem:[%s1733 + $0x18] sm:$0xff] %v1740
                  %v1742 = vld [vmem:[%s1732 + $0x20] sm:$0xff]
                  %1743 = vst [vmem:[%s1733 + $0x20] sm:$0xff] %v1742
                  %v1744 = vld [vmem:[%s1732 + $0x28] sm:$0xff]
                  %1745 = vst [vmem:[%s1733 + $0x28] sm:$0xff] %v1744
                  %v1746 = vld [vmem:[%s1732 + $0x30] sm:$0xff]
                  %1747 = vst [vmem:[%s1733 + $0x30] sm:$0xff] %v1746
                  %v1748 = vld [vmem:[%s1732 + $0x38] sm:$0xff]
                  %1749 = vst [vmem:[%s1733 + $0x38] sm:$0xff] %v1748
                  %v1750 = vld [vmem:[%s1732 + $0x40] sm:$0xff]
                  %1751 = vst [vmem:[%s1733 + $0x40] sm:$0xff] %v1750
                  %v1752 = vld [vmem:[%s1732 + $0x48] sm:$0xff]
                  %1753 = vst [vmem:[%s1733 + $0x48] sm:$0xff] %v1752
                  %v1754 = vld [vmem:[%s1732 + $0x50] sm:$0xff]
                  %1755 = vst [vmem:[%s1733 + $0x50] sm:$0xff] %v1754
                  %v1756 = vld [vmem:[%s1732 + $0x58] sm:$0xff]
                  %1757 = vst [vmem:[%s1733 + $0x58] sm:$0xff] %v1756
                  %v1758 = vld [vmem:[%s1732 + $0x60] sm:$0xff]
                  %1759 = vst [vmem:[%s1733 + $0x60] sm:$0xff] %v1758
                  %v1760 = vld [vmem:[%s1732 + $0x68] sm:$0xff]
                  %1761 = vst [vmem:[%s1733 + $0x68] sm:$0xff] %v1760
                  %v1762 = vld [vmem:[%s1732 + $0x70] sm:$0xff]
                  %1763 = vst [vmem:[%s1733 + $0x70] sm:$0xff] %v1762
                  %v1764 = vld [vmem:[%s1732 + $0x78] sm:$0xff]
                  %1765 = vst [vmem:[%s1733 + $0x78] sm:$0xff] %v1764
                  %v1766 = vld [vmem:[%s1732 + $0x80] sm:$0xff]
                  %1767 = vst [vmem:[%s1733 + $0x80] sm:$0xff] %v1766
                  %v1768 = vld [vmem:[%s1732 + $0x88] sm:$0xff]
                  %1769 = vst [vmem:[%s1733 + $0x88] sm:$0xff] %v1768
                  %v1770 = vld [vmem:[%s1732 + $0x90] sm:$0xff]
                  %1771 = vst [vmem:[%s1733 + $0x90] sm:$0xff] %v1770
                  %v1772 = vld [vmem:[%s1732 + $0x98] sm:$0xff]
                  %1773 = vst [vmem:[%s1733 + $0x98] sm:$0xff] %v1772
                  %v1774 = vld [vmem:[%s1732 + $0xa0] sm:$0xff]
                  %1775 = vst [vmem:[%s1733 + $0xa0] sm:$0xff] %v1774
                  %v1776 = vld [vmem:[%s1732 + $0xa8] sm:$0xff]
                  %1777 = vst [vmem:[%s1733 + $0xa8] sm:$0xff] %v1776
                  %v1778 = vld [vmem:[%s1732 + $0xb0] sm:$0xff]
                  %1779 = vst [vmem:[%s1733 + $0xb0] sm:$0xff] %v1778
                  %v1780 = vld [vmem:[%s1732 + $0xb8] sm:$0xff]
                  %1781 = vst [vmem:[%s1733 + $0xb8] sm:$0xff] %v1780
                  %v1782 = vld [vmem:[%s1732 + $0xc0] sm:$0xff]
                  %1783 = vst [vmem:[%s1733 + $0xc0] sm:$0xff] %v1782
                  %v1784 = vld [vmem:[%s1732 + $0xc8] sm:$0xff]
                  %1785 = vst [vmem:[%s1733 + $0xc8] sm:$0xff] %v1784
                  %v1786 = vld [vmem:[%s1732 + $0xd0] sm:$0xff]
                  %1787 = vst [vmem:[%s1733 + $0xd0] sm:$0xff] %v1786
                  %v1788 = vld [vmem:[%s1732 + $0xd8] sm:$0xff]
                  %1789 = vst [vmem:[%s1733 + $0xd8] sm:$0xff] %v1788
                  %v1790 = vld [vmem:[%s1732 + $0xe0] sm:$0xff]
                  %1791 = vst [vmem:[%s1733 + $0xe0] sm:$0xff] %v1790
                  %v1792 = vld [vmem:[%s1732 + $0xe8] sm:$0xff]
                  %1793 = vst [vmem:[%s1733 + $0xe8] sm:$0xff] %v1792
                  %v1794 = vld [vmem:[%s1732 + $0xf0] sm:$0xff]
                  %1795 = vst [vmem:[%s1733 + $0xf0] sm:$0xff] %v1794
                  %v1796 = vld [vmem:[%s1732 + $0xf8] sm:$0xff]
                  %1797 = vst [vmem:[%s1733 + $0xf8] sm:$0xff] %v1796
                  %s1798 = sadd.s32 1, %s1731
                  %p1799 = scmp.ge.s32.totalorder %s1798, %s1724
                  %s1800 = scalar_select %p1799, 0, %s1798
                  %s1801 = smul.u32 %s1800, 256
                  %s1802 = smul.u32 %s1800, 256
                  %s1803 = scalar_lea.vmem %s1596, %s1801 [#allocation2]
                  %s1804 = scalar_lea.vmem %s1607, %s1802
                $region71: #{a3c_forward.5} parent=65 // loop_footer
                  %s1728 = sadd.s32 %s1726, 1
                $region72: #{a3c_forward.5} parent=65 // loop_footer_branch
                  %1725 = sbr.rel target = $region68
                $region73: #{a3c_forward.5} parent=65 // loop_exit
                  _
                %s1805 = sshrl.u32 %s1603, 5
                %s1806 = sand.u32 %s1603, 31
                %s1807 = smul.u32 %s1805, 32
                %s1808 = smul.u32 8, %s1807
                %s1809 = scalar_lea.vmem %s1596, %s1808 [#allocation2]
                %s1810 = smul.u32 8, %s1807
                %s1811 = scalar_lea.vmem %s1607, %s1810
                // While loop
                $region74: #{a3c_forward.5} parent=65 // loop_pre_header
                  _
                $region75: #{a3c_forward.5} parent=65 // loop_header
                  %s1813 = sphi 0, %s1815
                  %p1814 = scmp.ge.s32.totalorder %s1813, %s1806
                  %s1818 = sphi 0, %s1825
                  %s1819 = sphi %s1809, %s1828
                  %s1820 = sphi %s1811, %s1829
                $region76: #{a3c_forward.5} parent=65 // loop_header_branch
                  %1817 = sbr.rel (%p1814) target = $region80
                $region77: #{a3c_forward.5} parent=65 // loop_body
                  %v1821 = vld [vmem:[%s1819] sm:$0xff]
                  %1822 = vst [vmem:[%s1820] sm:$0xff] %v1821
                  %s1823 = sadd.s32 1, %s1818
                  %p1824 = scmp.ge.s32.totalorder %s1823, %s1806
                  %s1825 = scalar_select %p1824, 0, %s1823
                  %s1826 = smul.u32 %s1825, 8
                  %s1827 = smul.u32 %s1825, 8
                  %s1828 = scalar_lea.vmem %s1809, %s1826 [#allocation2]
                  %s1829 = scalar_lea.vmem %s1811, %s1827
                $region78: #{a3c_forward.5} parent=65 // loop_footer
                  %s1815 = sadd.s32 %s1813, 1
                $region79: #{a3c_forward.5} parent=65 // loop_footer_branch
                  %1812 = sbr.rel target = $region75
                $region80: #{a3c_forward.5} parent=65 // loop_exit
                  _
              $region66: #{a3c_forward.5} parent=43 // pred_fallthru
                _
              // Predicated region
              $region81: #{a3c_forward.5} parent=43 // pred_check
                _
              $region82: #{a3c_forward.5} parent=43 // pred_check_branch
                %1831 = sbr.rel target = $region84
              $region83: #{a3c_forward.5} parent=43 // pred_region
                _
              $region84: #{a3c_forward.5} parent=43 // pred_fallthru
                _
            $region44: #{a3c_forward.5} parent=39 // pred_fallthru
              _
            // Predicated region
            $region45: #{a3c_forward.5} parent=39 // pred_check
              _
            $region46: #{a3c_forward.5} parent=39 // pred_check_branch
              %1614 = sbr.rel target = $region48
            $region47: #{a3c_forward.5} parent=39 // pred_region
              %s1616 = sshrl.u32 %s1603, 5
              // While loop
              $region49: #{a3c_forward.5} parent=47 // loop_pre_header
                _
              $region50: #{a3c_forward.5} parent=47 // loop_header
                %s1618 = sphi 0, %s1620
                %p1619 = scmp.ge.s32.totalorder %s1618, %s1616
                %s1623 = sphi 0, %s1692
                %s1624 = sphi %s1596, %s1695
                %s1625 = sphi %s1607, %s1696
              $region51: #{a3c_forward.5} parent=47 // loop_header_branch
                %1622 = sbr.rel (%p1619) target = $region55
              $region52: #{a3c_forward.5} parent=47 // loop_body
                %v1626 = vld [vmem:[%s1624] sm:$0xff]
                %1627 = vst [vmem:[%s1625] sm:$0xff] %v1626
                %v1628 = vld [vmem:[%s1624 + $0x8] sm:$0xff]
                %1629 = vst [vmem:[%s1625 + $0x8] sm:$0xff] %v1628
                %v1630 = vld [vmem:[%s1624 + $0x10] sm:$0xff]
                %1631 = vst [vmem:[%s1625 + $0x10] sm:$0xff] %v1630
                %v1632 = vld [vmem:[%s1624 + $0x18] sm:$0xff]
                %1633 = vst [vmem:[%s1625 + $0x18] sm:$0xff] %v1632
                %v1634 = vld [vmem:[%s1624 + $0x20] sm:$0xff]
                %1635 = vst [vmem:[%s1625 + $0x20] sm:$0xff] %v1634
                %v1636 = vld [vmem:[%s1624 + $0x28] sm:$0xff]
                %1637 = vst [vmem:[%s1625 + $0x28] sm:$0xff] %v1636
                %v1638 = vld [vmem:[%s1624 + $0x30] sm:$0xff]
                %1639 = vst [vmem:[%s1625 + $0x30] sm:$0xff] %v1638
                %v1640 = vld [vmem:[%s1624 + $0x38] sm:$0xff]
                %1641 = vst [vmem:[%s1625 + $0x38] sm:$0xff] %v1640
                %v1642 = vld [vmem:[%s1624 + $0x40] sm:$0xff]
                %1643 = vst [vmem:[%s1625 + $0x40] sm:$0xff] %v1642
                %v1644 = vld [vmem:[%s1624 + $0x48] sm:$0xff]
                %1645 = vst [vmem:[%s1625 + $0x48] sm:$0xff] %v1644
                %v1646 = vld [vmem:[%s1624 + $0x50] sm:$0xff]
                %1647 = vst [vmem:[%s1625 + $0x50] sm:$0xff] %v1646
                %v1648 = vld [vmem:[%s1624 + $0x58] sm:$0xff]
                %1649 = vst [vmem:[%s1625 + $0x58] sm:$0xff] %v1648
                %v1650 = vld [vmem:[%s1624 + $0x60] sm:$0xff]
                %1651 = vst [vmem:[%s1625 + $0x60] sm:$0xff] %v1650
                %v1652 = vld [vmem:[%s1624 + $0x68] sm:$0xff]
                %1653 = vst [vmem:[%s1625 + $0x68] sm:$0xff] %v1652
                %v1654 = vld [vmem:[%s1624 + $0x70] sm:$0xff]
                %1655 = vst [vmem:[%s1625 + $0x70] sm:$0xff] %v1654
                %v1656 = vld [vmem:[%s1624 + $0x78] sm:$0xff]
                %1657 = vst [vmem:[%s1625 + $0x78] sm:$0xff] %v1656
                %v1658 = vld [vmem:[%s1624 + $0x80] sm:$0xff]
                %1659 = vst [vmem:[%s1625 + $0x80] sm:$0xff] %v1658
                %v1660 = vld [vmem:[%s1624 + $0x88] sm:$0xff]
                %1661 = vst [vmem:[%s1625 + $0x88] sm:$0xff] %v1660
                %v1662 = vld [vmem:[%s1624 + $0x90] sm:$0xff]
                %1663 = vst [vmem:[%s1625 + $0x90] sm:$0xff] %v1662
                %v1664 = vld [vmem:[%s1624 + $0x98] sm:$0xff]
                %1665 = vst [vmem:[%s1625 + $0x98] sm:$0xff] %v1664
                %v1666 = vld [vmem:[%s1624 + $0xa0] sm:$0xff]
                %1667 = vst [vmem:[%s1625 + $0xa0] sm:$0xff] %v1666
                %v1668 = vld [vmem:[%s1624 + $0xa8] sm:$0xff]
                %1669 = vst [vmem:[%s1625 + $0xa8] sm:$0xff] %v1668
                %v1670 = vld [vmem:[%s1624 + $0xb0] sm:$0xff]
                %1671 = vst [vmem:[%s1625 + $0xb0] sm:$0xff] %v1670
                %v1672 = vld [vmem:[%s1624 + $0xb8] sm:$0xff]
                %1673 = vst [vmem:[%s1625 + $0xb8] sm:$0xff] %v1672
                %v1674 = vld [vmem:[%s1624 + $0xc0] sm:$0xff]
                %1675 = vst [vmem:[%s1625 + $0xc0] sm:$0xff] %v1674
                %v1676 = vld [vmem:[%s1624 + $0xc8] sm:$0xff]
                %1677 = vst [vmem:[%s1625 + $0xc8] sm:$0xff] %v1676
                %v1678 = vld [vmem:[%s1624 + $0xd0] sm:$0xff]
                %1679 = vst [vmem:[%s1625 + $0xd0] sm:$0xff] %v1678
                %v1680 = vld [vmem:[%s1624 + $0xd8] sm:$0xff]
                %1681 = vst [vmem:[%s1625 + $0xd8] sm:$0xff] %v1680
                %v1682 = vld [vmem:[%s1624 + $0xe0] sm:$0xff]
                %1683 = vst [vmem:[%s1625 + $0xe0] sm:$0xff] %v1682
                %v1684 = vld [vmem:[%s1624 + $0xe8] sm:$0xff]
                %1685 = vst [vmem:[%s1625 + $0xe8] sm:$0xff] %v1684
                %v1686 = vld [vmem:[%s1624 + $0xf0] sm:$0xff]
                %1687 = vst [vmem:[%s1625 + $0xf0] sm:$0xff] %v1686
                %v1688 = vld [vmem:[%s1624 + $0xf8] sm:$0xff]
                %1689 = vst [vmem:[%s1625 + $0xf8] sm:$0xff] %v1688
                %s1690 = sadd.s32 1, %s1623
                %p1691 = scmp.ge.s32.totalorder %s1690, %s1616
                %s1692 = scalar_select %p1691, 0, %s1690
                %s1693 = smul.u32 %s1692, 256
                %s1694 = smul.u32 %s1692, 256
                %s1695 = scalar_lea.vmem %s1596, %s1693 [#allocation2]
                %s1696 = scalar_lea.vmem %s1607, %s1694
              $region53: #{a3c_forward.5} parent=47 // loop_footer
                %s1620 = sadd.s32 %s1618, 1
              $region54: #{a3c_forward.5} parent=47 // loop_footer_branch
                %1617 = sbr.rel target = $region50
              $region55: #{a3c_forward.5} parent=47 // loop_exit
                _
              %s1697 = sshrl.u32 %s1603, 5
              %s1698 = sand.u32 %s1603, 31
              %s1699 = smul.u32 %s1697, 32
              %s1700 = smul.u32 8, %s1699
              %s1701 = scalar_lea.vmem %s1596, %s1700 [#allocation2]
              %s1702 = smul.u32 8, %s1699
              %s1703 = scalar_lea.vmem %s1607, %s1702
              // While loop
              $region56: #{a3c_forward.5} parent=47 // loop_pre_header
                _
              $region57: #{a3c_forward.5} parent=47 // loop_header
                %s1705 = sphi 0, %s1707
                %p1706 = scmp.ge.s32.totalorder %s1705, %s1698
                %s1710 = sphi 0, %s1717
                %s1711 = sphi %s1701, %s1720
                %s1712 = sphi %s1703, %s1721
              $region58: #{a3c_forward.5} parent=47 // loop_header_branch
                %1709 = sbr.rel (%p1706) target = $region62
              $region59: #{a3c_forward.5} parent=47 // loop_body
                %v1713 = vld [vmem:[%s1711] sm:$0xff]
                %1714 = vst [vmem:[%s1712] sm:$0xff] %v1713
                %s1715 = sadd.s32 1, %s1710
                %p1716 = scmp.ge.s32.totalorder %s1715, %s1698
                %s1717 = scalar_select %p1716, 0, %s1715
                %s1718 = smul.u32 %s1717, 8
                %s1719 = smul.u32 %s1717, 8
                %s1720 = scalar_lea.vmem %s1701, %s1718 [#allocation2]
                %s1721 = scalar_lea.vmem %s1703, %s1719
              $region60: #{a3c_forward.5} parent=47 // loop_footer
                %s1707 = sadd.s32 %s1705, 1
              $region61: #{a3c_forward.5} parent=47 // loop_footer_branch
                %1704 = sbr.rel target = $region57
              $region62: #{a3c_forward.5} parent=47 // loop_exit
                _
            $region48: #{a3c_forward.5} parent=39 // pred_fallthru
              _
          $region40: #{a3c_forward.5} parent=35 // pred_fallthru
            _
          %1832 = vnop
        $region36: #{a3c_forward.5} parent=31 // pred_fallthru
          _
      $region32: #{a3c_forward.5} parent=5 // pred_fallthru
        _
      %p1833 = scmp.le.s32.totalorder 2, %s9
      // Predicated region
      $region85: #{a3c_forward.5} parent=5 // pred_check
        %p1834 = pneg %p1833
      $region86: #{a3c_forward.5} parent=5 // pred_check_branch
        %1836 = sbr.rel (%p1834) target = $region88
      $region87: #{a3c_forward.5} parent=5 // pred_region
        %s1837 = ssub.s32 %s9, 2
        // Predicated region
        $region89: #{a3c_forward.5} parent=87 // pred_check
          %p1838 = pneg %p106
        $region90: #{a3c_forward.5} parent=87 // pred_check_branch
          %1840 = sbr.rel (%p1838) target = $region92
        $region91: #{a3c_forward.5} parent=87 // pred_region
          %s1841 = sand.u32 %s91, 1
          %s1842 = sand.u32 %s91, 1
          %s1843 = smul.addr %s1842, 256
          %s1844 = scalar_lea.vmem [#allocation2], %s1843
        $region92: #{a3c_forward.5} parent=87 // pred_fallthru
          _
      $region88: #{a3c_forward.5} parent=5 // pred_fallthru
        _
    $region6: #{a3c_forward.5} parent=1 // loop_footer
      %s13 = sadd.s32 1, %s9
    $region7: #{a3c_forward.5} parent=1 // loop_footer_branch
      %8 = sbr.rel target = $region3
    $region8: #{a3c_forward.5} parent=1 // loop_exit
      _

// kernel: a3c_forward.6
$region0: #{a3c_forward.6}
  #allocation0 [shape = 'u32[]', space=smem, size = 0x4, offset = 0x4, fixed_abs, tag = 'smem constant byte address 0x4 - core index']
  #allocation1 [shape = 'u32[144,128]{1,0:T(1,128)}', space=vmem, size = 0x12000, scoped, tag = 'internal scratch']
  %s0 = inlined_call_operand.vmem [shape: f32[50,1600], index: 0, kind: input, shape index: {}]
  %s1 = inlined_call_operand.vmem [shape: f32[1600,64], index: 1, kind: input, shape index: {}]
  %s2 = inlined_call_operand.vmem [shape: f32[1,64], index: 2, kind: input, shape index: {}]
  %s3 = inlined_call_operand.vmem [shape: f32[50,64], index: 3, kind: output, shape index: {}]
  %s4 = sld [smem:[#allocation0]]
  $region22: #{a3c_forward.6} parent=0
    _
  %s6 = ssub.s32 1, %s4
  %s7 = scalar_select 0, %s6, %s4
  // Predicated region
  $region2: #{a3c_forward.6} parent=0 // pred_check
    _
  $region3: #{a3c_forward.6} parent=0 // pred_check_branch
    %9 = sbr.rel (0) target = $region5
  $region4: #{a3c_forward.6} parent=0 // pred_region
    _
  $region5: #{a3c_forward.6} parent=0 // pred_fallthru
    _
  // Predicated region
  $region6: #{a3c_forward.6} parent=0 // pred_check
    _
  $region7: #{a3c_forward.6} parent=0 // pred_check_branch
    %11 = sbr.rel (0) target = $region9
  $region8: #{a3c_forward.6} parent=0 // pred_region
    _
  $region9: #{a3c_forward.6} parent=0 // pred_fallthru
    _
  // Predicated region
  $region10: #{a3c_forward.6} parent=0 // pred_check
    _
  $region11: #{a3c_forward.6} parent=0 // pred_check_branch
    %13 = sbr.rel (0) target = $region13
  $region12: #{a3c_forward.6} parent=0 // pred_region
    _
  $region13: #{a3c_forward.6} parent=0 // pred_fallthru
    _
  %v14 = vld [vmem:[%s0] sm:$0xff]
  %v15 = vld [vmem:[%s0 + $0x8] sm:$0xff]
  %v16 = vld [vmem:[%s0 + $0x10] sm:$0xff]
  %v17 = vld [vmem:[%s0 + $0x18] sm:$0xff]
  %v18 = vld [vmem:[%s0 + $0x20] sm:$0xff]
  %v19 = vld [vmem:[%s0 + $0x28] sm:$0xff]
  %v20 = vld [vmem:[%s0 + $0x30] sm:$0xff]
  %v21 = vld [vmem:[%s0 + $0x38] sm:$0xff]
  %v22 = vld [vmem:[%s0 + $0x40] sm:$0xff]
  %v23 = vld [vmem:[%s0 + $0x48] sm:$0xff]
  %v24 = vld [vmem:[%s0 + $0x50] sm:$0xff]
  %v25 = vld [vmem:[%s0 + $0x58] sm:$0xff]
  %v26 = vld [vmem:[%s0 + $0x60] sm:$0xff]
  %v27 = vld [vmem:[%s0 + $0x68] sm:$0xff]
  %v28 = vld [vmem:[%s0 + $0x70] sm:$0xff]
  %v29 = vld [vmem:[%s0 + $0x78] sm:$0xff]
  %v30 = vld [vmem:[%s0 + $0x80] sm:$0xff]
  %v31 = vld [vmem:[%s0 + $0x88] sm:$0xff]
  %v32 = vld [vmem:[%s0 + $0x90] sm:$0xff]
  %v33 = vld [vmem:[%s0 + $0x98] sm:$0xff]
  %v34 = vld [vmem:[%s0 + $0xa0] sm:$0xff]
  %v35 = vld [vmem:[%s0 + $0xa8] sm:$0xff]
  %v36 = vld [vmem:[%s0 + $0xb0] sm:$0xff]
  %v37 = vld [vmem:[%s0 + $0xb8] sm:$0xff]
  %v38 = vld [vmem:[%s0 + $0xc0] sm:$0xff]
  %v39 = vld [vmem:[%s0 + $0xc8] sm:$0xff]
  %v40 = vld [vmem:[%s0 + $0xd0] sm:$0xff]
  %v41 = vld [vmem:[%s0 + $0xd8] sm:$0xff]
  %v42 = vld [vmem:[%s0 + $0xe0] sm:$0xff]
  %v43 = vld [vmem:[%s0 + $0xe8] sm:$0xff]
  %v44 = vld [vmem:[%s0 + $0xf0] sm:$0xff]
  %v45 = vld [vmem:[%s0 + $0xf8] sm:$0xff]
  %v46 = vld [vmem:[%s0 + $0x100] sm:$0xff]
  %v47 = vld [vmem:[%s0 + $0x108] sm:$0xff]
  %v48 = vld [vmem:[%s0 + $0x110] sm:$0xff]
  %v49 = vld [vmem:[%s0 + $0x118] sm:$0xff]
  %v50 = vld [vmem:[%s0 + $0x120] sm:$0xff]
  %v51 = vld [vmem:[%s0 + $0x128] sm:$0xff]
  %v52 = vld [vmem:[%s0 + $0x130] sm:$0xff]
  %v53 = vld [vmem:[%s0 + $0x138] sm:$0xff]
  %v54 = vld [vmem:[%s0 + $0x140] sm:$0xff]
  %v55 = vld [vmem:[%s0 + $0x148] sm:$0xff]
  %v56 = vld [vmem:[%s0 + $0x150] sm:$0xff]
  %v57 = vld [vmem:[%s0 + $0x158] sm:$0xff]
  %v58 = vld [vmem:[%s0 + $0x160] sm:$0xff]
  %v59 = vld [vmem:[%s0 + $0x168] sm:$0xff]
  %v60 = vld [vmem:[%s0 + $0x170] sm:$0xff]
  %v61 = vld [vmem:[%s0 + $0x178] sm:$0xff]
  %v62 = vld [vmem:[%s0 + $0x180] sm:$0xff]
  %v63 = vld [vmem:[%s0 + $0x188] sm:$0xff]
  %v64 = vld [vmem:[%s0 + $0x190] sm:$0xff]
  %v65 = vld [vmem:[%s0 + $0x198] sm:$0xff]
  %v66 = vld [vmem:[%s0 + $0x1a0] sm:$0xff]
  %v67 = vld [vmem:[%s0 + $0x1a8] sm:$0xff]
  %v68 = vld [vmem:[%s0 + $0x1b0] sm:$0xff]
  %v69 = vld [vmem:[%s0 + $0x1b8] sm:$0xff]
  %v70 = vld [vmem:[%s0 + $0x1c0] sm:$0xff]
  %v71 = vld [vmem:[%s0 + $0x1c8] sm:$0xff]
  %v72 = vld [vmem:[%s0 + $0x1d0] sm:$0xff]
  %v73 = vld [vmem:[%s0 + $0x1d8] sm:$0xff]
  %v74 = vld [vmem:[%s0 + $0x1e0] sm:$0xff]
  %v75 = vld [vmem:[%s0 + $0x1e8] sm:$0xff]
  %v76 = vld [vmem:[%s0 + $0x1f0] sm:$0xff]
  %v77 = vld [vmem:[%s0 + $0x1f8] sm:$0xff]
  %v78 = vld [vmem:[%s0 + $0x200] sm:$0xff]
  %v79 = vld [vmem:[%s0 + $0x208] sm:$0xff]
  %v80 = vld [vmem:[%s0 + $0x210] sm:$0xff]
  %v81 = vld [vmem:[%s0 + $0x218] sm:$0xff]
  %v82 = vld [vmem:[%s0 + $0x220] sm:$0xff]
  %v83 = vld [vmem:[%s0 + $0x228] sm:$0xff]
  %v84 = vld [vmem:[%s0 + $0x230] sm:$0xff]
  %v85 = vld [vmem:[%s0 + $0x238] sm:$0xff]
  %v86 = vld [vmem:[%s0 + $0x240] sm:$0xff]
  %v87 = vld [vmem:[%s0 + $0x248] sm:$0xff]
  %v88 = vld [vmem:[%s0 + $0x250] sm:$0xff]
  %v89 = vld [vmem:[%s0 + $0x258] sm:$0xff]
  %v90 = vld [vmem:[%s0 + $0x260] sm:$0xff]
  %v91 = vld [vmem:[%s0 + $0x268] sm:$0xff]
  %v92 = vld [vmem:[%s0 + $0x270] sm:$0x3]
  %v93 = vld [vmem:[%s0 + $0x278] sm:$0x3]
  %v94 = vld [vmem:[%s0 + $0x280] sm:$0x3]
  %v95 = vld [vmem:[%s0 + $0x288] sm:$0x3]
  %v96 = vld [vmem:[%s0 + $0x290] sm:$0x3]
  %v97 = vld [vmem:[%s0 + $0x298] sm:$0x3]
  %v98 = vld [vmem:[%s0 + $0x2a0] sm:$0x3]
  %v99 = vld [vmem:[%s0 + $0x2a8] sm:$0x3]
  %v100 = vld [vmem:[%s0 + $0x2b0] sm:$0x3]
  %v101 = vld [vmem:[%s0 + $0x2b8] sm:$0x3]
  %v102 = vld [vmem:[%s0 + $0x2c0] sm:$0x3]
  %v103 = vld [vmem:[%s0 + $0x2c8] sm:$0x3]
  %v104 = vld [vmem:[%s0 + $0x2d0] sm:$0x3]
  %v105 = vld [vmem:[%s1] sm:$0xff]
  %v106 = vld [vmem:[%s1 + $0x8] sm:$0xff]
  %v107 = vld [vmem:[%s1 + $0x10] sm:$0xff]
  %v108 = vld [vmem:[%s1 + $0x18] sm:$0xff]
  %v109 = vld [vmem:[%s1 + $0x20] sm:$0xff]
  %v110 = vld [vmem:[%s1 + $0x28] sm:$0xff]
  %v111 = vld [vmem:[%s1 + $0x30] sm:$0xff]
  %v112 = vld [vmem:[%s1 + $0x38] sm:$0xff]
  %v113 = vld [vmem:[%s1 + $0x40] sm:$0xff]
  %v114 = vld [vmem:[%s1 + $0x48] sm:$0xff]
  %v115 = vld [vmem:[%s1 + $0x50] sm:$0xff]
  %v116 = vld [vmem:[%s1 + $0x58] sm:$0xff]
  %v117 = vld [vmem:[%s1 + $0x60] sm:$0xff]
  %v118 = vld [vmem:[%s1 + $0x68] sm:$0xff]
  %v119 = vld [vmem:[%s1 + $0x70] sm:$0xff]
  %v120 = vld [vmem:[%s1 + $0x78] sm:$0xff]
  %v121 = vld [vmem:[%s1 + $0x80] sm:$0xff]
  %v122 = vld [vmem:[%s1 + $0x88] sm:$0xff]
  %v123 = vld [vmem:[%s1 + $0x90] sm:$0xff]
  %v124 = vld [vmem:[%s1 + $0x98] sm:$0xff]
  %v125 = vld [vmem:[%s1 + $0xa0] sm:$0xff]
  %v126 = vld [vmem:[%s1 + $0xa8] sm:$0xff]
  %v127 = vld [vmem:[%s1 + $0xb0] sm:$0xff]
  %v128 = vld [vmem:[%s1 + $0xb8] sm:$0xff]
  %v129 = vld [vmem:[%s1 + $0xc0] sm:$0xff]
  %v130 = vld [vmem:[%s1 + $0xc8] sm:$0xff]
  %v131 = vld [vmem:[%s1 + $0xd0] sm:$0xff]
  %v132 = vld [vmem:[%s1 + $0xd8] sm:$0xff]
  %v133 = vld [vmem:[%s1 + $0xe0] sm:$0xff]
  %v134 = vld [vmem:[%s1 + $0xe8] sm:$0xff]
  %v135 = vld [vmem:[%s1 + $0xf0] sm:$0xff]
  %v136 = vld [vmem:[%s1 + $0xf8] sm:$0xff]
  %v137 = vld [vmem:[%s1 + $0x100] sm:$0xff]
  %v138 = vld [vmem:[%s1 + $0x108] sm:$0xff]
  %v139 = vld [vmem:[%s1 + $0x110] sm:$0xff]
  %v140 = vld [vmem:[%s1 + $0x118] sm:$0xff]
  %v141 = vld [vmem:[%s1 + $0x120] sm:$0xff]
  %v142 = vld [vmem:[%s1 + $0x128] sm:$0xff]
  %v143 = vld [vmem:[%s1 + $0x130] sm:$0xff]
  %v144 = vld [vmem:[%s1 + $0x138] sm:$0xff]
  %v145 = vld [vmem:[%s1 + $0x140] sm:$0xff]
  %v146 = vld [vmem:[%s1 + $0x148] sm:$0xff]
  %v147 = vld [vmem:[%s1 + $0x150] sm:$0xff]
  %v148 = vld [vmem:[%s1 + $0x158] sm:$0xff]
  %v149 = vld [vmem:[%s1 + $0x160] sm:$0xff]
  %v150 = vld [vmem:[%s1 + $0x168] sm:$0xff]
  %v151 = vld [vmem:[%s1 + $0x170] sm:$0xff]
  %v152 = vld [vmem:[%s1 + $0x178] sm:$0xff]
  %v153 = vld [vmem:[%s1 + $0x180] sm:$0xff]
  %v154 = vld [vmem:[%s1 + $0x188] sm:$0xff]
  %v155 = vld [vmem:[%s1 + $0x190] sm:$0xff]
  %v156 = vld [vmem:[%s1 + $0x198] sm:$0xff]
  %v157 = vld [vmem:[%s1 + $0x1a0] sm:$0xff]
  %v158 = vld [vmem:[%s1 + $0x1a8] sm:$0xff]
  %v159 = vld [vmem:[%s1 + $0x1b0] sm:$0xff]
  %v160 = vld [vmem:[%s1 + $0x1b8] sm:$0xff]
  %v161 = vld [vmem:[%s1 + $0x1c0] sm:$0xff]
  %v162 = vld [vmem:[%s1 + $0x1c8] sm:$0xff]
  %v163 = vld [vmem:[%s1 + $0x1d0] sm:$0xff]
  %v164 = vld [vmem:[%s1 + $0x1d8] sm:$0xff]
  %v165 = vld [vmem:[%s1 + $0x1e0] sm:$0xff]
  %v166 = vld [vmem:[%s1 + $0x1e8] sm:$0xff]
  %v167 = vld [vmem:[%s1 + $0x1f0] sm:$0xff]
  %v168 = vld [vmem:[%s1 + $0x1f8] sm:$0xff]
  %v169 = vld [vmem:[%s1 + $0x200] sm:$0xff]
  %v170 = vld [vmem:[%s1 + $0x208] sm:$0xff]
  %v171 = vld [vmem:[%s1 + $0x210] sm:$0xff]
  %v172 = vld [vmem:[%s1 + $0x218] sm:$0xff]
  %v173 = vld [vmem:[%s1 + $0x220] sm:$0xff]
  %v174 = vld [vmem:[%s1 + $0x228] sm:$0xff]
  %v175 = vld [vmem:[%s1 + $0x230] sm:$0xff]
  %v176 = vld [vmem:[%s1 + $0x238] sm:$0xff]
  %v177 = vld [vmem:[%s1 + $0x240] sm:$0xff]
  %v178 = vld [vmem:[%s1 + $0x248] sm:$0xff]
  %v179 = vld [vmem:[%s1 + $0x250] sm:$0xff]
  %v180 = vld [vmem:[%s1 + $0x258] sm:$0xff]
  %v181 = vld [vmem:[%s1 + $0x260] sm:$0xff]
  %v182 = vld [vmem:[%s1 + $0x268] sm:$0xff]
  %v183 = vld [vmem:[%s1 + $0x270] sm:$0xff]
  %v184 = vld [vmem:[%s1 + $0x278] sm:$0xff]
  %v185 = vld [vmem:[%s1 + $0x280] sm:$0xff]
  %v186 = vld [vmem:[%s1 + $0x288] sm:$0xff]
  %v187 = vld [vmem:[%s1 + $0x290] sm:$0xff]
  %v188 = vld [vmem:[%s1 + $0x298] sm:$0xff]
  %v189 = vld [vmem:[%s1 + $0x2a0] sm:$0xff]
  %v190 = vld [vmem:[%s1 + $0x2a8] sm:$0xff]
  %v191 = vld [vmem:[%s1 + $0x2b0] sm:$0xff]
  %v192 = vld [vmem:[%s1 + $0x2b8] sm:$0xff]
  %v193 = vld [vmem:[%s1 + $0x2c0] sm:$0xff]
  %v194 = vld [vmem:[%s1 + $0x2c8] sm:$0xff]
  %v195 = vld [vmem:[%s1 + $0x2d0] sm:$0xff]
  %v196 = vld [vmem:[%s1 + $0x2d8] sm:$0xff]
  %v197 = vld [vmem:[%s1 + $0x2e0] sm:$0xff]
  %v198 = vld [vmem:[%s1 + $0x2e8] sm:$0xff]
  %v199 = vld [vmem:[%s1 + $0x2f0] sm:$0xff]
  %v200 = vld [vmem:[%s1 + $0x2f8] sm:$0xff]
  %v201 = vld [vmem:[%s1 + $0x300] sm:$0xff]
  %v202 = vld [vmem:[%s1 + $0x308] sm:$0xff]
  %v203 = vld [vmem:[%s1 + $0x310] sm:$0xff]
  %v204 = vld [vmem:[%s1 + $0x318] sm:$0xff]
  %v205 = vld [vmem:[%s1 + $0x320] sm:$0xff]
  %v206 = vld [vmem:[%s1 + $0x328] sm:$0xff]
  %v207 = vld [vmem:[%s1 + $0x330] sm:$0xff]
  %v208 = vld [vmem:[%s1 + $0x338] sm:$0xff]
  %v209 = vld [vmem:[%s1 + $0x340] sm:$0xff]
  %v210 = vld [vmem:[%s1 + $0x348] sm:$0xff]
  %v211 = vld [vmem:[%s1 + $0x350] sm:$0xff]
  %v212 = vld [vmem:[%s1 + $0x358] sm:$0xff]
  %v213 = vld [vmem:[%s1 + $0x360] sm:$0xff]
  %v214 = vld [vmem:[%s1 + $0x368] sm:$0xff]
  %v215 = vld [vmem:[%s1 + $0x370] sm:$0xff]
  %v216 = vld [vmem:[%s1 + $0x378] sm:$0xff]
  %v217 = vld [vmem:[%s1 + $0x380] sm:$0xff]
  %v218 = vld [vmem:[%s1 + $0x388] sm:$0xff]
  %v219 = vld [vmem:[%s1 + $0x390] sm:$0xff]
  %v220 = vld [vmem:[%s1 + $0x398] sm:$0xff]
  %v221 = vld [vmem:[%s1 + $0x3a0] sm:$0xff]
  %v222 = vld [vmem:[%s1 + $0x3a8] sm:$0xff]
  %v223 = vld [vmem:[%s1 + $0x3b0] sm:$0xff]
  %v224 = vld [vmem:[%s1 + $0x3b8] sm:$0xff]
  %v225 = vld [vmem:[%s1 + $0x3c0] sm:$0xff]
  %v226 = vld [vmem:[%s1 + $0x3c8] sm:$0xff]
  %v227 = vld [vmem:[%s1 + $0x3d0] sm:$0xff]
  %v228 = vld [vmem:[%s1 + $0x3d8] sm:$0xff]
  %v229 = vld [vmem:[%s1 + $0x3e0] sm:$0xff]
  %v230 = vld [vmem:[%s1 + $0x3e8] sm:$0xff]
  %v231 = vld [vmem:[%s1 + $0x3f0] sm:$0xff]
  %v232 = vld [vmem:[%s1 + $0x3f8] sm:$0xff]
  %v233 = vld [vmem:[%s1 + $0x400] sm:$0xff]
  %v234 = vld [vmem:[%s1 + $0x408] sm:$0xff]
  %v235 = vld [vmem:[%s1 + $0x410] sm:$0xff]
  %v236 = vld [vmem:[%s1 + $0x418] sm:$0xff]
  %v237 = vld [vmem:[%s1 + $0x420] sm:$0xff]
  %v238 = vld [vmem:[%s1 + $0x428] sm:$0xff]
  %v239 = vld [vmem:[%s1 + $0x430] sm:$0xff]
  %v240 = vld [vmem:[%s1 + $0x438] sm:$0xff]
  %v241 = vld [vmem:[%s1 + $0x440] sm:$0xff]
  %v242 = vld [vmem:[%s1 + $0x448] sm:$0xff]
  %v243 = vld [vmem:[%s1 + $0x450] sm:$0xff]
  %v244 = vld [vmem:[%s1 + $0x458] sm:$0xff]
  %v245 = vld [vmem:[%s1 + $0x460] sm:$0xff]
  %v246 = vld [vmem:[%s1 + $0x468] sm:$0xff]
  %v247 = vld [vmem:[%s1 + $0x470] sm:$0xff]
  %v248 = vld [vmem:[%s1 + $0x478] sm:$0xff]
  %v249 = vld [vmem:[%s1 + $0x480] sm:$0xff]
  %v250 = vld [vmem:[%s1 + $0x488] sm:$0xff]
  %v251 = vld [vmem:[%s1 + $0x490] sm:$0xff]
  %v252 = vld [vmem:[%s1 + $0x498] sm:$0xff]
  %v253 = vld [vmem:[%s1 + $0x4a0] sm:$0xff]
  %v254 = vld [vmem:[%s1 + $0x4a8] sm:$0xff]
  %v255 = vld [vmem:[%s1 + $0x4b0] sm:$0xff]
  %v256 = vld [vmem:[%s1 + $0x4b8] sm:$0xff]
  %v257 = vld [vmem:[%s1 + $0x4c0] sm:$0xff]
  %v258 = vld [vmem:[%s1 + $0x4c8] sm:$0xff]
  %v259 = vld [vmem:[%s1 + $0x4d0] sm:$0xff]
  %v260 = vld [vmem:[%s1 + $0x4d8] sm:$0xff]
  %v261 = vld [vmem:[%s1 + $0x4e0] sm:$0xff]
  %v262 = vld [vmem:[%s1 + $0x4e8] sm:$0xff]
  %v263 = vld [vmem:[%s1 + $0x4f0] sm:$0xff]
  %v264 = vld [vmem:[%s1 + $0x4f8] sm:$0xff]
  %v265 = vld [vmem:[%s1 + $0x500] sm:$0xff]
  %v266 = vld [vmem:[%s1 + $0x508] sm:$0xff]
  %v267 = vld [vmem:[%s1 + $0x510] sm:$0xff]
  %v268 = vld [vmem:[%s1 + $0x518] sm:$0xff]
  %v269 = vld [vmem:[%s1 + $0x520] sm:$0xff]
  %v270 = vld [vmem:[%s1 + $0x528] sm:$0xff]
  %v271 = vld [vmem:[%s1 + $0x530] sm:$0xff]
  %v272 = vld [vmem:[%s1 + $0x538] sm:$0xff]
  %v273 = vld [vmem:[%s1 + $0x540] sm:$0xff]
  %v274 = vld [vmem:[%s1 + $0x548] sm:$0xff]
  %v275 = vld [vmem:[%s1 + $0x550] sm:$0xff]
  %v276 = vld [vmem:[%s1 + $0x558] sm:$0xff]
  %v277 = vld [vmem:[%s1 + $0x560] sm:$0xff]
  %v278 = vld [vmem:[%s1 + $0x568] sm:$0xff]
  %v279 = vld [vmem:[%s1 + $0x570] sm:$0xff]
  %v280 = vld [vmem:[%s1 + $0x578] sm:$0xff]
  %v281 = vld [vmem:[%s1 + $0x580] sm:$0xff]
  %v282 = vld [vmem:[%s1 + $0x588] sm:$0xff]
  %v283 = vld [vmem:[%s1 + $0x590] sm:$0xff]
  %v284 = vld [vmem:[%s1 + $0x598] sm:$0xff]
  %v285 = vld [vmem:[%s1 + $0x5a0] sm:$0xff]
  %v286 = vld [vmem:[%s1 + $0x5a8] sm:$0xff]
  %v287 = vld [vmem:[%s1 + $0x5b0] sm:$0xff]
  %v288 = vld [vmem:[%s1 + $0x5b8] sm:$0xff]
  %v289 = vld [vmem:[%s1 + $0x5c0] sm:$0xff]
  %v290 = vld [vmem:[%s1 + $0x5c8] sm:$0xff]
  %v291 = vld [vmem:[%s1 + $0x5d0] sm:$0xff]
  %v292 = vld [vmem:[%s1 + $0x5d8] sm:$0xff]
  %v293 = vld [vmem:[%s1 + $0x5e0] sm:$0xff]
  %v294 = vld [vmem:[%s1 + $0x5e8] sm:$0xff]
  %v295 = vld [vmem:[%s1 + $0x5f0] sm:$0xff]
  %v296 = vld [vmem:[%s1 + $0x5f8] sm:$0xff]
  %v297 = vld [vmem:[%s1 + $0x600] sm:$0xff]
  %v298 = vld [vmem:[%s1 + $0x608] sm:$0xff]
  %v299 = vld [vmem:[%s1 + $0x610] sm:$0xff]
  %v300 = vld [vmem:[%s1 + $0x618] sm:$0xff]
  %v301 = vld [vmem:[%s1 + $0x620] sm:$0xff]
  %v302 = vld [vmem:[%s1 + $0x628] sm:$0xff]
  %v303 = vld [vmem:[%s1 + $0x630] sm:$0xff]
  %v304 = vld [vmem:[%s1 + $0x638] sm:$0xff]
  %v305 = vld [vmem:[%s2] sm:$0x1]
  %v307 = vlaneseq
  %v308 = vshrl.u32 %v307, 7
  %v309 = vsub.s32 0, %v308
  %v310 = vrot.slane %v305, %v309
  %vm312 = vcmask 523264
  %v314 = vsel %vm312, %v26, 0
  %v317 = vsel %vm312, %v39, 0
  %v320 = vsel %vm312, %v52, 0
  %v323 = vsel %vm312, %v65, 0
  %v326 = vsel %vm312, %v78, 0
  %v329 = vsel %vm312, %v91, 0
  %v332 = vsel %vm312, %v104, 0
  %334 = vmatprep.subr.mxu0 0.0
  %335 = vmatpush1.msra.mxu0 %v105
  %336 = vmatprep.subr.mxu0 0.0
  %337 = vmatpush1.msra.mxu0 %v106
  %338 = vmatprep.subr.mxu0 0.0
  %339 = vmatpush1.msra.mxu0 %v107
  %340 = vmatprep.subr.mxu0 0.0
  %341 = vmatpush1.msra.mxu0 %v108
  %342 = vmatprep.subr.mxu0 0.0
  %343 = vmatpush1.msra.mxu0 %v109
  %344 = vmatprep.subr.mxu0 0.0
  %345 = vmatpush1.msra.mxu0 %v110
  %346 = vmatprep.subr.mxu0 0.0
  %347 = vmatpush1.msra.mxu0 %v111
  %348 = vmatprep.subr.mxu0 0.0
  %349 = vmatpush1.msra.mxu0 %v112
  %350 = vmatprep.subr.mxu0 0.0
  %351 = vmatpush1.msra.mxu0 %v113
  %352 = vmatprep.subr.mxu0 0.0
  %353 = vmatpush1.msra.mxu0 %v114
  %354 = vmatprep.subr.mxu0 0.0
  %355 = vmatpush1.msra.mxu0 %v115
  %356 = vmatprep.subr.mxu0 0.0
  %357 = vmatpush1.msra.mxu0 %v116
  %358 = vmatprep.subr.mxu0 0.0
  %359 = vmatpush1.msra.mxu0 %v117
  %360 = vmatprep.subr.mxu0 0.0
  %361 = vmatpush1.msra.mxu0 %v118
  %362 = vmatprep.subr.mxu0 0.0
  %363 = vmatpush1.msra.mxu0 %v119
  %364 = vmatprep.subr.mxu0 0.0
  %365 = vmatpush1.msra.mxu0 %v120
  %366 = vmatprep.subr.mxu0 0.0
  %367 = vmatpush1.msra.mxu0 %v121
  %368 = vmatprep.subr.mxu0 0.0
  %369 = vmatpush1.msra.mxu0 %v122
  %370 = vmatprep.subr.mxu0 0.0
  %371 = vmatpush1.msra.mxu0 %v123
  %372 = vmatprep.subr.mxu0 0.0
  %373 = vmatpush1.msra.mxu0 %v124
  %374 = vmatprep.subr.mxu0 0.0
  %375 = vmatpush1.msra.mxu0 %v125
  %376 = vmatprep.subr.mxu0 0.0
  %377 = vmatpush1.msra.mxu0 %v126
  %378 = vmatprep.subr.mxu0 0.0
  %379 = vmatpush1.msra.mxu0 %v127
  %380 = vmatprep.subr.mxu0 0.0
  %381 = vmatpush1.msra.mxu0 %v128
  %382 = vmatprep.subr.mxu0 0.0
  %383 = vmatpush1.msra.mxu0 %v129
  %384 = vmatprep.subr.mxu0 0.0
  %385 = vmatpush1.msra.mxu0 %v130
  %386 = vmatprep.subr.mxu0 0.0
  %387 = vmatpush1.msra.mxu0 %v131
  %388 = vmatprep.subr.mxu0 0.0
  %389 = vmatpush1.msra.mxu0 %v132
  %390 = vmatprep.subr.mxu0 0.0
  %391 = vmatpush1.msra.mxu0 %v133
  %392 = vmatprep.subr.mxu0 0.0
  %393 = vmatpush1.msra.mxu0 %v134
  %394 = vmatprep.subr.mxu0 0.0
  %395 = vmatpush1.msra.mxu0 %v135
  %396 = vmatprep.subr.mxu0 0.0
  %397 = vmatpush1.msra.mxu0 %v136
  %398 = vmatprep.mubr.f32.mxu0 %v15
  %399 = vmatmul.mubr.f32.gmra.mrb[0].mxu0 %v14
  %v400 = vpop.f32.mrb[0].mxu0
  %v401 = vadd.f32 %v310, %v400
  %v402 = vpop.f32.mrb[0].mxu0
  %403 = vmatprep.mubr.f32.mxu0 %v28
  %404 = vmatmul.mubr.f32.gmra.mrb[0].mxu0 %v27
  %v405 = vpop.f32.mrb[0].mxu0
  %v406 = vadd.f32 %v310, %v405
  %v407 = vpop.f32.mrb[0].mxu0
  %408 = vmatprep.mubr.f32.mxu0 %v41
  %409 = vmatmul.mubr.f32.gmra.mrb[0].mxu0 %v40
  %v410 = vpop.f32.mrb[0].mxu0
  %v411 = vadd.f32 %v310, %v410
  %v412 = vpop.f32.mrb[0].mxu0
  %413 = vmatprep.mubr.f32.mxu0 %v54
  %414 = vmatmul.mubr.f32.gmra.mrb[0].mxu0 %v53
  %v415 = vpop.f32.mrb[0].mxu0
  %v416 = vadd.f32 %v310, %v415
  %v417 = vpop.f32.mrb[0].mxu0
  %418 = vmatprep.mubr.f32.mxu0 %v67
  %419 = vmatmul.mubr.f32.gmra.mrb[0].mxu0 %v66
  %v420 = vpop.f32.mrb[0].mxu0
  %v421 = vadd.f32 %v310, %v420
  %v422 = vpop.f32.mrb[0].mxu0
  %423 = vmatprep.mubr.f32.mxu0 %v80
  %424 = vmatmul.mubr.f32.gmra.mrb[0].mxu0 %v79
  %v425 = vpop.f32.mrb[0].mxu0
  %v426 = vadd.f32 %v310, %v425
  %v427 = vpop.f32.mrb[0].mxu0
  %428 = vmatprep.mubr.f32.mxu0 %v93
  %429 = vmatmul.mubr.f32.gmra.mrb[0].mxu0 %v92
  %v430 = vpop.f32.mrb[0].mxu0
  %v431 = vadd.f32 %v310, %v430
  %v432 = vpop.f32.mrb[0].mxu0
  %433 = vdwg.mxu0
  %434 = vmatprep.subr.mxu0 0.0
  %435 = vmatpush1.msra.mxu0 %v137
  %436 = vmatprep.subr.mxu0 0.0
  %437 = vmatpush1.msra.mxu0 %v138
  %438 = vmatprep.subr.mxu0 0.0
  %439 = vmatpush1.msra.mxu0 %v139
  %440 = vmatprep.subr.mxu0 0.0
  %441 = vmatpush1.msra.mxu0 %v140
  %442 = vmatprep.subr.mxu0 0.0
  %443 = vmatpush1.msra.mxu0 %v141
  %444 = vmatprep.subr.mxu0 0.0
  %445 = vmatpush1.msra.mxu0 %v142
  %446 = vmatprep.subr.mxu0 0.0
  %447 = vmatpush1.msra.mxu0 %v143
  %448 = vmatprep.subr.mxu0 0.0
  %449 = vmatpush1.msra.mxu0 %v144
  %450 = vmatprep.subr.mxu0 0.0
  %451 = vmatpush1.msra.mxu0 %v145
  %452 = vmatprep.subr.mxu0 0.0
  %453 = vmatpush1.msra.mxu0 %v146
  %454 = vmatprep.subr.mxu0 0.0
  %455 = vmatpush1.msra.mxu0 %v147
  %456 = vmatprep.subr.mxu0 0.0
  %457 = vmatpush1.msra.mxu0 %v148
  %458 = vmatprep.subr.mxu0 0.0
  %459 = vmatpush1.msra.mxu0 %v149
  %460 = vmatprep.subr.mxu0 0.0
  %461 = vmatpush1.msra.mxu0 %v150
  %462 = vmatprep.subr.mxu0 0.0
  %463 = vmatpush1.msra.mxu0 %v151
  %464 = vmatprep.subr.mxu0 0.0
  %465 = vmatpush1.msra.mxu0 %v152
  %466 = vmatprep.subr.mxu0 0.0
  %467 = vmatpush1.msra.mxu0 %v153
  %468 = vmatprep.subr.mxu0 0.0
  %469 = vmatpush1.msra.mxu0 %v154
  %470 = vmatprep.subr.mxu0 0.0
  %471 = vmatpush1.msra.mxu0 %v155
  %472 = vmatprep.subr.mxu0 0.0
  %473 = vmatpush1.msra.mxu0 %v156
  %474 = vmatprep.subr.mxu0 0.0
  %475 = vmatpush1.msra.mxu0 %v157
  %476 = vmatprep.subr.mxu0 0.0
  %477 = vmatpush1.msra.mxu0 %v158
  %478 = vmatprep.subr.mxu0 0.0
  %479 = vmatpush1.msra.mxu0 %v159
  %480 = vmatprep.subr.mxu0 0.0
  %481 = vmatpush1.msra.mxu0 %v160
  %482 = vmatprep.subr.mxu0 0.0
  %483 = vmatpush1.msra.mxu0 %v161
  %484 = vmatprep.subr.mxu0 0.0
  %485 = vmatpush1.msra.mxu0 %v162
  %486 = vmatprep.subr.mxu0 0.0
  %487 = vmatpush1.msra.mxu0 %v163
  %488 = vmatprep.subr.mxu0 0.0
  %489 = vmatpush1.msra.mxu0 %v164
  %490 = vmatprep.subr.mxu0 0.0
  %491 = vmatpush1.msra.mxu0 %v165
  %492 = vmatprep.subr.mxu0 0.0
  %493 = vmatpush1.msra.mxu0 %v166
  %494 = vmatprep.subr.mxu0 0.0
  %495 = vmatpush1.msra.mxu0 %v167
  %496 = vmatprep.subr.mxu0 0.0
  %497 = vmatpush1.msra.mxu0 %v168
  %498 = vmatprep.mubr.f32.mxu0 %v17
  %499 = vmatmul.mubr.f32.gmra.mrb[0].mxu0 %v16
  %v500 = vpop.f32.mrb[0].mxu0
  %v501 = vadd.f32 %v401, %v500
  %v502 = vpop.f32.mrb[0].mxu0
  %503 = vmatprep.mubr.f32.mxu0 %v30
  %504 = vmatmul.mubr.f32.gmra.mrb[0].mxu0 %v29
  %v505 = vpop.f32.mrb[0].mxu0
  %v506 = vadd.f32 %v406, %v505
  %v507 = vpop.f32.mrb[0].mxu0
  %508 = vmatprep.mubr.f32.mxu0 %v43
  %509 = vmatmul.mubr.f32.gmra.mrb[0].mxu0 %v42
  %v510 = vpop.f32.mrb[0].mxu0
  %v511 = vadd.f32 %v411, %v510
  %v512 = vpop.f32.mrb[0].mxu0
  %513 = vmatprep.mubr.f32.mxu0 %v56
  %514 = vmatmul.mubr.f32.gmra.mrb[0].mxu0 %v55
  %v515 = vpop.f32.mrb[0].mxu0
  %v516 = vadd.f32 %v416, %v515
  %v517 = vpop.f32.mrb[0].mxu0
  %518 = vmatprep.mubr.f32.mxu0 %v69
  %519 = vmatmul.mubr.f32.gmra.mrb[0].mxu0 %v68
  %v520 = vpop.f32.mrb[0].mxu0
  %v521 = vadd.f32 %v421, %v520
  %v522 = vpop.f32.mrb[0].mxu0
  %523 = vmatprep.mubr.f32.mxu0 %v82
  %524 = vmatmul.mubr.f32.gmra.mrb[0].mxu0 %v81
  %v525 = vpop.f32.mrb[0].mxu0
  %v526 = vadd.f32 %v426, %v525
  %v527 = vpop.f32.mrb[0].mxu0
  %528 = vmatprep.mubr.f32.mxu0 %v95
  %529 = vmatmul.mubr.f32.gmra.mrb[0].mxu0 %v94
  %v530 = vpop.f32.mrb[0].mxu0
  %v531 = vadd.f32 %v431, %v530
  %v532 = vpop.f32.mrb[0].mxu0
  %533 = vdwg.mxu0
  %534 = vmatprep.subr.mxu0 0.0
  %535 = vmatpush1.msra.mxu0 %v169
  %536 = vmatprep.subr.mxu0 0.0
  %537 = vmatpush1.msra.mxu0 %v170
  %538 = vmatprep.subr.mxu0 0.0
  %539 = vmatpush1.msra.mxu0 %v171
  %540 = vmatprep.subr.mxu0 0.0
  %541 = vmatpush1.msra.mxu0 %v172
  %542 = vmatprep.subr.mxu0 0.0
  %543 = vmatpush1.msra.mxu0 %v173
  %544 = vmatprep.subr.mxu0 0.0
  %545 = vmatpush1.msra.mxu0 %v174
  %546 = vmatprep.subr.mxu0 0.0
  %547 = vmatpush1.msra.mxu0 %v175
  %548 = vmatprep.subr.mxu0 0.0
  %549 = vmatpush1.msra.mxu0 %v176
  %550 = vmatprep.subr.mxu0 0.0
  %551 = vmatpush1.msra.mxu0 %v177
  %552 = vmatprep.subr.mxu0 0.0
  %553 = vmatpush1.msra.mxu0 %v178
  %554 = vmatprep.subr.mxu0 0.0
  %555 = vmatpush1.msra.mxu0 %v179
  %556 = vmatprep.subr.mxu0 0.0
  %557 = vmatpush1.msra.mxu0 %v180
  %558 = vmatprep.subr.mxu0 0.0
  %559 = vmatpush1.msra.mxu0 %v181
  %560 = vmatprep.subr.mxu0 0.0
  %561 = vmatpush1.msra.mxu0 %v182
  %562 = vmatprep.subr.mxu0 0.0
  %563 = vmatpush1.msra.mxu0 %v183
  %564 = vmatprep.subr.mxu0 0.0
  %565 = vmatpush1.msra.mxu0 %v184
  %566 = vmatprep.subr.mxu0 0.0
  %567 = vmatpush1.msra.mxu0 %v185
  %568 = vmatprep.subr.mxu0 0.0
  %569 = vmatpush1.msra.mxu0 %v186
  %570 = vmatprep.subr.mxu0 0.0
  %571 = vmatpush1.msra.mxu0 %v187
  %572 = vmatprep.subr.mxu0 0.0
  %573 = vmatpush1.msra.mxu0 %v188
  %574 = vmatprep.subr.mxu0 0.0
  %575 = vmatpush1.msra.mxu0 %v189
  %576 = vmatprep.subr.mxu0 0.0
  %577 = vmatpush1.msra.mxu0 %v190
  %578 = vmatprep.subr.mxu0 0.0
  %579 = vmatpush1.msra.mxu0 %v191
  %580 = vmatprep.subr.mxu0 0.0
  %581 = vmatpush1.msra.mxu0 %v192
  %582 = vmatprep.subr.mxu0 0.0
  %583 = vmatpush1.msra.mxu0 %v193
  %584 = vmatprep.subr.mxu0 0.0
  %585 = vmatpush1.msra.mxu0 %v194
  %586 = vmatprep.subr.mxu0 0.0
  %587 = vmatpush1.msra.mxu0 %v195
  %588 = vmatprep.subr.mxu0 0.0
  %589 = vmatpush1.msra.mxu0 %v196
  %590 = vmatprep.subr.mxu0 0.0
  %591 = vmatpush1.msra.mxu0 %v197
  %592 = vmatprep.subr.mxu0 0.0
  %593 = vmatpush1.msra.mxu0 %v198
  %594 = vmatprep.subr.mxu0 0.0
  %595 = vmatpush1.msra.mxu0 %v199
  %596 = vmatprep.subr.mxu0 0.0
  %597 = vmatpush1.msra.mxu0 %v200
  %598 = vmatprep.mubr.f32.mxu0 %v19
  %599 = vmatmul.mubr.f32.gmra.mrb[0].mxu0 %v18
  %v600 = vpop.f32.mrb[0].mxu0
  %v601 = vadd.f32 %v501, %v600
  %v602 = vpop.f32.mrb[0].mxu0
  %603 = vmatprep.mubr.f32.mxu0 %v32
  %604 = vmatmul.mubr.f32.gmra.mrb[0].mxu0 %v31
  %v605 = vpop.f32.mrb[0].mxu0
  %v606 = vadd.f32 %v506, %v605
  %v607 = vpop.f32.mrb[0].mxu0
  %608 = vmatprep.mubr.f32.mxu0 %v45
  %609 = vmatmul.mubr.f32.gmra.mrb[0].mxu0 %v44
  %v610 = vpop.f32.mrb[0].mxu0
  %v611 = vadd.f32 %v511, %v610
  %v612 = vpop.f32.mrb[0].mxu0
  %613 = vmatprep.mubr.f32.mxu0 %v58
  %614 = vmatmul.mubr.f32.gmra.mrb[0].mxu0 %v57
  %v615 = vpop.f32.mrb[0].mxu0
  %v616 = vadd.f32 %v516, %v615
  %v617 = vpop.f32.mrb[0].mxu0
  %618 = vmatprep.mubr.f32.mxu0 %v71
  %619 = vmatmul.mubr.f32.gmra.mrb[0].mxu0 %v70
  %v620 = vpop.f32.mrb[0].mxu0
  %v621 = vadd.f32 %v521, %v620
  %v622 = vpop.f32.mrb[0].mxu0
  %623 = vmatprep.mubr.f32.mxu0 %v84
  %624 = vmatmul.mubr.f32.gmra.mrb[0].mxu0 %v83
  %v625 = vpop.f32.mrb[0].mxu0
  %v626 = vadd.f32 %v526, %v625
  %v627 = vpop.f32.mrb[0].mxu0
  %628 = vmatprep.mubr.f32.mxu0 %v97
  %629 = vmatmul.mubr.f32.gmra.mrb[0].mxu0 %v96
  %v630 = vpop.f32.mrb[0].mxu0
  %v631 = vadd.f32 %v531, %v630
  %v632 = vpop.f32.mrb[0].mxu0
  %633 = vdwg.mxu0
  %634 = vmatprep.subr.mxu0 0.0
  %635 = vmatpush1.msra.mxu0 %v201
  %636 = vmatprep.subr.mxu0 0.0
  %637 = vmatpush1.msra.mxu0 %v202
  %638 = vmatprep.subr.mxu0 0.0
  %639 = vmatpush1.msra.mxu0 %v203
  %640 = vmatprep.subr.mxu0 0.0
  %641 = vmatpush1.msra.mxu0 %v204
  %642 = vmatprep.subr.mxu0 0.0
  %643 = vmatpush1.msra.mxu0 %v205
  %644 = vmatprep.subr.mxu0 0.0
  %645 = vmatpush1.msra.mxu0 %v206
  %646 = vmatprep.subr.mxu0 0.0
  %647 = vmatpush1.msra.mxu0 %v207
  %648 = vmatprep.subr.mxu0 0.0
  %649 = vmatpush1.msra.mxu0 %v208
  %650 = vmatprep.subr.mxu0 0.0
  %651 = vmatpush1.msra.mxu0 %v209
  %652 = vmatprep.subr.mxu0 0.0
  %653 = vmatpush1.msra.mxu0 %v210
  %654 = vmatprep.subr.mxu0 0.0
  %655 = vmatpush1.msra.mxu0 %v211
  %656 = vmatprep.subr.mxu0 0.0
  %657 = vmatpush1.msra.mxu0 %v212
  %658 = vmatprep.subr.mxu0 0.0
  %659 = vmatpush1.msra.mxu0 %v213
  %660 = vmatprep.subr.mxu0 0.0
  %661 = vmatpush1.msra.mxu0 %v214
  %662 = vmatprep.subr.mxu0 0.0
  %663 = vmatpush1.msra.mxu0 %v215
  %664 = vmatprep.subr.mxu0 0.0
  %665 = vmatpush1.msra.mxu0 %v216
  %666 = vmatprep.subr.mxu0 0.0
  %667 = vmatpush1.msra.mxu0 %v217
  %668 = vmatprep.subr.mxu0 0.0
  %669 = vmatpush1.msra.mxu0 %v218
  %670 = vmatprep.subr.mxu0 0.0
  %671 = vmatpush1.msra.mxu0 %v219
  %672 = vmatprep.subr.mxu0 0.0
  %673 = vmatpush1.msra.mxu0 %v220
  %674 = vmatprep.subr.mxu0 0.0
  %675 = vmatpush1.msra.mxu0 %v221
  %676 = vmatprep.subr.mxu0 0.0
  %677 = vmatpush1.msra.mxu0 %v222
  %678 = vmatprep.subr.mxu0 0.0
  %679 = vmatpush1.msra.mxu0 %v223
  %680 = vmatprep.subr.mxu0 0.0
  %681 = vmatpush1.msra.mxu0 %v224
  %682 = vmatprep.subr.mxu0 0.0
  %683 = vmatpush1.msra.mxu0 %v225
  %684 = vmatprep.subr.mxu0 0.0
  %685 = vmatpush1.msra.mxu0 %v226
  %686 = vmatprep.subr.mxu0 0.0
  %687 = vmatpush1.msra.mxu0 %v227
  %688 = vmatprep.subr.mxu0 0.0
  %689 = vmatpush1.msra.mxu0 %v228
  %690 = vmatprep.subr.mxu0 0.0
  %691 = vmatpush1.msra.mxu0 %v229
  %692 = vmatprep.subr.mxu0 0.0
  %693 = vmatpush1.msra.mxu0 %v230
  %694 = vmatprep.subr.mxu0 0.0
  %695 = vmatpush1.msra.mxu0 %v231
  %696 = vmatprep.subr.mxu0 0.0
  %697 = vmatpush1.msra.mxu0 %v232
  %698 = vmatprep.mubr.f32.mxu0 %v21
  %699 = vmatmul.mubr.f32.gmra.mrb[0].mxu0 %v20
  %v700 = vpop.f32.mrb[0].mxu0
  %v701 = vadd.f32 %v601, %v700
  %v702 = vpop.f32.mrb[0].mxu0
  %703 = vmatprep.mubr.f32.mxu0 %v34
  %704 = vmatmul.mubr.f32.gmra.mrb[0].mxu0 %v33
  %v705 = vpop.f32.mrb[0].mxu0
  %v706 = vadd.f32 %v606, %v705
  %v707 = vpop.f32.mrb[0].mxu0
  %708 = vmatprep.mubr.f32.mxu0 %v47
  %709 = vmatmul.mubr.f32.gmra.mrb[0].mxu0 %v46
  %v710 = vpop.f32.mrb[0].mxu0
  %v711 = vadd.f32 %v611, %v710
  %v712 = vpop.f32.mrb[0].mxu0
  %713 = vmatprep.mubr.f32.mxu0 %v60
  %714 = vmatmul.mubr.f32.gmra.mrb[0].mxu0 %v59
  %v715 = vpop.f32.mrb[0].mxu0
  %v716 = vadd.f32 %v616, %v715
  %v717 = vpop.f32.mrb[0].mxu0
  %718 = vmatprep.mubr.f32.mxu0 %v73
  %719 = vmatmul.mubr.f32.gmra.mrb[0].mxu0 %v72
  %v720 = vpop.f32.mrb[0].mxu0
  %v721 = vadd.f32 %v621, %v720
  %v722 = vpop.f32.mrb[0].mxu0
  %723 = vmatprep.mubr.f32.mxu0 %v86
  %724 = vmatmul.mubr.f32.gmra.mrb[0].mxu0 %v85
  %v725 = vpop.f32.mrb[0].mxu0
  %v726 = vadd.f32 %v626, %v725
  %v727 = vpop.f32.mrb[0].mxu0
  %728 = vmatprep.mubr.f32.mxu0 %v99
  %729 = vmatmul.mubr.f32.gmra.mrb[0].mxu0 %v98
  %v730 = vpop.f32.mrb[0].mxu0
  %v731 = vadd.f32 %v631, %v730
  %v732 = vpop.f32.mrb[0].mxu0
  %733 = vdwg.mxu0
  %734 = vmatprep.subr.mxu0 0.0
  %735 = vmatpush1.msra.mxu0 %v233
  %736 = vmatprep.subr.mxu0 0.0
  %737 = vmatpush1.msra.mxu0 %v234
  %738 = vmatprep.subr.mxu0 0.0
  %739 = vmatpush1.msra.mxu0 %v235
  %740 = vmatprep.subr.mxu0 0.0
  %741 = vmatpush1.msra.mxu0 %v236
  %742 = vmatprep.subr.mxu0 0.0
  %743 = vmatpush1.msra.mxu0 %v237
  %744 = vmatprep.subr.mxu0 0.0
  %745 = vmatpush1.msra.mxu0 %v238
  %746 = vmatprep.subr.mxu0 0.0
  %747 = vmatpush1.msra.mxu0 %v239
  %748 = vmatprep.subr.mxu0 0.0
  %749 = vmatpush1.msra.mxu0 %v240
  %750 = vmatprep.subr.mxu0 0.0
  %751 = vmatpush1.msra.mxu0 %v241
  %752 = vmatprep.subr.mxu0 0.0
  %753 = vmatpush1.msra.mxu0 %v242
  %754 = vmatprep.subr.mxu0 0.0
  %755 = vmatpush1.msra.mxu0 %v243
  %756 = vmatprep.subr.mxu0 0.0
  %757 = vmatpush1.msra.mxu0 %v244
  %758 = vmatprep.subr.mxu0 0.0
  %759 = vmatpush1.msra.mxu0 %v245
  %760 = vmatprep.subr.mxu0 0.0
  %761 = vmatpush1.msra.mxu0 %v246
  %762 = vmatprep.subr.mxu0 0.0
  %763 = vmatpush1.msra.mxu0 %v247
  %764 = vmatprep.subr.mxu0 0.0
  %765 = vmatpush1.msra.mxu0 %v248
  %766 = vmatprep.subr.mxu0 0.0
  %767 = vmatpush1.msra.mxu0 %v249
  %768 = vmatprep.subr.mxu0 0.0
  %769 = vmatpush1.msra.mxu0 %v250
  %770 = vmatprep.subr.mxu0 0.0
  %771 = vmatpush1.msra.mxu0 %v251
  %772 = vmatprep.subr.mxu0 0.0
  %773 = vmatpush1.msra.mxu0 %v252
  %774 = vmatprep.subr.mxu0 0.0
  %775 = vmatpush1.msra.mxu0 %v253
  %776 = vmatprep.subr.mxu0 0.0
  %777 = vmatpush1.msra.mxu0 %v254
  %778 = vmatprep.subr.mxu0 0.0
  %779 = vmatpush1.msra.mxu0 %v255
  %780 = vmatprep.subr.mxu0 0.0
  %781 = vmatpush1.msra.mxu0 %v256
  %782 = vmatprep.subr.mxu0 0.0
  %783 = vmatpush1.msra.mxu0 %v257
  %784 = vmatprep.subr.mxu0 0.0
  %785 = vmatpush1.msra.mxu0 %v258
  %786 = vmatprep.subr.mxu0 0.0
  %787 = vmatpush1.msra.mxu0 %v259
  %788 = vmatprep.subr.mxu0 0.0
  %789 = vmatpush1.msra.mxu0 %v260
  %790 = vmatprep.subr.mxu0 0.0
  %791 = vmatpush1.msra.mxu0 %v261
  %792 = vmatprep.subr.mxu0 0.0
  %793 = vmatpush1.msra.mxu0 %v262
  %794 = vmatprep.subr.mxu0 0.0
  %795 = vmatpush1.msra.mxu0 %v263
  %796 = vmatprep.subr.mxu0 0.0
  %797 = vmatpush1.msra.mxu0 %v264
  %798 = vmatprep.mubr.f32.mxu0 %v23
  %799 = vmatmul.mubr.f32.gmra.mrb[0].mxu0 %v22
  %v800 = vpop.f32.mrb[0].mxu0
  %v801 = vadd.f32 %v701, %v800
  %v802 = vpop.f32.mrb[0].mxu0
  %803 = vmatprep.mubr.f32.mxu0 %v36
  %804 = vmatmul.mubr.f32.gmra.mrb[0].mxu0 %v35
  %v805 = vpop.f32.mrb[0].mxu0
  %v806 = vadd.f32 %v706, %v805
  %v807 = vpop.f32.mrb[0].mxu0
  %808 = vmatprep.mubr.f32.mxu0 %v49
  %809 = vmatmul.mubr.f32.gmra.mrb[0].mxu0 %v48
  %v810 = vpop.f32.mrb[0].mxu0
  %v811 = vadd.f32 %v711, %v810
  %v812 = vpop.f32.mrb[0].mxu0
  %813 = vmatprep.mubr.f32.mxu0 %v62
  %814 = vmatmul.mubr.f32.gmra.mrb[0].mxu0 %v61
  %v815 = vpop.f32.mrb[0].mxu0
  %v816 = vadd.f32 %v716, %v815
  %v817 = vpop.f32.mrb[0].mxu0
  %818 = vmatprep.mubr.f32.mxu0 %v75
  %819 = vmatmul.mubr.f32.gmra.mrb[0].mxu0 %v74
  %v820 = vpop.f32.mrb[0].mxu0
  %v821 = vadd.f32 %v721, %v820
  %v822 = vpop.f32.mrb[0].mxu0
  %823 = vmatprep.mubr.f32.mxu0 %v88
  %824 = vmatmul.mubr.f32.gmra.mrb[0].mxu0 %v87
  %v825 = vpop.f32.mrb[0].mxu0
  %v826 = vadd.f32 %v726, %v825
  %v827 = vpop.f32.mrb[0].mxu0
  %828 = vmatprep.mubr.f32.mxu0 %v101
  %829 = vmatmul.mubr.f32.gmra.mrb[0].mxu0 %v100
  %v830 = vpop.f32.mrb[0].mxu0
  %v831 = vadd.f32 %v731, %v830
  %v832 = vpop.f32.mrb[0].mxu0
  %833 = vdwg.mxu0
  %834 = vmatprep.subr.mxu0 0.0
  %835 = vmatpush1.msra.mxu0 %v265
  %836 = vmatprep.subr.mxu0 0.0
  %837 = vmatpush1.msra.mxu0 %v266
  %838 = vmatprep.subr.mxu0 0.0
  %839 = vmatpush1.msra.mxu0 %v267
  %840 = vmatprep.subr.mxu0 0.0
  %841 = vmatpush1.msra.mxu0 %v268
  %842 = vmatprep.subr.mxu0 0.0
  %843 = vmatpush1.msra.mxu0 %v269
  %844 = vmatprep.subr.mxu0 0.0
  %845 = vmatpush1.msra.mxu0 %v270
  %846 = vmatprep.subr.mxu0 0.0
  %847 = vmatpush1.msra.mxu0 %v271
  %848 = vmatprep.subr.mxu0 0.0
  %849 = vmatpush1.msra.mxu0 %v272
  %850 = vmatprep.subr.mxu0 0.0
  %851 = vmatpush1.msra.mxu0 %v273
  %852 = vmatprep.subr.mxu0 0.0
  %853 = vmatpush1.msra.mxu0 %v274
  %854 = vmatprep.subr.mxu0 0.0
  %855 = vmatpush1.msra.mxu0 %v275
  %856 = vmatprep.subr.mxu0 0.0
  %857 = vmatpush1.msra.mxu0 %v276
  %858 = vmatprep.subr.mxu0 0.0
  %859 = vmatpush1.msra.mxu0 %v277
  %860 = vmatprep.subr.mxu0 0.0
  %861 = vmatpush1.msra.mxu0 %v278
  %862 = vmatprep.subr.mxu0 0.0
  %863 = vmatpush1.msra.mxu0 %v279
  %864 = vmatprep.subr.mxu0 0.0
  %865 = vmatpush1.msra.mxu0 %v280
  %866 = vmatprep.subr.mxu0 0.0
  %867 = vmatpush1.msra.mxu0 %v281
  %868 = vmatprep.subr.mxu0 0.0
  %869 = vmatpush1.msra.mxu0 %v282
  %870 = vmatprep.subr.mxu0 0.0
  %871 = vmatpush1.msra.mxu0 %v283
  %872 = vmatprep.subr.mxu0 0.0
  %873 = vmatpush1.msra.mxu0 %v284
  %874 = vmatprep.subr.mxu0 0.0
  %875 = vmatpush1.msra.mxu0 %v285
  %876 = vmatprep.subr.mxu0 0.0
  %877 = vmatpush1.msra.mxu0 %v286
  %878 = vmatprep.subr.mxu0 0.0
  %879 = vmatpush1.msra.mxu0 %v287
  %880 = vmatprep.subr.mxu0 0.0
  %881 = vmatpush1.msra.mxu0 %v288
  %882 = vmatprep.subr.mxu0 0.0
  %883 = vmatpush1.msra.mxu0 %v289
  %884 = vmatprep.subr.mxu0 0.0
  %885 = vmatpush1.msra.mxu0 %v290
  %886 = vmatprep.subr.mxu0 0.0
  %887 = vmatpush1.msra.mxu0 %v291
  %888 = vmatprep.subr.mxu0 0.0
  %889 = vmatpush1.msra.mxu0 %v292
  %890 = vmatprep.subr.mxu0 0.0
  %891 = vmatpush1.msra.mxu0 %v293
  %892 = vmatprep.subr.mxu0 0.0
  %893 = vmatpush1.msra.mxu0 %v294
  %894 = vmatprep.subr.mxu0 0.0
  %895 = vmatpush1.msra.mxu0 %v295
  %896 = vmatprep.subr.mxu0 0.0
  %897 = vmatpush1.msra.mxu0 %v296
  %898 = vmatprep.mubr.f32.mxu0 %v25
  %899 = vmatmul.mubr.f32.gmra.mrb[0].mxu0 %v24
  %v900 = vpop.f32.mrb[0].mxu0
  %v901 = vadd.f32 %v801, %v900
  %v902 = vpop.f32.mrb[0].mxu0
  %903 = vmatprep.mubr.f32.mxu0 %v38
  %904 = vmatmul.mubr.f32.gmra.mrb[0].mxu0 %v37
  %v905 = vpop.f32.mrb[0].mxu0
  %v906 = vadd.f32 %v806, %v905
  %v907 = vpop.f32.mrb[0].mxu0
  %908 = vmatprep.mubr.f32.mxu0 %v51
  %909 = vmatmul.mubr.f32.gmra.mrb[0].mxu0 %v50
  %v910 = vpop.f32.mrb[0].mxu0
  %v911 = vadd.f32 %v811, %v910
  %v912 = vpop.f32.mrb[0].mxu0
  %913 = vmatprep.mubr.f32.mxu0 %v64
  %914 = vmatmul.mubr.f32.gmra.mrb[0].mxu0 %v63
  %v915 = vpop.f32.mrb[0].mxu0
  %v916 = vadd.f32 %v816, %v915
  %v917 = vpop.f32.mrb[0].mxu0
  %918 = vmatprep.mubr.f32.mxu0 %v77
  %919 = vmatmul.mubr.f32.gmra.mrb[0].mxu0 %v76
  %v920 = vpop.f32.mrb[0].mxu0
  %v921 = vadd.f32 %v821, %v920
  %v922 = vpop.f32.mrb[0].mxu0
  %923 = vmatprep.mubr.f32.mxu0 %v90
  %924 = vmatmul.mubr.f32.gmra.mrb[0].mxu0 %v89
  %v925 = vpop.f32.mrb[0].mxu0
  %v926 = vadd.f32 %v826, %v925
  %v927 = vpop.f32.mrb[0].mxu0
  %928 = vmatprep.mubr.f32.mxu0 %v103
  %929 = vmatmul.mubr.f32.gmra.mrb[0].mxu0 %v102
  %v930 = vpop.f32.mrb[0].mxu0
  %v931 = vadd.f32 %v831, %v930
  %v932 = vpop.f32.mrb[0].mxu0
  %933 = vdwg.mxu0
  %934 = vmatprep.subr.mxu0 0.0
  %935 = vmatpush1.msra.mxu0 %v297
  %936 = vmatprep.subr.mxu0 0.0
  %937 = vmatpush1.msra.mxu0 %v298
  %938 = vmatprep.subr.mxu0 0.0
  %939 = vmatpush1.msra.mxu0 %v299
  %940 = vmatprep.subr.mxu0 0.0
  %941 = vmatpush1.msra.mxu0 %v300
  %942 = vmatprep.subr.mxu0 0.0
  %943 = vmatpush1.msra.mxu0 %v301
  %944 = vmatprep.subr.mxu0 0.0
  %945 = vmatpush1.msra.mxu0 %v302
  %946 = vmatprep.subr.mxu0 0.0
  %947 = vmatpush1.msra.mxu0 %v303
  %948 = vmatprep.subr.mxu0 0.0
  %949 = vmatpush1.msra.mxu0 %v304
  %950 = vmatprep.subr.mxu0 0.0
  %951 = vmatpush1.msra.mxu0 0.0
  %952 = vmatprep.subr.mxu0 0.0
  %953 = vmatpush1.msra.mxu0 0.0
  %954 = vmatprep.subr.mxu0 0.0
  %955 = vmatpush1.msra.mxu0 0.0
  %956 = vmatprep.subr.mxu0 0.0
  %957 = vmatpush1.msra.mxu0 0.0
  %958 = vmatprep.subr.mxu0 0.0
  %959 = vmatpush1.msra.mxu0 0.0
  %960 = vmatprep.subr.mxu0 0.0
  %961 = vmatpush1.msra.mxu0 0.0
  %962 = vmatprep.subr.mxu0 0.0
  %963 = vmatpush1.msra.mxu0 0.0
  %964 = vmatprep.subr.mxu0 0.0
  %965 = vmatpush1.msra.mxu0 0.0
  %966 = vmatprep.subr.mxu0 0.0
  %967 = vmatpush1.msra.mxu0 0.0
  %968 = vmatprep.subr.mxu0 0.0
  %969 = vmatpush1.msra.mxu0 0.0
  %970 = vmatprep.subr.mxu0 0.0
  %971 = vmatpush1.msra.mxu0 0.0
  %972 = vmatprep.subr.mxu0 0.0
  %973 = vmatpush1.msra.mxu0 0.0
  %974 = vmatprep.subr.mxu0 0.0
  %975 = vmatpush1.msra.mxu0 0.0
  %976 = vmatprep.subr.mxu0 0.0
  %977 = vmatpush1.msra.mxu0 0.0
  %978 = vmatprep.subr.mxu0 0.0
  %979 = vmatpush1.msra.mxu0 0.0
  %980 = vmatprep.subr.mxu0 0.0
  %981 = vmatpush1.msra.mxu0 0.0
  %982 = vmatprep.subr.mxu0 0.0
  %983 = vmatpush1.msra.mxu0 0.0
  %984 = vmatprep.subr.mxu0 0.0
  %985 = vmatpush1.msra.mxu0 0.0
  %986 = vmatprep.subr.mxu0 0.0
  %987 = vmatpush1.msra.mxu0 0.0
  %988 = vmatprep.subr.mxu0 0.0
  %989 = vmatpush1.msra.mxu0 0.0
  %990 = vmatprep.subr.mxu0 0.0
  %991 = vmatpush1.msra.mxu0 0.0
  %992 = vmatprep.subr.mxu0 0.0
  %993 = vmatpush1.msra.mxu0 0.0
  %994 = vmatprep.subr.mxu0 0.0
  %995 = vmatpush1.msra.mxu0 0.0
  %996 = vmatprep.subr.mxu0 0.0
  %997 = vmatpush1.msra.mxu0 0.0
  %998 = vmatprep.mubr.f32.mxu0 0.0
  %999 = vmatmul.mubr.f32.gmra.mrb[0].mxu0 %v314
  %v1000 = vpop.f32.mrb[0].mxu0
  %v1001 = vadd.f32 %v901, %v1000
  %v1002 = vpop.f32.mrb[0].mxu0
  %1003 = vmatprep.mubr.f32.mxu0 0.0
  %1004 = vmatmul.mubr.f32.gmra.mrb[0].mxu0 %v317
  %v1005 = vpop.f32.mrb[0].mxu0
  %v1006 = vadd.f32 %v906, %v1005
  %v1007 = vpop.f32.mrb[0].mxu0
  %1008 = vmatprep.mubr.f32.mxu0 0.0
  %1009 = vmatmul.mubr.f32.gmra.mrb[0].mxu0 %v320
  %v1010 = vpop.f32.mrb[0].mxu0
  %v1011 = vadd.f32 %v911, %v1010
  %v1012 = vpop.f32.mrb[0].mxu0
  %1013 = vmatprep.mubr.f32.mxu0 0.0
  %1014 = vmatmul.mubr.f32.gmra.mrb[0].mxu0 %v323
  %v1015 = vpop.f32.mrb[0].mxu0
  %v1016 = vadd.f32 %v916, %v1015
  %v1017 = vpop.f32.mrb[0].mxu0
  %1018 = vmatprep.mubr.f32.mxu0 0.0
  %1019 = vmatmul.mubr.f32.gmra.mrb[0].mxu0 %v326
  %v1020 = vpop.f32.mrb[0].mxu0
  %v1021 = vadd.f32 %v921, %v1020
  %v1022 = vpop.f32.mrb[0].mxu0
  %1023 = vmatprep.mubr.f32.mxu0 0.0
  %1024 = vmatmul.mubr.f32.gmra.mrb[0].mxu0 %v329
  %v1025 = vpop.f32.mrb[0].mxu0
  %v1026 = vadd.f32 %v926, %v1025
  %v1027 = vpop.f32.mrb[0].mxu0
  %1028 = vmatprep.mubr.f32.mxu0 0.0
  %1029 = vmatmul.mubr.f32.gmra.mrb[0].mxu0 %v332
  %v1030 = vpop.f32.mrb[0].mxu0
  %v1031 = vadd.f32 %v931, %v1030
  %v1032 = vpop.f32.mrb[0].mxu0
  %1033 = vdwg.mxu0
  %v1034 = vmax.f32 %v1001, 0.0
  %v1035 = vmax.f32 %v1006, 0.0
  %v1036 = vmax.f32 %v1011, 0.0
  %v1037 = vmax.f32 %v1016, 0.0
  %v1038 = vmax.f32 %v1021, 0.0
  %v1039 = vmax.f32 %v1026, 0.0
  %v1040 = vmax.f32 %v1031, 0.0
  %1041 = vst.msk [vmem:[%s3] sm:$0xff] %vm312, %v1034
  %1042 = vst.msk [vmem:[%s3 + $0x8] sm:$0xff] %vm312, %v1035
  %1043 = vst.msk [vmem:[%s3 + $0x10] sm:$0xff] %vm312, %v1036
  %1044 = vst.msk [vmem:[%s3 + $0x18] sm:$0xff] %vm312, %v1037
  %1045 = vst.msk [vmem:[%s3 + $0x20] sm:$0xff] %vm312, %v1038
  %1046 = vst.msk [vmem:[%s3 + $0x28] sm:$0xff] %vm312, %v1039
  %vm1047 = vcmask 517120
  %1048 = vst.msk [vmem:[%s3 + $0x30] sm:$0x3] %vm1047, %v1040
  // Predicated region
  $region14: #{a3c_forward.6} parent=0 // pred_check
    _
  $region15: #{a3c_forward.6} parent=0 // pred_check_branch
    %1050 = sbr.rel (0) target = $region17
  $region16: #{a3c_forward.6} parent=0 // pred_region
    _
  $region17: #{a3c_forward.6} parent=0 // pred_fallthru
    _
  // Predicated region
  $region18: #{a3c_forward.6} parent=0 // pred_check
    _
  $region19: #{a3c_forward.6} parent=0 // pred_check_branch
    %1052 = sbr.rel (0) target = $region21
  $region20: #{a3c_forward.6} parent=0 // pred_region
    _
  $region21: #{a3c_forward.6} parent=0 // pred_fallthru
    _

// kernel: a3c_forward.7
$region0: #{a3c_forward.7}
  #allocation0 [shape = 'u32[]', space=smem, size = 0x4, offset = 0x4, fixed_abs, tag = 'smem constant byte address 0x4 - core index']
  #allocation1 [shape = 'u32[144,128]{1,0:T(1,128)}', space=vmem, size = 0x12000, scoped, tag = 'internal scratch']
  %s0 = inlined_call_operand.vmem [shape: f32[2,1600], index: 0, kind: input, shape index: {}]
  %s1 = inlined_call_operand.vmem [shape: f32[1600,256], index: 1, kind: input, shape index: {}]
  %s2 = inlined_call_operand.vmem [shape: f32[1,256], index: 2, kind: input, shape index: {}]
  %s3 = inlined_call_operand.vmem [shape: f32[256,7], index: 3, kind: input, shape index: {}]
  %s4 = inlined_call_operand.vmem [shape: f32[1,7], index: 4, kind: input, shape index: {}]
  %s5 = inlined_call_operand.vmem [shape: f32[2,7], index: 5, kind: output, shape index: {}]
  %s6 = sld [smem:[#allocation0]]
  $region30: #{a3c_forward.7} parent=0
    _
  %s8 = ssub.s32 1, %s6
  %s9 = scalar_select 0, %s8, %s6
  // Predicated region
  $region2: #{a3c_forward.7} parent=0 // pred_check
    _
  $region3: #{a3c_forward.7} parent=0 // pred_check_branch
    %11 = sbr.rel (0) target = $region5
  $region4: #{a3c_forward.7} parent=0 // pred_region
    _
  $region5: #{a3c_forward.7} parent=0 // pred_fallthru
    _
  // Predicated region
  $region6: #{a3c_forward.7} parent=0 // pred_check
    _
  $region7: #{a3c_forward.7} parent=0 // pred_check_branch
    %13 = sbr.rel (0) target = $region9
  $region8: #{a3c_forward.7} parent=0 // pred_region
    _
  $region9: #{a3c_forward.7} parent=0 // pred_fallthru
    _
  // Predicated region
  $region10: #{a3c_forward.7} parent=0 // pred_check
    _
  $region11: #{a3c_forward.7} parent=0 // pred_check_branch
    %15 = sbr.rel (0) target = $region13
  $region12: #{a3c_forward.7} parent=0 // pred_region
    _
  $region13: #{a3c_forward.7} parent=0 // pred_fallthru
    _
  // Predicated region
  $region14: #{a3c_forward.7} parent=0 // pred_check
    _
  $region15: #{a3c_forward.7} parent=0 // pred_check_branch
    %17 = sbr.rel (0) target = $region17
  $region16: #{a3c_forward.7} parent=0 // pred_region
    _
  $region17: #{a3c_forward.7} parent=0 // pred_fallthru
    _
  // Predicated region
  $region18: #{a3c_forward.7} parent=0 // pred_check
    _
  $region19: #{a3c_forward.7} parent=0 // pred_check_branch
    %19 = sbr.rel (0) target = $region21
  $region20: #{a3c_forward.7} parent=0 // pred_region
    _
  $region21: #{a3c_forward.7} parent=0 // pred_fallthru
    _
  %v20 = vld [vmem:[%s0] sm:$0xff]
  %v21 = vld [vmem:[%s0 + $0x8] sm:$0xff]
  %v22 = vld [vmem:[%s0 + $0x10] sm:$0xff]
  %v23 = vld [vmem:[%s0 + $0x18] sm:$0x3]
  %v24 = vld [vmem:[%s1] sm:$0xff]
  %v25 = vld [vmem:[%s1 + $0x8] sm:$0xff]
  %v26 = vld [vmem:[%s1 + $0x10] sm:$0xff]
  %v27 = vld [vmem:[%s1 + $0x18] sm:$0xff]
  %v28 = vld [vmem:[%s1 + $0x20] sm:$0xff]
  %v29 = vld [vmem:[%s1 + $0x28] sm:$0xff]
  %v30 = vld [vmem:[%s1 + $0x30] sm:$0xff]
  %v31 = vld [vmem:[%s1 + $0x38] sm:$0xff]
  %v32 = vld [vmem:[%s1 + $0x40] sm:$0xff]
  %v33 = vld [vmem:[%s1 + $0x48] sm:$0xff]
  %v34 = vld [vmem:[%s1 + $0x50] sm:$0xff]
  %v35 = vld [vmem:[%s1 + $0x58] sm:$0xff]
  %v36 = vld [vmem:[%s1 + $0x60] sm:$0xff]
  %v37 = vld [vmem:[%s1 + $0x68] sm:$0xff]
  %v38 = vld [vmem:[%s1 + $0x70] sm:$0xff]
  %v39 = vld [vmem:[%s1 + $0x78] sm:$0xff]
  %v40 = vld [vmem:[%s1 + $0x80] sm:$0xff]
  %v41 = vld [vmem:[%s1 + $0x88] sm:$0xff]
  %v42 = vld [vmem:[%s1 + $0x90] sm:$0xff]
  %v43 = vld [vmem:[%s1 + $0x98] sm:$0xff]
  %v44 = vld [vmem:[%s1 + $0xa0] sm:$0xff]
  %v45 = vld [vmem:[%s1 + $0xa8] sm:$0xff]
  %v46 = vld [vmem:[%s1 + $0xb0] sm:$0xff]
  %v47 = vld [vmem:[%s1 + $0xb8] sm:$0xff]
  %v48 = vld [vmem:[%s1 + $0xc0] sm:$0xff]
  %v49 = vld [vmem:[%s1 + $0xc8] sm:$0xff]
  %v50 = vld [vmem:[%s1 + $0xd0] sm:$0xff]
  %v51 = vld [vmem:[%s1 + $0xd8] sm:$0xff]
  %v52 = vld [vmem:[%s1 + $0xe0] sm:$0xff]
  %v53 = vld [vmem:[%s1 + $0xe8] sm:$0xff]
  %v54 = vld [vmem:[%s1 + $0xf0] sm:$0xff]
  %v55 = vld [vmem:[%s1 + $0xf8] sm:$0xff]
  %v56 = vld [vmem:[%s1 + $0x100] sm:$0xff]
  %v57 = vld [vmem:[%s1 + $0x108] sm:$0xff]
  %v58 = vld [vmem:[%s1 + $0x110] sm:$0xff]
  %v59 = vld [vmem:[%s1 + $0x118] sm:$0xff]
  %v60 = vld [vmem:[%s1 + $0x120] sm:$0xff]
  %v61 = vld [vmem:[%s1 + $0x128] sm:$0xff]
  %v62 = vld [vmem:[%s1 + $0x130] sm:$0xff]
  %v63 = vld [vmem:[%s1 + $0x138] sm:$0xff]
  %v64 = vld [vmem:[%s1 + $0x140] sm:$0xff]
  %v65 = vld [vmem:[%s1 + $0x148] sm:$0xff]
  %v66 = vld [vmem:[%s1 + $0x150] sm:$0xff]
  %v67 = vld [vmem:[%s1 + $0x158] sm:$0xff]
  %v68 = vld [vmem:[%s1 + $0x160] sm:$0xff]
  %v69 = vld [vmem:[%s1 + $0x168] sm:$0xff]
  %v70 = vld [vmem:[%s1 + $0x170] sm:$0xff]
  %v71 = vld [vmem:[%s1 + $0x178] sm:$0xff]
  %v72 = vld [vmem:[%s1 + $0x180] sm:$0xff]
  %v73 = vld [vmem:[%s1 + $0x188] sm:$0xff]
  %v74 = vld [vmem:[%s1 + $0x190] sm:$0xff]
  %v75 = vld [vmem:[%s1 + $0x198] sm:$0xff]
  %v76 = vld [vmem:[%s1 + $0x1a0] sm:$0xff]
  %v77 = vld [vmem:[%s1 + $0x1a8] sm:$0xff]
  %v78 = vld [vmem:[%s1 + $0x1b0] sm:$0xff]
  %v79 = vld [vmem:[%s1 + $0x1b8] sm:$0xff]
  %v80 = vld [vmem:[%s1 + $0x1c0] sm:$0xff]
  %v81 = vld [vmem:[%s1 + $0x1c8] sm:$0xff]
  %v82 = vld [vmem:[%s1 + $0x1d0] sm:$0xff]
  %v83 = vld [vmem:[%s1 + $0x1d8] sm:$0xff]
  %v84 = vld [vmem:[%s1 + $0x1e0] sm:$0xff]
  %v85 = vld [vmem:[%s1 + $0x1e8] sm:$0xff]
  %v86 = vld [vmem:[%s1 + $0x1f0] sm:$0xff]
  %v87 = vld [vmem:[%s1 + $0x1f8] sm:$0xff]
  %v88 = vld [vmem:[%s1 + $0x200] sm:$0xff]
  %v89 = vld [vmem:[%s1 + $0x208] sm:$0xff]
  %v90 = vld [vmem:[%s1 + $0x210] sm:$0xff]
  %v91 = vld [vmem:[%s1 + $0x218] sm:$0xff]
  %v92 = vld [vmem:[%s1 + $0x220] sm:$0xff]
  %v93 = vld [vmem:[%s1 + $0x228] sm:$0xff]
  %v94 = vld [vmem:[%s1 + $0x230] sm:$0xff]
  %v95 = vld [vmem:[%s1 + $0x238] sm:$0xff]
  %v96 = vld [vmem:[%s1 + $0x240] sm:$0xff]
  %v97 = vld [vmem:[%s1 + $0x248] sm:$0xff]
  %v98 = vld [vmem:[%s1 + $0x250] sm:$0xff]
  %v99 = vld [vmem:[%s1 + $0x258] sm:$0xff]
  %v100 = vld [vmem:[%s1 + $0x260] sm:$0xff]
  %v101 = vld [vmem:[%s1 + $0x268] sm:$0xff]
  %v102 = vld [vmem:[%s1 + $0x270] sm:$0xff]
  %v103 = vld [vmem:[%s1 + $0x278] sm:$0xff]
  %v104 = vld [vmem:[%s1 + $0x280] sm:$0xff]
  %v105 = vld [vmem:[%s1 + $0x288] sm:$0xff]
  %v106 = vld [vmem:[%s1 + $0x290] sm:$0xff]
  %v107 = vld [vmem:[%s1 + $0x298] sm:$0xff]
  %v108 = vld [vmem:[%s1 + $0x2a0] sm:$0xff]
  %v109 = vld [vmem:[%s1 + $0x2a8] sm:$0xff]
  %v110 = vld [vmem:[%s1 + $0x2b0] sm:$0xff]
  %v111 = vld [vmem:[%s1 + $0x2b8] sm:$0xff]
  %v112 = vld [vmem:[%s1 + $0x2c0] sm:$0xff]
  %v113 = vld [vmem:[%s1 + $0x2c8] sm:$0xff]
  %v114 = vld [vmem:[%s1 + $0x2d0] sm:$0xff]
  %v115 = vld [vmem:[%s1 + $0x2d8] sm:$0xff]
  %v116 = vld [vmem:[%s1 + $0x2e0] sm:$0xff]
  %v117 = vld [vmem:[%s1 + $0x2e8] sm:$0xff]
  %v118 = vld [vmem:[%s1 + $0x2f0] sm:$0xff]
  %v119 = vld [vmem:[%s1 + $0x2f8] sm:$0xff]
  %v120 = vld [vmem:[%s1 + $0x300] sm:$0xff]
  %v121 = vld [vmem:[%s1 + $0x308] sm:$0xff]
  %v122 = vld [vmem:[%s1 + $0x310] sm:$0xff]
  %v123 = vld [vmem:[%s1 + $0x318] sm:$0xff]
  %v124 = vld [vmem:[%s1 + $0x320] sm:$0xff]
  %v125 = vld [vmem:[%s1 + $0x328] sm:$0xff]
  %v126 = vld [vmem:[%s1 + $0x330] sm:$0xff]
  %v127 = vld [vmem:[%s1 + $0x338] sm:$0xff]
  %v128 = vld [vmem:[%s1 + $0x340] sm:$0xff]
  %v129 = vld [vmem:[%s1 + $0x348] sm:$0xff]
  %v130 = vld [vmem:[%s1 + $0x350] sm:$0xff]
  %v131 = vld [vmem:[%s1 + $0x358] sm:$0xff]
  %v132 = vld [vmem:[%s1 + $0x360] sm:$0xff]
  %v133 = vld [vmem:[%s1 + $0x368] sm:$0xff]
  %v134 = vld [vmem:[%s1 + $0x370] sm:$0xff]
  %v135 = vld [vmem:[%s1 + $0x378] sm:$0xff]
  %v136 = vld [vmem:[%s1 + $0x380] sm:$0xff]
  %v137 = vld [vmem:[%s1 + $0x388] sm:$0xff]
  %v138 = vld [vmem:[%s1 + $0x390] sm:$0xff]
  %v139 = vld [vmem:[%s1 + $0x398] sm:$0xff]
  %v140 = vld [vmem:[%s1 + $0x3a0] sm:$0xff]
  %v141 = vld [vmem:[%s1 + $0x3a8] sm:$0xff]
  %v142 = vld [vmem:[%s1 + $0x3b0] sm:$0xff]
  %v143 = vld [vmem:[%s1 + $0x3b8] sm:$0xff]
  %v144 = vld [vmem:[%s1 + $0x3c0] sm:$0xff]
  %v145 = vld [vmem:[%s1 + $0x3c8] sm:$0xff]
  %v146 = vld [vmem:[%s1 + $0x3d0] sm:$0xff]
  %v147 = vld [vmem:[%s1 + $0x3d8] sm:$0xff]
  %v148 = vld [vmem:[%s1 + $0x3e0] sm:$0xff]
  %v149 = vld [vmem:[%s1 + $0x3e8] sm:$0xff]
  %v150 = vld [vmem:[%s1 + $0x3f0] sm:$0xff]
  %v151 = vld [vmem:[%s1 + $0x3f8] sm:$0xff]
  %v152 = vld [vmem:[%s1 + $0x400] sm:$0xff]
  %v153 = vld [vmem:[%s1 + $0x408] sm:$0xff]
  %v154 = vld [vmem:[%s1 + $0x410] sm:$0xff]
  %v155 = vld [vmem:[%s1 + $0x418] sm:$0xff]
  %v156 = vld [vmem:[%s1 + $0x420] sm:$0xff]
  %v157 = vld [vmem:[%s1 + $0x428] sm:$0xff]
  %v158 = vld [vmem:[%s1 + $0x430] sm:$0xff]
  %v159 = vld [vmem:[%s1 + $0x438] sm:$0xff]
  %v160 = vld [vmem:[%s1 + $0x440] sm:$0xff]
  %v161 = vld [vmem:[%s1 + $0x448] sm:$0xff]
  %v162 = vld [vmem:[%s1 + $0x450] sm:$0xff]
  %v163 = vld [vmem:[%s1 + $0x458] sm:$0xff]
  %v164 = vld [vmem:[%s1 + $0x460] sm:$0xff]
  %v165 = vld [vmem:[%s1 + $0x468] sm:$0xff]
  %v166 = vld [vmem:[%s1 + $0x470] sm:$0xff]
  %v167 = vld [vmem:[%s1 + $0x478] sm:$0xff]
  %v168 = vld [vmem:[%s1 + $0x480] sm:$0xff]
  %v169 = vld [vmem:[%s1 + $0x488] sm:$0xff]
  %v170 = vld [vmem:[%s1 + $0x490] sm:$0xff]
  %v171 = vld [vmem:[%s1 + $0x498] sm:$0xff]
  %v172 = vld [vmem:[%s1 + $0x4a0] sm:$0xff]
  %v173 = vld [vmem:[%s1 + $0x4a8] sm:$0xff]
  %v174 = vld [vmem:[%s1 + $0x4b0] sm:$0xff]
  %v175 = vld [vmem:[%s1 + $0x4b8] sm:$0xff]
  %v176 = vld [vmem:[%s1 + $0x4c0] sm:$0xff]
  %v177 = vld [vmem:[%s1 + $0x4c8] sm:$0xff]
  %v178 = vld [vmem:[%s1 + $0x4d0] sm:$0xff]
  %v179 = vld [vmem:[%s1 + $0x4d8] sm:$0xff]
  %v180 = vld [vmem:[%s1 + $0x4e0] sm:$0xff]
  %v181 = vld [vmem:[%s1 + $0x4e8] sm:$0xff]
  %v182 = vld [vmem:[%s1 + $0x4f0] sm:$0xff]
  %v183 = vld [vmem:[%s1 + $0x4f8] sm:$0xff]
  %v184 = vld [vmem:[%s1 + $0x500] sm:$0xff]
  %v185 = vld [vmem:[%s1 + $0x508] sm:$0xff]
  %v186 = vld [vmem:[%s1 + $0x510] sm:$0xff]
  %v187 = vld [vmem:[%s1 + $0x518] sm:$0xff]
  %v188 = vld [vmem:[%s1 + $0x520] sm:$0xff]
  %v189 = vld [vmem:[%s1 + $0x528] sm:$0xff]
  %v190 = vld [vmem:[%s1 + $0x530] sm:$0xff]
  %v191 = vld [vmem:[%s1 + $0x538] sm:$0xff]
  %v192 = vld [vmem:[%s1 + $0x540] sm:$0xff]
  %v193 = vld [vmem:[%s1 + $0x548] sm:$0xff]
  %v194 = vld [vmem:[%s1 + $0x550] sm:$0xff]
  %v195 = vld [vmem:[%s1 + $0x558] sm:$0xff]
  %v196 = vld [vmem:[%s1 + $0x560] sm:$0xff]
  %v197 = vld [vmem:[%s1 + $0x568] sm:$0xff]
  %v198 = vld [vmem:[%s1 + $0x570] sm:$0xff]
  %v199 = vld [vmem:[%s1 + $0x578] sm:$0xff]
  %v200 = vld [vmem:[%s1 + $0x580] sm:$0xff]
  %v201 = vld [vmem:[%s1 + $0x588] sm:$0xff]
  %v202 = vld [vmem:[%s1 + $0x590] sm:$0xff]
  %v203 = vld [vmem:[%s1 + $0x598] sm:$0xff]
  %v204 = vld [vmem:[%s1 + $0x5a0] sm:$0xff]
  %v205 = vld [vmem:[%s1 + $0x5a8] sm:$0xff]
  %v206 = vld [vmem:[%s1 + $0x5b0] sm:$0xff]
  %v207 = vld [vmem:[%s1 + $0x5b8] sm:$0xff]
  %v208 = vld [vmem:[%s1 + $0x5c0] sm:$0xff]
  %v209 = vld [vmem:[%s1 + $0x5c8] sm:$0xff]
  %v210 = vld [vmem:[%s1 + $0x5d0] sm:$0xff]
  %v211 = vld [vmem:[%s1 + $0x5d8] sm:$0xff]
  %v212 = vld [vmem:[%s1 + $0x5e0] sm:$0xff]
  %v213 = vld [vmem:[%s1 + $0x5e8] sm:$0xff]
  %v214 = vld [vmem:[%s1 + $0x5f0] sm:$0xff]
  %v215 = vld [vmem:[%s1 + $0x5f8] sm:$0xff]
  %v216 = vld [vmem:[%s1 + $0x600] sm:$0xff]
  %v217 = vld [vmem:[%s1 + $0x608] sm:$0xff]
  %v218 = vld [vmem:[%s1 + $0x610] sm:$0xff]
  %v219 = vld [vmem:[%s1 + $0x618] sm:$0xff]
  %v220 = vld [vmem:[%s1 + $0x620] sm:$0xff]
  %v221 = vld [vmem:[%s1 + $0x628] sm:$0xff]
  %v222 = vld [vmem:[%s1 + $0x630] sm:$0xff]
  %v223 = vld [vmem:[%s1 + $0x638] sm:$0xff]
  %v224 = vld [vmem:[%s1 + $0x640] sm:$0xff]
  %v225 = vld [vmem:[%s1 + $0x648] sm:$0xff]
  %v226 = vld [vmem:[%s1 + $0x650] sm:$0xff]
  %v227 = vld [vmem:[%s1 + $0x658] sm:$0xff]
  %v228 = vld [vmem:[%s1 + $0x660] sm:$0xff]
  %v229 = vld [vmem:[%s1 + $0x668] sm:$0xff]
  %v230 = vld [vmem:[%s1 + $0x670] sm:$0xff]
  %v231 = vld [vmem:[%s1 + $0x678] sm:$0xff]
  %v232 = vld [vmem:[%s1 + $0x680] sm:$0xff]
  %v233 = vld [vmem:[%s1 + $0x688] sm:$0xff]
  %v234 = vld [vmem:[%s1 + $0x690] sm:$0xff]
  %v235 = vld [vmem:[%s1 + $0x698] sm:$0xff]
  %v236 = vld [vmem:[%s1 + $0x6a0] sm:$0xff]
  %v237 = vld [vmem:[%s1 + $0x6a8] sm:$0xff]
  %v238 = vld [vmem:[%s1 + $0x6b0] sm:$0xff]
  %v239 = vld [vmem:[%s1 + $0x6b8] sm:$0xff]
  %v240 = vld [vmem:[%s1 + $0x6c0] sm:$0xff]
  %v241 = vld [vmem:[%s1 + $0x6c8] sm:$0xff]
  %v242 = vld [vmem:[%s1 + $0x6d0] sm:$0xff]
  %v243 = vld [vmem:[%s1 + $0x6d8] sm:$0xff]
  %v244 = vld [vmem:[%s1 + $0x6e0] sm:$0xff]
  %v245 = vld [vmem:[%s1 + $0x6e8] sm:$0xff]
  %v246 = vld [vmem:[%s1 + $0x6f0] sm:$0xff]
  %v247 = vld [vmem:[%s1 + $0x6f8] sm:$0xff]
  %v248 = vld [vmem:[%s1 + $0x700] sm:$0xff]
  %v249 = vld [vmem:[%s1 + $0x708] sm:$0xff]
  %v250 = vld [vmem:[%s1 + $0x710] sm:$0xff]
  %v251 = vld [vmem:[%s1 + $0x718] sm:$0xff]
  %v252 = vld [vmem:[%s1 + $0x720] sm:$0xff]
  %v253 = vld [vmem:[%s1 + $0x728] sm:$0xff]
  %v254 = vld [vmem:[%s1 + $0x730] sm:$0xff]
  %v255 = vld [vmem:[%s1 + $0x738] sm:$0xff]
  %v256 = vld [vmem:[%s1 + $0x740] sm:$0xff]
  %v257 = vld [vmem:[%s1 + $0x748] sm:$0xff]
  %v258 = vld [vmem:[%s1 + $0x750] sm:$0xff]
  %v259 = vld [vmem:[%s1 + $0x758] sm:$0xff]
  %v260 = vld [vmem:[%s1 + $0x760] sm:$0xff]
  %v261 = vld [vmem:[%s1 + $0x768] sm:$0xff]
  %v262 = vld [vmem:[%s1 + $0x770] sm:$0xff]
  %v263 = vld [vmem:[%s1 + $0x778] sm:$0xff]
  %v264 = vld [vmem:[%s1 + $0x780] sm:$0xff]
  %v265 = vld [vmem:[%s1 + $0x788] sm:$0xff]
  %v266 = vld [vmem:[%s1 + $0x790] sm:$0xff]
  %v267 = vld [vmem:[%s1 + $0x798] sm:$0xff]
  %v268 = vld [vmem:[%s1 + $0x7a0] sm:$0xff]
  %v269 = vld [vmem:[%s1 + $0x7a8] sm:$0xff]
  %v270 = vld [vmem:[%s1 + $0x7b0] sm:$0xff]
  %v271 = vld [vmem:[%s1 + $0x7b8] sm:$0xff]
  %v272 = vld [vmem:[%s1 + $0x7c0] sm:$0xff]
  %v273 = vld [vmem:[%s1 + $0x7c8] sm:$0xff]
  %v274 = vld [vmem:[%s1 + $0x7d0] sm:$0xff]
  %v275 = vld [vmem:[%s1 + $0x7d8] sm:$0xff]
  %v276 = vld [vmem:[%s1 + $0x7e0] sm:$0xff]
  %v277 = vld [vmem:[%s1 + $0x7e8] sm:$0xff]
  %v278 = vld [vmem:[%s1 + $0x7f0] sm:$0xff]
  %v279 = vld [vmem:[%s1 + $0x7f8] sm:$0xff]
  %v280 = vld [vmem:[%s1 + $0x800] sm:$0xff]
  %v281 = vld [vmem:[%s1 + $0x808] sm:$0xff]
  %v282 = vld [vmem:[%s1 + $0x810] sm:$0xff]
  %v283 = vld [vmem:[%s1 + $0x818] sm:$0xff]
  %v284 = vld [vmem:[%s1 + $0x820] sm:$0xff]
  %v285 = vld [vmem:[%s1 + $0x828] sm:$0xff]
  %v286 = vld [vmem:[%s1 + $0x830] sm:$0xff]
  %v287 = vld [vmem:[%s1 + $0x838] sm:$0xff]
  %v288 = vld [vmem:[%s1 + $0x840] sm:$0xff]
  %v289 = vld [vmem:[%s1 + $0x848] sm:$0xff]
  %v290 = vld [vmem:[%s1 + $0x850] sm:$0xff]
  %v291 = vld [vmem:[%s1 + $0x858] sm:$0xff]
  %v292 = vld [vmem:[%s1 + $0x860] sm:$0xff]
  %v293 = vld [vmem:[%s1 + $0x868] sm:$0xff]
  %v294 = vld [vmem:[%s1 + $0x870] sm:$0xff]
  %v295 = vld [vmem:[%s1 + $0x878] sm:$0xff]
  %v296 = vld [vmem:[%s1 + $0x880] sm:$0xff]
  %v297 = vld [vmem:[%s1 + $0x888] sm:$0xff]
  %v298 = vld [vmem:[%s1 + $0x890] sm:$0xff]
  %v299 = vld [vmem:[%s1 + $0x898] sm:$0xff]
  %v300 = vld [vmem:[%s1 + $0x8a0] sm:$0xff]
  %v301 = vld [vmem:[%s1 + $0x8a8] sm:$0xff]
  %v302 = vld [vmem:[%s1 + $0x8b0] sm:$0xff]
  %v303 = vld [vmem:[%s1 + $0x8b8] sm:$0xff]
  %v304 = vld [vmem:[%s1 + $0x8c0] sm:$0xff]
  %v305 = vld [vmem:[%s1 + $0x8c8] sm:$0xff]
  %v306 = vld [vmem:[%s1 + $0x8d0] sm:$0xff]
  %v307 = vld [vmem:[%s1 + $0x8d8] sm:$0xff]
  %v308 = vld [vmem:[%s1 + $0x8e0] sm:$0xff]
  %v309 = vld [vmem:[%s1 + $0x8e8] sm:$0xff]
  %v310 = vld [vmem:[%s1 + $0x8f0] sm:$0xff]
  %v311 = vld [vmem:[%s1 + $0x8f8] sm:$0xff]
  %v312 = vld [vmem:[%s1 + $0x900] sm:$0xff]
  %v313 = vld [vmem:[%s1 + $0x908] sm:$0xff]
  %v314 = vld [vmem:[%s1 + $0x910] sm:$0xff]
  %v315 = vld [vmem:[%s1 + $0x918] sm:$0xff]
  %v316 = vld [vmem:[%s1 + $0x920] sm:$0xff]
  %v317 = vld [vmem:[%s1 + $0x928] sm:$0xff]
  %v318 = vld [vmem:[%s1 + $0x930] sm:$0xff]
  %v319 = vld [vmem:[%s1 + $0x938] sm:$0xff]
  %v320 = vld [vmem:[%s1 + $0x940] sm:$0xff]
  %v321 = vld [vmem:[%s1 + $0x948] sm:$0xff]
  %v322 = vld [vmem:[%s1 + $0x950] sm:$0xff]
  %v323 = vld [vmem:[%s1 + $0x958] sm:$0xff]
  %v324 = vld [vmem:[%s1 + $0x960] sm:$0xff]
  %v325 = vld [vmem:[%s1 + $0x968] sm:$0xff]
  %v326 = vld [vmem:[%s1 + $0x970] sm:$0xff]
  %v327 = vld [vmem:[%s1 + $0x978] sm:$0xff]
  %v328 = vld [vmem:[%s1 + $0x980] sm:$0xff]
  %v329 = vld [vmem:[%s1 + $0x988] sm:$0xff]
  %v330 = vld [vmem:[%s1 + $0x990] sm:$0xff]
  %v331 = vld [vmem:[%s1 + $0x998] sm:$0xff]
  %v332 = vld [vmem:[%s1 + $0x9a0] sm:$0xff]
  %v333 = vld [vmem:[%s1 + $0x9a8] sm:$0xff]
  %v334 = vld [vmem:[%s1 + $0x9b0] sm:$0xff]
  %v335 = vld [vmem:[%s1 + $0x9b8] sm:$0xff]
  %v336 = vld [vmem:[%s1 + $0x9c0] sm:$0xff]
  %v337 = vld [vmem:[%s1 + $0x9c8] sm:$0xff]
  %v338 = vld [vmem:[%s1 + $0x9d0] sm:$0xff]
  %v339 = vld [vmem:[%s1 + $0x9d8] sm:$0xff]
  %v340 = vld [vmem:[%s1 + $0x9e0] sm:$0xff]
  %v341 = vld [vmem:[%s1 + $0x9e8] sm:$0xff]
  %v342 = vld [vmem:[%s1 + $0x9f0] sm:$0xff]
  %v343 = vld [vmem:[%s1 + $0x9f8] sm:$0xff]
  %v344 = vld [vmem:[%s1 + $0xa00] sm:$0xff]
  %v345 = vld [vmem:[%s1 + $0xa08] sm:$0xff]
  %v346 = vld [vmem:[%s1 + $0xa10] sm:$0xff]
  %v347 = vld [vmem:[%s1 + $0xa18] sm:$0xff]
  %v348 = vld [vmem:[%s1 + $0xa20] sm:$0xff]
  %v349 = vld [vmem:[%s1 + $0xa28] sm:$0xff]
  %v350 = vld [vmem:[%s1 + $0xa30] sm:$0xff]
  %v351 = vld [vmem:[%s1 + $0xa38] sm:$0xff]
  %v352 = vld [vmem:[%s1 + $0xa40] sm:$0xff]
  %v353 = vld [vmem:[%s1 + $0xa48] sm:$0xff]
  %v354 = vld [vmem:[%s1 + $0xa50] sm:$0xff]
  %v355 = vld [vmem:[%s1 + $0xa58] sm:$0xff]
  %v356 = vld [vmem:[%s1 + $0xa60] sm:$0xff]
  %v357 = vld [vmem:[%s1 + $0xa68] sm:$0xff]
  %v358 = vld [vmem:[%s1 + $0xa70] sm:$0xff]
  %v359 = vld [vmem:[%s1 + $0xa78] sm:$0xff]
  %v360 = vld [vmem:[%s1 + $0xa80] sm:$0xff]
  %v361 = vld [vmem:[%s1 + $0xa88] sm:$0xff]
  %v362 = vld [vmem:[%s1 + $0xa90] sm:$0xff]
  %v363 = vld [vmem:[%s1 + $0xa98] sm:$0xff]
  %v364 = vld [vmem:[%s1 + $0xaa0] sm:$0xff]
  %v365 = vld [vmem:[%s1 + $0xaa8] sm:$0xff]
  %v366 = vld [vmem:[%s1 + $0xab0] sm:$0xff]
  %v367 = vld [vmem:[%s1 + $0xab8] sm:$0xff]
  %v368 = vld [vmem:[%s1 + $0xac0] sm:$0xff]
  %v369 = vld [vmem:[%s1 + $0xac8] sm:$0xff]
  %v370 = vld [vmem:[%s1 + $0xad0] sm:$0xff]
  %v371 = vld [vmem:[%s1 + $0xad8] sm:$0xff]
  %v372 = vld [vmem:[%s1 + $0xae0] sm:$0xff]
  %v373 = vld [vmem:[%s1 + $0xae8] sm:$0xff]
  %v374 = vld [vmem:[%s1 + $0xaf0] sm:$0xff]
  %v375 = vld [vmem:[%s1 + $0xaf8] sm:$0xff]
  %v376 = vld [vmem:[%s1 + $0xb00] sm:$0xff]
  %v377 = vld [vmem:[%s1 + $0xb08] sm:$0xff]
  %v378 = vld [vmem:[%s1 + $0xb10] sm:$0xff]
  %v379 = vld [vmem:[%s1 + $0xb18] sm:$0xff]
  %v380 = vld [vmem:[%s1 + $0xb20] sm:$0xff]
  %v381 = vld [vmem:[%s1 + $0xb28] sm:$0xff]
  %v382 = vld [vmem:[%s1 + $0xb30] sm:$0xff]
  %v383 = vld [vmem:[%s1 + $0xb38] sm:$0xff]
  %v384 = vld [vmem:[%s1 + $0xb40] sm:$0xff]
  %v385 = vld [vmem:[%s1 + $0xb48] sm:$0xff]
  %v386 = vld [vmem:[%s1 + $0xb50] sm:$0xff]
  %v387 = vld [vmem:[%s1 + $0xb58] sm:$0xff]
  %v388 = vld [vmem:[%s1 + $0xb60] sm:$0xff]
  %v389 = vld [vmem:[%s1 + $0xb68] sm:$0xff]
  %v390 = vld [vmem:[%s1 + $0xb70] sm:$0xff]
  %v391 = vld [vmem:[%s1 + $0xb78] sm:$0xff]
  %v392 = vld [vmem:[%s1 + $0xb80] sm:$0xff]
  %v393 = vld [vmem:[%s1 + $0xb88] sm:$0xff]
  %v394 = vld [vmem:[%s1 + $0xb90] sm:$0xff]
  %v395 = vld [vmem:[%s1 + $0xb98] sm:$0xff]
  %v396 = vld [vmem:[%s1 + $0xba0] sm:$0xff]
  %v397 = vld [vmem:[%s1 + $0xba8] sm:$0xff]
  %v398 = vld [vmem:[%s1 + $0xbb0] sm:$0xff]
  %v399 = vld [vmem:[%s1 + $0xbb8] sm:$0xff]
  %v400 = vld [vmem:[%s1 + $0xbc0] sm:$0xff]
  %v401 = vld [vmem:[%s1 + $0xbc8] sm:$0xff]
  %v402 = vld [vmem:[%s1 + $0xbd0] sm:$0xff]
  %v403 = vld [vmem:[%s1 + $0xbd8] sm:$0xff]
  %v404 = vld [vmem:[%s1 + $0xbe0] sm:$0xff]
  %v405 = vld [vmem:[%s1 + $0xbe8] sm:$0xff]
  %v406 = vld [vmem:[%s1 + $0xbf0] sm:$0xff]
  %v407 = vld [vmem:[%s1 + $0xbf8] sm:$0xff]
  %v408 = vld [vmem:[%s1 + $0xc00] sm:$0xff]
  %v409 = vld [vmem:[%s1 + $0xc08] sm:$0xff]
  %v410 = vld [vmem:[%s1 + $0xc10] sm:$0xff]
  %v411 = vld [vmem:[%s1 + $0xc18] sm:$0xff]
  %v412 = vld [vmem:[%s1 + $0xc20] sm:$0xff]
  %v413 = vld [vmem:[%s1 + $0xc28] sm:$0xff]
  %v414 = vld [vmem:[%s1 + $0xc30] sm:$0xff]
  %v415 = vld [vmem:[%s1 + $0xc38] sm:$0xff]
  %v416 = vld [vmem:[%s1 + $0xc40] sm:$0xff]
  %v417 = vld [vmem:[%s1 + $0xc48] sm:$0xff]
  %v418 = vld [vmem:[%s1 + $0xc50] sm:$0xff]
  %v419 = vld [vmem:[%s1 + $0xc58] sm:$0xff]
  %v420 = vld [vmem:[%s1 + $0xc60] sm:$0xff]
  %v421 = vld [vmem:[%s1 + $0xc68] sm:$0xff]
  %v422 = vld [vmem:[%s1 + $0xc70] sm:$0xff]
  %v423 = vld [vmem:[%s1 + $0xc78] sm:$0xff]
  %v424 = vld [vmem:[%s2] sm:$0x3]
  %v426 = vlaneseq
  %v427 = vshrl.u32 %v426, 7
  %v428 = vsub.s32 0, %v427
  %v429 = vrot.slane %v424, %v428
  %v430 = vlaneseq
  %v431 = vshrl.u32 %v430, 7
  %v432 = vsub.s32 1, %v431
  %v433 = vrot.slane %v424, %v432
  %v440 = vcombine.high %v20, %v20
  %v442 = vunpack.c.l.s4 1983009808
  %v443 = vunpack.c.0.s8 %v442
  %v444 = vlaneseq
  %v445 = vshrl.u32 %v444, 7
  %v446 = vsub.s32 %v443, %v445
  %v447 = vrot.slane %v20, %v446
  %v449 = vunpack.c.l.s4 1983009808
  %v450 = vunpack.c.0.s8 %v449
  %v451 = vlaneseq
  %v452 = vshrl.u32 %v451, 7
  %v453 = vsub.s32 %v450, %v452
  %v454 = vrot.slane %v440, %v453
  %v455 = vcombine.high %v447, %v447
  %v456 = vcombine.high %v454, %v454
  %v457 = vcombine.high %v21, %v21
  %v459 = vunpack.c.l.s4 1983009808
  %v460 = vunpack.c.0.s8 %v459
  %v461 = vlaneseq
  %v462 = vshrl.u32 %v461, 7
  %v463 = vsub.s32 %v460, %v462
  %v464 = vrot.slane %v21, %v463
  %v466 = vunpack.c.l.s4 1983009808
  %v467 = vunpack.c.0.s8 %v466
  %v468 = vlaneseq
  %v469 = vshrl.u32 %v468, 7
  %v470 = vsub.s32 %v467, %v469
  %v471 = vrot.slane %v457, %v470
  %v472 = vcombine.high %v464, %v464
  %v473 = vcombine.high %v471, %v471
  %v474 = vcombine.high %v22, %v22
  %v476 = vunpack.c.l.s4 1983009808
  %v477 = vunpack.c.0.s8 %v476
  %v478 = vlaneseq
  %v479 = vshrl.u32 %v478, 7
  %v480 = vsub.s32 %v477, %v479
  %v481 = vrot.slane %v22, %v480
  %v483 = vunpack.c.l.s4 1983009808
  %v484 = vunpack.c.0.s8 %v483
  %v485 = vlaneseq
  %v486 = vshrl.u32 %v485, 7
  %v487 = vsub.s32 %v484, %v486
  %v488 = vrot.slane %v474, %v487
  %v489 = vcombine.high %v481, %v481
  %v490 = vcombine.high %v488, %v488
  %v492 = vunpack.c.l.s4 1983009808
  %v493 = vunpack.c.0.s8 %v492
  %v494 = vlaneseq
  %v495 = vshrl.u32 %v494, 7
  %v496 = vsub.s32 %v493, %v495
  %v497 = vrot.slane %v23, %v496
  %vm510 = vcmask 523264
  %v511 = vsel %vm510, %v497, 0
  %513 = vmatprep.subr.mxu0 %v25
  %514 = vmatpush1.msra.mxu0 %v24
  %515 = vmatprep.subr.mxu0 %v27
  %516 = vmatpush1.msra.mxu0 %v26
  %517 = vmatprep.subr.mxu0 %v29
  %518 = vmatpush1.msra.mxu0 %v28
  %519 = vmatprep.subr.mxu0 %v31
  %520 = vmatpush1.msra.mxu0 %v30
  %521 = vmatprep.subr.mxu0 %v33
  %522 = vmatpush1.msra.mxu0 %v32
  %523 = vmatprep.subr.mxu0 %v35
  %524 = vmatpush1.msra.mxu0 %v34
  %525 = vmatprep.subr.mxu0 %v37
  %526 = vmatpush1.msra.mxu0 %v36
  %527 = vmatprep.subr.mxu0 %v39
  %528 = vmatpush1.msra.mxu0 %v38
  %529 = vmatprep.subr.mxu0 %v41
  %530 = vmatpush1.msra.mxu0 %v40
  %531 = vmatprep.subr.mxu0 %v43
  %532 = vmatpush1.msra.mxu0 %v42
  %533 = vmatprep.subr.mxu0 %v45
  %534 = vmatpush1.msra.mxu0 %v44
  %535 = vmatprep.subr.mxu0 %v47
  %536 = vmatpush1.msra.mxu0 %v46
  %537 = vmatprep.subr.mxu0 %v49
  %538 = vmatpush1.msra.mxu0 %v48
  %539 = vmatprep.subr.mxu0 %v51
  %540 = vmatpush1.msra.mxu0 %v50
  %541 = vmatprep.subr.mxu0 %v53
  %542 = vmatpush1.msra.mxu0 %v52
  %543 = vmatprep.subr.mxu0 %v55
  %544 = vmatpush1.msra.mxu0 %v54
  %545 = vmatprep.subr.mxu0 %v57
  %546 = vmatpush1.msra.mxu0 %v56
  %547 = vmatprep.subr.mxu0 %v59
  %548 = vmatpush1.msra.mxu0 %v58
  %549 = vmatprep.subr.mxu0 %v61
  %550 = vmatpush1.msra.mxu0 %v60
  %551 = vmatprep.subr.mxu0 %v63
  %552 = vmatpush1.msra.mxu0 %v62
  %553 = vmatprep.subr.mxu0 %v65
  %554 = vmatpush1.msra.mxu0 %v64
  %555 = vmatprep.subr.mxu0 %v67
  %556 = vmatpush1.msra.mxu0 %v66
  %557 = vmatprep.subr.mxu0 %v69
  %558 = vmatpush1.msra.mxu0 %v68
  %559 = vmatprep.subr.mxu0 %v71
  %560 = vmatpush1.msra.mxu0 %v70
  %561 = vmatprep.subr.mxu0 %v73
  %562 = vmatpush1.msra.mxu0 %v72
  %563 = vmatprep.subr.mxu0 %v75
  %564 = vmatpush1.msra.mxu0 %v74
  %565 = vmatprep.subr.mxu0 %v77
  %566 = vmatpush1.msra.mxu0 %v76
  %567 = vmatprep.subr.mxu0 %v79
  %568 = vmatpush1.msra.mxu0 %v78
  %569 = vmatprep.subr.mxu0 %v81
  %570 = vmatpush1.msra.mxu0 %v80
  %571 = vmatprep.subr.mxu0 %v83
  %572 = vmatpush1.msra.mxu0 %v82
  %573 = vmatprep.subr.mxu0 %v85
  %574 = vmatpush1.msra.mxu0 %v84
  %575 = vmatprep.subr.mxu0 %v87
  %576 = vmatpush1.msra.mxu0 %v86
  %577 = vmatprep.mubr.f32.mxu0 %v455
  %578 = vmatmul.mubr.f32.gmra.mrb[0].mxu0 %v447
  %v579 = vpop.f32.mrb[0].mxu0
  %v580 = vadd.f32 %v429, %v579
  %v581 = vpop.f32.mrb[0].mxu0
  %v582 = vadd.f32 %v433, %v581
  %583 = vdwg.mxu0
  %584 = vmatprep.subr.mxu0 %v89
  %585 = vmatpush1.msra.mxu0 %v88
  %586 = vmatprep.subr.mxu0 %v91
  %587 = vmatpush1.msra.mxu0 %v90
  %588 = vmatprep.subr.mxu0 %v93
  %589 = vmatpush1.msra.mxu0 %v92
  %590 = vmatprep.subr.mxu0 %v95
  %591 = vmatpush1.msra.mxu0 %v94
  %592 = vmatprep.subr.mxu0 %v97
  %593 = vmatpush1.msra.mxu0 %v96
  %594 = vmatprep.subr.mxu0 %v99
  %595 = vmatpush1.msra.mxu0 %v98
  %596 = vmatprep.subr.mxu0 %v101
  %597 = vmatpush1.msra.mxu0 %v100
  %598 = vmatprep.subr.mxu0 %v103
  %599 = vmatpush1.msra.mxu0 %v102
  %600 = vmatprep.subr.mxu0 %v105
  %601 = vmatpush1.msra.mxu0 %v104
  %602 = vmatprep.subr.mxu0 %v107
  %603 = vmatpush1.msra.mxu0 %v106
  %604 = vmatprep.subr.mxu0 %v109
  %605 = vmatpush1.msra.mxu0 %v108
  %606 = vmatprep.subr.mxu0 %v111
  %607 = vmatpush1.msra.mxu0 %v110
  %608 = vmatprep.subr.mxu0 %v113
  %609 = vmatpush1.msra.mxu0 %v112
  %610 = vmatprep.subr.mxu0 %v115
  %611 = vmatpush1.msra.mxu0 %v114
  %612 = vmatprep.subr.mxu0 %v117
  %613 = vmatpush1.msra.mxu0 %v116
  %614 = vmatprep.subr.mxu0 %v119
  %615 = vmatpush1.msra.mxu0 %v118
  %616 = vmatprep.subr.mxu0 %v121
  %617 = vmatpush1.msra.mxu0 %v120
  %618 = vmatprep.subr.mxu0 %v123
  %619 = vmatpush1.msra.mxu0 %v122
  %620 = vmatprep.subr.mxu0 %v125
  %621 = vmatpush1.msra.mxu0 %v124
  %622 = vmatprep.subr.mxu0 %v127
  %623 = vmatpush1.msra.mxu0 %v126
  %624 = vmatprep.subr.mxu0 %v129
  %625 = vmatpush1.msra.mxu0 %v128
  %626 = vmatprep.subr.mxu0 %v131
  %627 = vmatpush1.msra.mxu0 %v130
  %628 = vmatprep.subr.mxu0 %v133
  %629 = vmatpush1.msra.mxu0 %v132
  %630 = vmatprep.subr.mxu0 %v135
  %631 = vmatpush1.msra.mxu0 %v134
  %632 = vmatprep.subr.mxu0 %v137
  %633 = vmatpush1.msra.mxu0 %v136
  %634 = vmatprep.subr.mxu0 %v139
  %635 = vmatpush1.msra.mxu0 %v138
  %636 = vmatprep.subr.mxu0 %v141
  %637 = vmatpush1.msra.mxu0 %v140
  %638 = vmatprep.subr.mxu0 %v143
  %639 = vmatpush1.msra.mxu0 %v142
  %640 = vmatprep.subr.mxu0 %v145
  %641 = vmatpush1.msra.mxu0 %v144
  %642 = vmatprep.subr.mxu0 %v147
  %643 = vmatpush1.msra.mxu0 %v146
  %644 = vmatprep.subr.mxu0 %v149
  %645 = vmatpush1.msra.mxu0 %v148
  %646 = vmatprep.subr.mxu0 %v151
  %647 = vmatpush1.msra.mxu0 %v150
  %648 = vmatprep.mubr.f32.mxu0 %v456
  %649 = vmatmul.mubr.f32.gmra.mrb[0].mxu0 %v454
  %v650 = vpop.f32.mrb[0].mxu0
  %v651 = vadd.f32 %v580, %v650
  %v652 = vpop.f32.mrb[0].mxu0
  %v653 = vadd.f32 %v582, %v652
  %654 = vdwg.mxu0
  %655 = vmatprep.subr.mxu0 %v153
  %656 = vmatpush1.msra.mxu0 %v152
  %657 = vmatprep.subr.mxu0 %v155
  %658 = vmatpush1.msra.mxu0 %v154
  %659 = vmatprep.subr.mxu0 %v157
  %660 = vmatpush1.msra.mxu0 %v156
  %661 = vmatprep.subr.mxu0 %v159
  %662 = vmatpush1.msra.mxu0 %v158
  %663 = vmatprep.subr.mxu0 %v161
  %664 = vmatpush1.msra.mxu0 %v160
  %665 = vmatprep.subr.mxu0 %v163
  %666 = vmatpush1.msra.mxu0 %v162
  %667 = vmatprep.subr.mxu0 %v165
  %668 = vmatpush1.msra.mxu0 %v164
  %669 = vmatprep.subr.mxu0 %v167
  %670 = vmatpush1.msra.mxu0 %v166
  %671 = vmatprep.subr.mxu0 %v169
  %672 = vmatpush1.msra.mxu0 %v168
  %673 = vmatprep.subr.mxu0 %v171
  %674 = vmatpush1.msra.mxu0 %v170
  %675 = vmatprep.subr.mxu0 %v173
  %676 = vmatpush1.msra.mxu0 %v172
  %677 = vmatprep.subr.mxu0 %v175
  %678 = vmatpush1.msra.mxu0 %v174
  %679 = vmatprep.subr.mxu0 %v177
  %680 = vmatpush1.msra.mxu0 %v176
  %681 = vmatprep.subr.mxu0 %v179
  %682 = vmatpush1.msra.mxu0 %v178
  %683 = vmatprep.subr.mxu0 %v181
  %684 = vmatpush1.msra.mxu0 %v180
  %685 = vmatprep.subr.mxu0 %v183
  %686 = vmatpush1.msra.mxu0 %v182
  %687 = vmatprep.subr.mxu0 %v185
  %688 = vmatpush1.msra.mxu0 %v184
  %689 = vmatprep.subr.mxu0 %v187
  %690 = vmatpush1.msra.mxu0 %v186
  %691 = vmatprep.subr.mxu0 %v189
  %692 = vmatpush1.msra.mxu0 %v188
  %693 = vmatprep.subr.mxu0 %v191
  %694 = vmatpush1.msra.mxu0 %v190
  %695 = vmatprep.subr.mxu0 %v193
  %696 = vmatpush1.msra.mxu0 %v192
  %697 = vmatprep.subr.mxu0 %v195
  %698 = vmatpush1.msra.mxu0 %v194
  %699 = vmatprep.subr.mxu0 %v197
  %700 = vmatpush1.msra.mxu0 %v196
  %701 = vmatprep.subr.mxu0 %v199
  %702 = vmatpush1.msra.mxu0 %v198
  %703 = vmatprep.subr.mxu0 %v201
  %704 = vmatpush1.msra.mxu0 %v200
  %705 = vmatprep.subr.mxu0 %v203
  %706 = vmatpush1.msra.mxu0 %v202
  %707 = vmatprep.subr.mxu0 %v205
  %708 = vmatpush1.msra.mxu0 %v204
  %709 = vmatprep.subr.mxu0 %v207
  %710 = vmatpush1.msra.mxu0 %v206
  %711 = vmatprep.subr.mxu0 %v209
  %712 = vmatpush1.msra.mxu0 %v208
  %713 = vmatprep.subr.mxu0 %v211
  %714 = vmatpush1.msra.mxu0 %v210
  %715 = vmatprep.subr.mxu0 %v213
  %716 = vmatpush1.msra.mxu0 %v212
  %717 = vmatprep.subr.mxu0 %v215
  %718 = vmatpush1.msra.mxu0 %v214
  %719 = vmatprep.mubr.f32.mxu0 %v472
  %720 = vmatmul.mubr.f32.gmra.mrb[0].mxu0 %v464
  %v721 = vpop.f32.mrb[0].mxu0
  %v722 = vadd.f32 %v651, %v721
  %v723 = vpop.f32.mrb[0].mxu0
  %v724 = vadd.f32 %v653, %v723
  %725 = vdwg.mxu0
  %726 = vmatprep.subr.mxu0 %v217
  %727 = vmatpush1.msra.mxu0 %v216
  %728 = vmatprep.subr.mxu0 %v219
  %729 = vmatpush1.msra.mxu0 %v218
  %730 = vmatprep.subr.mxu0 %v221
  %731 = vmatpush1.msra.mxu0 %v220
  %732 = vmatprep.subr.mxu0 %v223
  %733 = vmatpush1.msra.mxu0 %v222
  %734 = vmatprep.subr.mxu0 %v225
  %735 = vmatpush1.msra.mxu0 %v224
  %736 = vmatprep.subr.mxu0 %v227
  %737 = vmatpush1.msra.mxu0 %v226
  %738 = vmatprep.subr.mxu0 %v229
  %739 = vmatpush1.msra.mxu0 %v228
  %740 = vmatprep.subr.mxu0 %v231
  %741 = vmatpush1.msra.mxu0 %v230
  %742 = vmatprep.subr.mxu0 %v233
  %743 = vmatpush1.msra.mxu0 %v232
  %744 = vmatprep.subr.mxu0 %v235
  %745 = vmatpush1.msra.mxu0 %v234
  %746 = vmatprep.subr.mxu0 %v237
  %747 = vmatpush1.msra.mxu0 %v236
  %748 = vmatprep.subr.mxu0 %v239
  %749 = vmatpush1.msra.mxu0 %v238
  %750 = vmatprep.subr.mxu0 %v241
  %751 = vmatpush1.msra.mxu0 %v240
  %752 = vmatprep.subr.mxu0 %v243
  %753 = vmatpush1.msra.mxu0 %v242
  %754 = vmatprep.subr.mxu0 %v245
  %755 = vmatpush1.msra.mxu0 %v244
  %756 = vmatprep.subr.mxu0 %v247
  %757 = vmatpush1.msra.mxu0 %v246
  %758 = vmatprep.subr.mxu0 %v249
  %759 = vmatpush1.msra.mxu0 %v248
  %760 = vmatprep.subr.mxu0 %v251
  %761 = vmatpush1.msra.mxu0 %v250
  %762 = vmatprep.subr.mxu0 %v253
  %763 = vmatpush1.msra.mxu0 %v252
  %764 = vmatprep.subr.mxu0 %v255
  %765 = vmatpush1.msra.mxu0 %v254
  %766 = vmatprep.subr.mxu0 %v257
  %767 = vmatpush1.msra.mxu0 %v256
  %768 = vmatprep.subr.mxu0 %v259
  %769 = vmatpush1.msra.mxu0 %v258
  %770 = vmatprep.subr.mxu0 %v261
  %771 = vmatpush1.msra.mxu0 %v260
  %772 = vmatprep.subr.mxu0 %v263
  %773 = vmatpush1.msra.mxu0 %v262
  %774 = vmatprep.subr.mxu0 %v265
  %775 = vmatpush1.msra.mxu0 %v264
  %776 = vmatprep.subr.mxu0 %v267
  %777 = vmatpush1.msra.mxu0 %v266
  %778 = vmatprep.subr.mxu0 %v269
  %779 = vmatpush1.msra.mxu0 %v268
  %780 = vmatprep.subr.mxu0 %v271
  %781 = vmatpush1.msra.mxu0 %v270
  %782 = vmatprep.subr.mxu0 %v273
  %783 = vmatpush1.msra.mxu0 %v272
  %784 = vmatprep.subr.mxu0 %v275
  %785 = vmatpush1.msra.mxu0 %v274
  %786 = vmatprep.subr.mxu0 %v277
  %787 = vmatpush1.msra.mxu0 %v276
  %788 = vmatprep.subr.mxu0 %v279
  %789 = vmatpush1.msra.mxu0 %v278
  %790 = vmatprep.mubr.f32.mxu0 %v473
  %791 = vmatmul.mubr.f32.gmra.mrb[0].mxu0 %v471
  %v792 = vpop.f32.mrb[0].mxu0
  %v793 = vadd.f32 %v722, %v792
  %v794 = vpop.f32.mrb[0].mxu0
  %v795 = vadd.f32 %v724, %v794
  %796 = vdwg.mxu0
  %797 = vmatprep.subr.mxu0 %v281
  %798 = vmatpush1.msra.mxu0 %v280
  %799 = vmatprep.subr.mxu0 %v283
  %800 = vmatpush1.msra.mxu0 %v282
  %801 = vmatprep.subr.mxu0 %v285
  %802 = vmatpush1.msra.mxu0 %v284
  %803 = vmatprep.subr.mxu0 %v287
  %804 = vmatpush1.msra.mxu0 %v286
  %805 = vmatprep.subr.mxu0 %v289
  %806 = vmatpush1.msra.mxu0 %v288
  %807 = vmatprep.subr.mxu0 %v291
  %808 = vmatpush1.msra.mxu0 %v290
  %809 = vmatprep.subr.mxu0 %v293
  %810 = vmatpush1.msra.mxu0 %v292
  %811 = vmatprep.subr.mxu0 %v295
  %812 = vmatpush1.msra.mxu0 %v294
  %813 = vmatprep.subr.mxu0 %v297
  %814 = vmatpush1.msra.mxu0 %v296
  %815 = vmatprep.subr.mxu0 %v299
  %816 = vmatpush1.msra.mxu0 %v298
  %817 = vmatprep.subr.mxu0 %v301
  %818 = vmatpush1.msra.mxu0 %v300
  %819 = vmatprep.subr.mxu0 %v303
  %820 = vmatpush1.msra.mxu0 %v302
  %821 = vmatprep.subr.mxu0 %v305
  %822 = vmatpush1.msra.mxu0 %v304
  %823 = vmatprep.subr.mxu0 %v307
  %824 = vmatpush1.msra.mxu0 %v306
  %825 = vmatprep.subr.mxu0 %v309
  %826 = vmatpush1.msra.mxu0 %v308
  %827 = vmatprep.subr.mxu0 %v311
  %828 = vmatpush1.msra.mxu0 %v310
  %829 = vmatprep.subr.mxu0 %v313
  %830 = vmatpush1.msra.mxu0 %v312
  %831 = vmatprep.subr.mxu0 %v315
  %832 = vmatpush1.msra.mxu0 %v314
  %833 = vmatprep.subr.mxu0 %v317
  %834 = vmatpush1.msra.mxu0 %v316
  %835 = vmatprep.subr.mxu0 %v319
  %836 = vmatpush1.msra.mxu0 %v318
  %837 = vmatprep.subr.mxu0 %v321
  %838 = vmatpush1.msra.mxu0 %v320
  %839 = vmatprep.subr.mxu0 %v323
  %840 = vmatpush1.msra.mxu0 %v322
  %841 = vmatprep.subr.mxu0 %v325
  %842 = vmatpush1.msra.mxu0 %v324
  %843 = vmatprep.subr.mxu0 %v327
  %844 = vmatpush1.msra.mxu0 %v326
  %845 = vmatprep.subr.mxu0 %v329
  %846 = vmatpush1.msra.mxu0 %v328
  %847 = vmatprep.subr.mxu0 %v331
  %848 = vmatpush1.msra.mxu0 %v330
  %849 = vmatprep.subr.mxu0 %v333
  %850 = vmatpush1.msra.mxu0 %v332
  %851 = vmatprep.subr.mxu0 %v335
  %852 = vmatpush1.msra.mxu0 %v334
  %853 = vmatprep.subr.mxu0 %v337
  %854 = vmatpush1.msra.mxu0 %v336
  %855 = vmatprep.subr.mxu0 %v339
  %856 = vmatpush1.msra.mxu0 %v338
  %857 = vmatprep.subr.mxu0 %v341
  %858 = vmatpush1.msra.mxu0 %v340
  %859 = vmatprep.subr.mxu0 %v343
  %860 = vmatpush1.msra.mxu0 %v342
  %861 = vmatprep.mubr.f32.mxu0 %v489
  %862 = vmatmul.mubr.f32.gmra.mrb[0].mxu0 %v481
  %v863 = vpop.f32.mrb[0].mxu0
  %v864 = vadd.f32 %v793, %v863
  %v865 = vpop.f32.mrb[0].mxu0
  %v866 = vadd.f32 %v795, %v865
  %867 = vdwg.mxu0
  %868 = vmatprep.subr.mxu0 %v345
  %869 = vmatpush1.msra.mxu0 %v344
  %870 = vmatprep.subr.mxu0 %v347
  %871 = vmatpush1.msra.mxu0 %v346
  %872 = vmatprep.subr.mxu0 %v349
  %873 = vmatpush1.msra.mxu0 %v348
  %874 = vmatprep.subr.mxu0 %v351
  %875 = vmatpush1.msra.mxu0 %v350
  %876 = vmatprep.subr.mxu0 %v353
  %877 = vmatpush1.msra.mxu0 %v352
  %878 = vmatprep.subr.mxu0 %v355
  %879 = vmatpush1.msra.mxu0 %v354
  %880 = vmatprep.subr.mxu0 %v357
  %881 = vmatpush1.msra.mxu0 %v356
  %882 = vmatprep.subr.mxu0 %v359
  %883 = vmatpush1.msra.mxu0 %v358
  %884 = vmatprep.subr.mxu0 %v361
  %885 = vmatpush1.msra.mxu0 %v360
  %886 = vmatprep.subr.mxu0 %v363
  %887 = vmatpush1.msra.mxu0 %v362
  %888 = vmatprep.subr.mxu0 %v365
  %889 = vmatpush1.msra.mxu0 %v364
  %890 = vmatprep.subr.mxu0 %v367
  %891 = vmatpush1.msra.mxu0 %v366
  %892 = vmatprep.subr.mxu0 %v369
  %893 = vmatpush1.msra.mxu0 %v368
  %894 = vmatprep.subr.mxu0 %v371
  %895 = vmatpush1.msra.mxu0 %v370
  %896 = vmatprep.subr.mxu0 %v373
  %897 = vmatpush1.msra.mxu0 %v372
  %898 = vmatprep.subr.mxu0 %v375
  %899 = vmatpush1.msra.mxu0 %v374
  %900 = vmatprep.subr.mxu0 %v377
  %901 = vmatpush1.msra.mxu0 %v376
  %902 = vmatprep.subr.mxu0 %v379
  %903 = vmatpush1.msra.mxu0 %v378
  %904 = vmatprep.subr.mxu0 %v381
  %905 = vmatpush1.msra.mxu0 %v380
  %906 = vmatprep.subr.mxu0 %v383
  %907 = vmatpush1.msra.mxu0 %v382
  %908 = vmatprep.subr.mxu0 %v385
  %909 = vmatpush1.msra.mxu0 %v384
  %910 = vmatprep.subr.mxu0 %v387
  %911 = vmatpush1.msra.mxu0 %v386
  %912 = vmatprep.subr.mxu0 %v389
  %913 = vmatpush1.msra.mxu0 %v388
  %914 = vmatprep.subr.mxu0 %v391
  %915 = vmatpush1.msra.mxu0 %v390
  %916 = vmatprep.subr.mxu0 %v393
  %917 = vmatpush1.msra.mxu0 %v392
  %918 = vmatprep.subr.mxu0 %v395
  %919 = vmatpush1.msra.mxu0 %v394
  %920 = vmatprep.subr.mxu0 %v397
  %921 = vmatpush1.msra.mxu0 %v396
  %922 = vmatprep.subr.mxu0 %v399
  %923 = vmatpush1.msra.mxu0 %v398
  %924 = vmatprep.subr.mxu0 %v401
  %925 = vmatpush1.msra.mxu0 %v400
  %926 = vmatprep.subr.mxu0 %v403
  %927 = vmatpush1.msra.mxu0 %v402
  %928 = vmatprep.subr.mxu0 %v405
  %929 = vmatpush1.msra.mxu0 %v404
  %930 = vmatprep.subr.mxu0 %v407
  %931 = vmatpush1.msra.mxu0 %v406
  %932 = vmatprep.mubr.f32.mxu0 %v490
  %933 = vmatmul.mubr.f32.gmra.mrb[0].mxu0 %v488
  %v934 = vpop.f32.mrb[0].mxu0
  %v935 = vadd.f32 %v864, %v934
  %v936 = vpop.f32.mrb[0].mxu0
  %v937 = vadd.f32 %v866, %v936
  %938 = vdwg.mxu0
  %939 = vmatprep.subr.mxu0 %v409
  %940 = vmatpush1.msra.mxu0 %v408
  %941 = vmatprep.subr.mxu0 %v411
  %942 = vmatpush1.msra.mxu0 %v410
  %943 = vmatprep.subr.mxu0 %v413
  %944 = vmatpush1.msra.mxu0 %v412
  %945 = vmatprep.subr.mxu0 %v415
  %946 = vmatpush1.msra.mxu0 %v414
  %947 = vmatprep.subr.mxu0 %v417
  %948 = vmatpush1.msra.mxu0 %v416
  %949 = vmatprep.subr.mxu0 %v419
  %950 = vmatpush1.msra.mxu0 %v418
  %951 = vmatprep.subr.mxu0 %v421
  %952 = vmatpush1.msra.mxu0 %v420
  %953 = vmatprep.subr.mxu0 %v423
  %954 = vmatpush1.msra.mxu0 %v422
  %955 = vmatprep.subr.mxu0 0.0
  %956 = vmatpush1.msra.mxu0 0.0
  %957 = vmatprep.subr.mxu0 0.0
  %958 = vmatpush1.msra.mxu0 0.0
  %959 = vmatprep.subr.mxu0 0.0
  %960 = vmatpush1.msra.mxu0 0.0
  %961 = vmatprep.subr.mxu0 0.0
  %962 = vmatpush1.msra.mxu0 0.0
  %963 = vmatprep.subr.mxu0 0.0
  %964 = vmatpush1.msra.mxu0 0.0
  %965 = vmatprep.subr.mxu0 0.0
  %966 = vmatpush1.msra.mxu0 0.0
  %967 = vmatprep.subr.mxu0 0.0
  %968 = vmatpush1.msra.mxu0 0.0
  %969 = vmatprep.subr.mxu0 0.0
  %970 = vmatpush1.msra.mxu0 0.0
  %971 = vmatprep.subr.mxu0 0.0
  %972 = vmatpush1.msra.mxu0 0.0
  %973 = vmatprep.subr.mxu0 0.0
  %974 = vmatpush1.msra.mxu0 0.0
  %975 = vmatprep.subr.mxu0 0.0
  %976 = vmatpush1.msra.mxu0 0.0
  %977 = vmatprep.subr.mxu0 0.0
  %978 = vmatpush1.msra.mxu0 0.0
  %979 = vmatprep.subr.mxu0 0.0
  %980 = vmatpush1.msra.mxu0 0.0
  %981 = vmatprep.subr.mxu0 0.0
  %982 = vmatpush1.msra.mxu0 0.0
  %983 = vmatprep.subr.mxu0 0.0
  %984 = vmatpush1.msra.mxu0 0.0
  %985 = vmatprep.subr.mxu0 0.0
  %986 = vmatpush1.msra.mxu0 0.0
  %987 = vmatprep.subr.mxu0 0.0
  %988 = vmatpush1.msra.mxu0 0.0
  %989 = vmatprep.subr.mxu0 0.0
  %990 = vmatpush1.msra.mxu0 0.0
  %991 = vmatprep.subr.mxu0 0.0
  %992 = vmatpush1.msra.mxu0 0.0
  %993 = vmatprep.subr.mxu0 0.0
  %994 = vmatpush1.msra.mxu0 0.0
  %995 = vmatprep.subr.mxu0 0.0
  %996 = vmatpush1.msra.mxu0 0.0
  %997 = vmatprep.subr.mxu0 0.0
  %998 = vmatpush1.msra.mxu0 0.0
  %999 = vmatprep.subr.mxu0 0.0
  %1000 = vmatpush1.msra.mxu0 0.0
  %1001 = vmatprep.subr.mxu0 0.0
  %1002 = vmatpush1.msra.mxu0 0.0
  %1003 = vmatprep.mubr.f32.mxu0 0.0
  %1004 = vmatmul.mubr.f32.gmra.mrb[0].mxu0 %v511
  %v1005 = vpop.f32.mrb[0].mxu0
  %v1006 = vadd.f32 %v935, %v1005
  %v1007 = vpop.f32.mrb[0].mxu0
  %v1008 = vadd.f32 %v937, %v1007
  %1009 = vdwg.mxu0
  %v1010 = vmax.f32 %v1006, 0.0
  %v1011 = vmax.f32 %v1008, 0.0
  %v1012 = vld [vmem:[%s3] sm:$0xff]
  %v1013 = vld [vmem:[%s3 + $0x8] sm:$0xff]
  %v1014 = vld [vmem:[%s3 + $0x10] sm:$0xff]
  %v1015 = vld [vmem:[%s3 + $0x18] sm:$0xff]
  %v1016 = vld [vmem:[%s3 + $0x20] sm:$0xff]
  %v1017 = vld [vmem:[%s3 + $0x28] sm:$0xff]
  %v1018 = vld [vmem:[%s3 + $0x30] sm:$0xff]
  %v1019 = vld [vmem:[%s3 + $0x38] sm:$0xff]
  %v1020 = vld [vmem:[%s3 + $0x40] sm:$0xff]
  %v1021 = vld [vmem:[%s3 + $0x48] sm:$0xff]
  %v1022 = vld [vmem:[%s3 + $0x50] sm:$0xff]
  %v1023 = vld [vmem:[%s3 + $0x58] sm:$0xff]
  %v1024 = vld [vmem:[%s3 + $0x60] sm:$0xff]
  %v1025 = vld [vmem:[%s3 + $0x68] sm:$0xff]
  %v1026 = vld [vmem:[%s3 + $0x70] sm:$0xff]
  %v1027 = vld [vmem:[%s3 + $0x78] sm:$0xff]
  %v1028 = vld [vmem:[%s3 + $0x80] sm:$0xff]
  %v1029 = vld [vmem:[%s3 + $0x88] sm:$0xff]
  %v1030 = vld [vmem:[%s3 + $0x90] sm:$0xff]
  %v1031 = vld [vmem:[%s3 + $0x98] sm:$0xff]
  %v1032 = vld [vmem:[%s3 + $0xa0] sm:$0xff]
  %v1033 = vld [vmem:[%s3 + $0xa8] sm:$0xff]
  %v1034 = vld [vmem:[%s3 + $0xb0] sm:$0xff]
  %v1035 = vld [vmem:[%s3 + $0xb8] sm:$0xff]
  %v1036 = vld [vmem:[%s3 + $0xc0] sm:$0xff]
  %v1037 = vld [vmem:[%s3 + $0xc8] sm:$0xff]
  %v1038 = vld [vmem:[%s3 + $0xd0] sm:$0xff]
  %v1039 = vld [vmem:[%s3 + $0xd8] sm:$0xff]
  %v1040 = vld [vmem:[%s3 + $0xe0] sm:$0xff]
  %v1041 = vld [vmem:[%s3 + $0xe8] sm:$0xff]
  %v1042 = vld [vmem:[%s3 + $0xf0] sm:$0xff]
  %v1043 = vld [vmem:[%s3 + $0xf8] sm:$0xff]
  %v1044 = vld [vmem:[%s4] sm:$0x1]
  %v1046 = vlaneseq
  %v1047 = vshrl.u32 %v1046, 7
  %v1048 = vsub.s32 0, %v1047
  %v1049 = vrot.slane %v1044, %v1048
  %1051 = vmatprep.subr.mxu0 0.0
  %1052 = vmatpush1.msra.mxu0 %v1012
  %1053 = vmatprep.subr.mxu0 0.0
  %1054 = vmatpush1.msra.mxu0 %v1013
  %1055 = vmatprep.subr.mxu0 0.0
  %1056 = vmatpush1.msra.mxu0 %v1014
  %1057 = vmatprep.subr.mxu0 0.0
  %1058 = vmatpush1.msra.mxu0 %v1015
  %1059 = vmatprep.subr.mxu0 0.0
  %1060 = vmatpush1.msra.mxu0 %v1016
  %1061 = vmatprep.subr.mxu0 0.0
  %1062 = vmatpush1.msra.mxu0 %v1017
  %1063 = vmatprep.subr.mxu0 0.0
  %1064 = vmatpush1.msra.mxu0 %v1018
  %1065 = vmatprep.subr.mxu0 0.0
  %1066 = vmatpush1.msra.mxu0 %v1019
  %1067 = vmatprep.subr.mxu0 0.0
  %1068 = vmatpush1.msra.mxu0 %v1020
  %1069 = vmatprep.subr.mxu0 0.0
  %1070 = vmatpush1.msra.mxu0 %v1021
  %1071 = vmatprep.subr.mxu0 0.0
  %1072 = vmatpush1.msra.mxu0 %v1022
  %1073 = vmatprep.subr.mxu0 0.0
  %1074 = vmatpush1.msra.mxu0 %v1023
  %1075 = vmatprep.subr.mxu0 0.0
  %1076 = vmatpush1.msra.mxu0 %v1024
  %1077 = vmatprep.subr.mxu0 0.0
  %1078 = vmatpush1.msra.mxu0 %v1025
  %1079 = vmatprep.subr.mxu0 0.0
  %1080 = vmatpush1.msra.mxu0 %v1026
  %1081 = vmatprep.subr.mxu0 0.0
  %1082 = vmatpush1.msra.mxu0 %v1027
  %1083 = vmatprep.subr.mxu0 0.0
  %1084 = vmatpush1.msra.mxu0 %v1028
  %1085 = vmatprep.subr.mxu0 0.0
  %1086 = vmatpush1.msra.mxu0 %v1029
  %1087 = vmatprep.subr.mxu0 0.0
  %1088 = vmatpush1.msra.mxu0 %v1030
  %1089 = vmatprep.subr.mxu0 0.0
  %1090 = vmatpush1.msra.mxu0 %v1031
  %1091 = vmatprep.subr.mxu0 0.0
  %1092 = vmatpush1.msra.mxu0 %v1032
  %1093 = vmatprep.subr.mxu0 0.0
  %1094 = vmatpush1.msra.mxu0 %v1033
  %1095 = vmatprep.subr.mxu0 0.0
  %1096 = vmatpush1.msra.mxu0 %v1034
  %1097 = vmatprep.subr.mxu0 0.0
  %1098 = vmatpush1.msra.mxu0 %v1035
  %1099 = vmatprep.subr.mxu0 0.0
  %1100 = vmatpush1.msra.mxu0 %v1036
  %1101 = vmatprep.subr.mxu0 0.0
  %1102 = vmatpush1.msra.mxu0 %v1037
  %1103 = vmatprep.subr.mxu0 0.0
  %1104 = vmatpush1.msra.mxu0 %v1038
  %1105 = vmatprep.subr.mxu0 0.0
  %1106 = vmatpush1.msra.mxu0 %v1039
  %1107 = vmatprep.subr.mxu0 0.0
  %1108 = vmatpush1.msra.mxu0 %v1040
  %1109 = vmatprep.subr.mxu0 0.0
  %1110 = vmatpush1.msra.mxu0 %v1041
  %1111 = vmatprep.subr.mxu0 0.0
  %1112 = vmatpush1.msra.mxu0 %v1042
  %1113 = vmatprep.subr.mxu0 0.0
  %1114 = vmatpush1.msra.mxu0 %v1043
  %1115 = vmatprep.mubr.f32.mxu0 %v1011
  %1116 = vmatmul.mubr.f32.gmra.mrb[0].mxu0 %v1010
  %v1117 = vpop.f32.mrb[0].mxu0
  %v1118 = vadd.f32 %v1049, %v1117
  %v1119 = vpop.f32.mrb[0].mxu0
  %1120 = vdwg.mxu0
  %vm1121 = vcmask 50176
  %1122 = vst.msk [vmem:[%s5] sm:$0x3] %vm1121, %v1118
  // Predicated region
  $region22: #{a3c_forward.7} parent=0 // pred_check
    _
  $region23: #{a3c_forward.7} parent=0 // pred_check_branch
    %1124 = sbr.rel (0) target = $region25
  $region24: #{a3c_forward.7} parent=0 // pred_region
    _
  $region25: #{a3c_forward.7} parent=0 // pred_fallthru
    _
  // Predicated region
  $region26: #{a3c_forward.7} parent=0 // pred_check
    _
  $region27: #{a3c_forward.7} parent=0 // pred_check_branch
    %1126 = sbr.rel (0) target = $region29
  $region28: #{a3c_forward.7} parent=0 // pred_region
    _
  $region29: #{a3c_forward.7} parent=0 // pred_fallthru
    _

</llo_original>
